<compile_context>
chip_gen: v7x
topology: tpu7x:2x2x1
jax: 0.10.0
libtpu: 0.0.40
codegen_flags: <defaults>
</compile_context>

<pallas_src>
import functools

import jax
import jax.numpy as jnp
from jax import lax
from jax.experimental import pallas as pl
from jax.experimental.pallas import tpu as pltpu


def _round_up(x, m):
    return (x + m - 1) // m * m


@functools.lru_cache(maxsize=None)
def _vmem_limit_bytes():
    """Generation-aware scoped-VMEM limit (leave headroom for the compiler)."""
    try:
        phys = int(pltpu.get_tpu_info().vmem_capacity_bytes)
    except Exception:  # interpret mode / query unavailable
        phys = 64 * 1024 * 1024
    return int(min(phys * 3 // 4, 112 * 1024 * 1024))


def _choose_spatial_tile(hw, max_tile):
    """Largest multiple of 128 <= max_tile that divides hw (else pad later)."""
    cap = max(128, min(max_tile, _round_up(hw, 128)) // 128 * 128)
    for t in range(cap, 127, -128):
        if hw % t == 0:
            return t
    return cap


# ----------------------------------------------------------------------------
# Kernel 1: spectral mode mixing on the VPU (small-channel regime).
#   out[o, m] = sum_i x[i, m] * w[i, o, m]   (complex), modes lane-dense.
#   grid = (B,), one step per batch element.
# ----------------------------------------------------------------------------
def _spectral_vpu_kernel(xr_ref, xi_ref, wr_ref, wi_ref, or_ref, oi_ref):
    ci = wr_ref.shape[0]
    xr = xr_ref[...]                       # (Ci, Mp)
    xi = xi_ref[...]
    acc_r = jnp.zeros(or_ref.shape, jnp.float32)   # (Co, Mp)
    acc_i = jnp.zeros(oi_ref.shape, jnp.float32)
    for i in range(ci):                    # static unroll (Ci small here)
        xri = xr[i:i + 1, :]               # (1, Mp) -> sublane broadcast
        xii = xi[i:i + 1, :]
        wri = wr_ref[i]                    # (Co, Mp)
        wii = wi_ref[i]
        acc_r = acc_r + (xri * wri - xii * wii)
        acc_i = acc_i + (xri * wii + xii * wri)
    or_ref[...] = acc_r
    oi_ref[...] = acc_i


def spectral_mix(xr, xi, wr, wi):
    """xr/xi: (B, Ci, Mp) f32; wr/wi: (Ci, Co, Mp) f32 -> (B, Co, Mp) x2."""
    B, Ci, Mp = xr.shape
    Co = wr.shape[1]
    x_spec = pl.BlockSpec((None, Ci, Mp), lambda b: (b, 0, 0))
    w_spec = pl.BlockSpec((Ci, Co, Mp), lambda b: (0, 0, 0))
    o_spec = pl.BlockSpec((None, Co, Mp), lambda b: (b, 0, 0))
    return pl.pallas_call(
        _spectral_vpu_kernel,
        grid=(B,),
        in_specs=[x_spec, x_spec, w_spec, w_spec],
        out_specs=(o_spec, o_spec),
        out_shape=(jax.ShapeDtypeStruct((B, Co, Mp), jnp.float32),
                   jax.ShapeDtypeStruct((B, Co, Mp), jnp.float32)),
        compiler_params=pltpu.CompilerParams(
            dimension_semantics=("parallel",),
            vmem_limit_bytes=_vmem_limit_bytes()),
    )(xr, xi, wr, wi)


# ----------------------------------------------------------------------------
# Kernel 2a: pointwise Linear (channel mix) + residual + ReLU, with BatchNorm
#            partial statistics accumulated in the VMEM-resident output block
#            across the spatial-tile axis (written once per batch element).
#   NCHW layout: x tile is (C, TP), spatial tile TP lane-dense.
# ----------------------------------------------------------------------------
def _linres_stats_kernel(x_ref, w_ref, b_ref, a_ref, ssum_ref, ssq_ref, *,
                         n_valid, tp):
    p = pl.program_id(1)
    x = x_ref[...]                                          # (C, TP)
    z = jnp.dot(w_ref[...], x, preferred_element_type=jnp.float32) + b_ref[...]
    a = jnp.maximum(x + z, 0.0)                             # residual + ReLU
    a_ref[...] = a

    if n_valid is not None:      # only compiled in when spatial padding exists
        lane = lax.broadcasted_iota(jnp.int32, a.shape, 1) + p * tp
        am = jnp.where(lane < n_valid, a, 0.0)
    else:
        am = a

    @pl.when(p == 0)
    def _():
        ssum_ref[...] = jnp.zeros_like(ssum_ref)
        ssq_ref[...] = jnp.zeros_like(ssq_ref)
    ssum_ref[...] += jnp.sum(am, axis=1, keepdims=True)     # (C, 1)
    ssq_ref[...] += jnp.sum(am * am, axis=1, keepdims=True)


# Kernel 2b: apply the finished BatchNorm affine (scale, shift) per tile.
def _bn_apply_kernel(a_ref, scale_ref, shift_ref, o_ref):
    o_ref[...] = a_ref[...] * scale_ref[...] + shift_ref[...]


def fused_linear_relu_bn(y, lp, cfg):
    """y: (B, C, H, W) f32 ->  BN(ReLU(y + Linear_c(y)))  in NCHW."""
    B, C, H, W = y.shape
    HW = H * W
    tp = _choose_spatial_tile(HW, cfg["spatial_tile"])
    hwp = _round_up(HW, tp)
    padded = hwp != HW
    x = y.reshape(B, C, HW)
    if padded:
        x = jnp.pad(x, ((0, 0), (0, 0), (0, hwp - HW)))
    T = hwp // tp

    kern = functools.partial(_linres_stats_kernel,
                             n_valid=HW if padded else None, tp=tp)
    a, ssum, ssq = pl.pallas_call(
        kern,
        grid=(B, T),
        in_specs=[pl.BlockSpec((None, C, tp), lambda b, p: (b, 0, p)),
                  pl.BlockSpec((C, C), lambda b, p: (0, 0)),
                  pl.BlockSpec((C, 1), lambda b, p: (0, 0))],
        out_specs=(pl.BlockSpec((None, C, tp), lambda b, p: (b, 0, p)),
                   pl.BlockSpec((None, C, 1), lambda b, p: (b, 0, 0)),
                   pl.BlockSpec((None, C, 1), lambda b, p: (b, 0, 0))),
        out_shape=(jax.ShapeDtypeStruct((B, C, hwp), jnp.float32),
                   jax.ShapeDtypeStruct((B, C, 1), jnp.float32),
                   jax.ShapeDtypeStruct((B, C, 1), jnp.float32)),
        compiler_params=pltpu.CompilerParams(
            dimension_semantics=("parallel", "arbitrary"),
            vmem_limit_bytes=_vmem_limit_bytes()),
    )(x, lp["lin_w"], lp["lin_b"].reshape(C, 1))

    # O(C) finalize of the cross-batch reduction (train-mode batch statistics).
    # One-pass E[x^2]-E[x]^2 in f32 (fine for ReLU-centered activations).
    cnt = float(B * HW)
    mean = jnp.sum(ssum, axis=0) / cnt                      # (C, 1)
    var = jnp.maximum(jnp.sum(ssq, axis=0) / cnt - mean * mean, 0.0)
    inv = lax.rsqrt(var + 1e-5)
    scale = lp["bn_gamma"].reshape(C, 1) * inv
    shift = lp["bn_beta"].reshape(C, 1) - mean * scale

    out = pl.pallas_call(
        _bn_apply_kernel,
        grid=(B, T),
        in_specs=[pl.BlockSpec((None, C, tp), lambda b, p: (b, 0, p)),
                  pl.BlockSpec((C, 1), lambda b, p: (0, 0)),
                  pl.BlockSpec((C, 1), lambda b, p: (0, 0))],
        out_specs=pl.BlockSpec((None, C, tp), lambda b, p: (b, 0, p)),
        out_shape=jax.ShapeDtypeStruct((B, C, hwp), jnp.float32),
        input_output_aliases={0: 0},                        # normalize in place
        compiler_params=pltpu.CompilerParams(
            dimension_semantics=("parallel", "parallel"),
            vmem_limit_bytes=_vmem_limit_bytes()),
    )(a, scale, shift)

    if padded:
        out = out[:, :, :HW]
    return out.reshape(B, C, H, W)


# ----------------------------------------------------------------------------
# Kernel 3: generic pointwise linear over channels (linear_in / linear_out).
# ----------------------------------------------------------------------------
def _pointwise_linear_kernel(x_ref, w_ref, b_ref, o_ref):
    x = x_ref[...]                                          # (Cin, TP)
    w = w_ref[...]                                          # (Cout, Cin)
    cin = x.shape[0]
    if cin < 8:        # tiny contraction: outer-product FMA on the VPU
        acc = jnp.zeros(o_ref.shape, jnp.float32)
        for i in range(cin):
            acc = acc + w[:, i:i + 1] * x[i:i + 1, :]
        o_ref[...] = acc + b_ref[...]
    else:
        o_ref[...] = jnp.dot(w, x,
                             preferred_element_type=jnp.float32) + b_ref[...]


def pointwise_linear(x, w, b, *, spatial_tile):
    """x: (B, Cin, H, W); w: (Cout, Cin) [torch layout]; b: (Cout,)."""
    B, Cin, H, W = x.shape
    Cout = w.shape[0]
    HW = H * W
    tp = _choose_spatial_tile(HW, spatial_tile)
    hwp = _round_up(HW, tp)
    padded = hwp != HW
    xf = x.reshape(B, Cin, HW)
    if padded:
        xf = jnp.pad(xf, ((0, 0), (0, 0), (0, hwp - HW)))
    T = hwp // tp
    out = pl.pallas_call(
        _pointwise_linear_kernel,
        grid=(B, T),
        in_specs=[pl.BlockSpec((None, Cin, tp), lambda bb, p: (bb, 0, p)),
                  pl.BlockSpec((Cout, Cin), lambda bb, p: (0, 0)),
                  pl.BlockSpec((Cout, 1), lambda bb, p: (0, 0))],
        out_specs=pl.BlockSpec((None, Cout, tp), lambda bb, p: (bb, 0, p)),
        out_shape=jax.ShapeDtypeStruct((B, Cout, hwp), jnp.float32),
        compiler_params=pltpu.CompilerParams(
            dimension_semantics=("parallel", "parallel"),
            vmem_limit_bytes=_vmem_limit_bytes()),
    )(xf, w, b.reshape(Cout, 1))
    if padded:
        out = out[:, :, :HW]
    return out.reshape(B, Cout, H, W)


# ----------------------------------------------------------------------------
# SpectralConv2d and FourierLayer (NCHW throughout, no layout round-trips).
# ----------------------------------------------------------------------------
def spectral_conv(x, lp, cfg):
    B, C, H, W = x.shape
    m1, m2 = cfg["modes1"], cfg["modes2"]
    Wf = W // 2 + 1
    assert 2 * m1 <= H and m2 <= Wf, "modes do not fit the spatial grid"
    M = 2 * m1 * m2
    Mp = lp["spec_wr"].shape[-1]                 # lane-padded at init

    x_ft = jnp.fft.rfft2(x)                      # (B, C, H, Wf) complex64
    modes = jnp.concatenate([x_ft[:, :, :m1, :m2],
                             x_ft[:, :, H - m1:, :m2]],
                            axis=2).reshape(B, C, M)          # (B, C, M)
    xr = jnp.real(modes)
    xi = jnp.imag(modes)
    if Mp != M:
        padm = ((0, 0), (0, 0), (0, Mp - M))
        xr, xi = jnp.pad(xr, padm), jnp.pad(xi, padm)

    outr, outi = spectral_mix(xr, xi, lp["spec_wr"], lp["spec_wi"])
    outr = outr[:, :, :M].reshape(B, C, 2 * m1, m2)
    outi = outi[:, :, :M].reshape(B, C, 2 * m1, m2)

    # Assemble the full spectrum with two static slice-updates per plane.
    zr = jnp.zeros((B, C, H, Wf), jnp.float32)
    zi = jnp.zeros((B, C, H, Wf), jnp.float32)
    zr = zr.at[:, :, :m1, :m2].set(outr[:, :, :m1]) \
           .at[:, :, H - m1:, :m2].set(outr[:, :, m1:])
    zi = zi.at[:, :, :m1, :m2].set(outi[:, :, :m1]) \
           .at[:, :, H - m1:, :m2].set(outi[:, :, m1:])
    out_ft = lax.complex(zr, zi)
    return jnp.fft.irfft2(out_ft, s=(H, W)).astype(jnp.float32)


def fourier_layer(h, lp, cfg):
    y = spectral_conv(h, lp, cfg)              # SpectralConv2d
    return fused_linear_relu_bn(y, lp, cfg)    # x + Linear(x) -> ReLU -> BN


# ----------------------------------------------------------------------------
# Full FNO: linear_in -> FNO_Block(num_layers x FourierLayer) -> linear_out
# ----------------------------------------------------------------------------
def fno_forward(x, coords, params, cfg):
    """x: (B, H, W) f32; coords: (2, H, W) f32 -> (B, H, W) f32."""
    B, H, W = x.shape
    feats = jnp.concatenate(
        [x[:, None], jnp.broadcast_to(coords[None], (B, 2, H, W))], axis=1)
    h = pointwise_linear(feats, params["in_w"], params["in_b"],
                         spatial_tile=cfg["spatial_tile"])     # (B, d, H, W)
    # FNO_Block: copy.deepcopy at init means every layer starts with the same
    # parameters, so one parameter set is applied num_layers times.
    for _ in range(cfg["num_layers"]):
        h = fourier_layer(h, params["layer"], cfg)
    out = pointwise_linear(h, params["out_w"], params["out_b"],
                           spatial_tile=cfg["spatial_tile"])   # (B, 1, H, W)
    return out[:, 0]


def init_params(key, cfg):
    C, m1, m2 = cfg["d_model"], cfg["modes1"], cfg["modes2"]
    ks = jax.random.split(key, 10)
    scale = 1.0 / (C * C)
    M = 2 * m1 * m2
    Mp = _round_up(M, 128)

    def spec(k):   # one weight block, mode axis flattened to lanes: (Ci,Co,m1*m2)
        return scale * jax.random.uniform(k, (C, C, m1 * m2), dtype=jnp.float32)

    # Store spectral weights once in the kernel layout (Ci, Co, Mp):
    # lanes [0, m1*m2) = weights1 (low rows), [m1*m2, 2*m1*m2) = weights2.
    padm = ((0, 0), (0, 0), (0, Mp - M))
    spec_wr = jnp.pad(jnp.concatenate([spec(ks[0]), spec(ks[2])], axis=-1), padm)
    spec_wi = jnp.pad(jnp.concatenate([spec(ks[1]), spec(ks[3])], axis=-1), padm)

    def linear(kw, kb, cin, cout):
        bound = 1.0 / (cin ** 0.5)
        w = jax.random.uniform(kw, (cout, cin), jnp.float32, -bound, bound)
        b = jax.random.uniform(kb, (cout,), jnp.float32, -bound, bound)
        return w, b

    lin_w, lin_b = linear(ks[4], ks[5], C, C)     # FourierLayer Linear (out,in)
    in_w, in_b = linear(ks[6], ks[7], 3, C)       # FNO linear_in
    out_w, out_b = linear(ks[8], ks[9], C, 1)     # FNO linear_out

    layer = {"spec_wr": spec_wr, "spec_wi": spec_wi,
             "lin_w": lin_w, "lin_b": lin_b,
             "bn_gamma": jnp.ones((C,), jnp.float32),
             "bn_beta": jnp.zeros((C,), jnp.float32)}
    return {"layer": layer, "in_w": in_w, "in_b": in_b,
            "out_w": out_w, "out_b": out_b}


if __name__ == "__main__":
    cfg = dict(d_model=16, modes1=4, modes2=5, num_layers=2,
               spatial_tile=1024)   # lane-dense spatial tile (512-2048 prod)
    B, H, W = 2, 16, 16

    key = jax.random.PRNGKey(0)
    kx, kp = jax.random.split(key)
    x = jax.random.normal(kx, (B, H, W), dtype=jnp.float32)
    gy, gx = jnp.meshgrid(jnp.linspace(0.0, 1.0, H),
                          jnp.linspace(0.0, 1.0, W), indexing="ij")
    coords = jnp.stack([gy, gx], axis=0).astype(jnp.float32)   # (2, H, W)
    params = init_params(kp, cfg)

    fwd = jax.jit(functools.partial(fno_forward, cfg=cfg))
    out = fwd(x, coords, params)
    jax.block_until_ready(out)
    assert out.shape == (B, H, W), out.shape
    assert bool(jnp.all(jnp.isfinite(out))), "non-finite output"
    print("KERNEL_OK")
</pallas_src>

<mosaic_0001>
module attributes {stable_mosaic.version = 11 : i64} {
  func.func @_pointwise_linear_kernel(%arg0: i32, %arg1: i32, %arg2: memref<1x3x256xf32, #tpu.memory_space<vmem>>, %arg3: memref<16x3xf32, #tpu.memory_space<vmem>>, %arg4: memref<16x1xf32, #tpu.memory_space<vmem>>, %arg5: memref<1x16x256xf32, #tpu.memory_space<vmem>>) attributes {dimension_semantics = [#tpu.dimension_semantics<parallel>, #tpu.dimension_semantics<parallel>], iteration_bounds = array<i64: 2, 1>, scalar_prefetch = 0 : i64, scratch_operands = 0 : i64, tpu.core_type = #tpu.core_type<tc>, window_params = [{transform_indices = @transform_0, window_bounds = array<i64: 1, 3, 256>}, {pipeline_mode = #tpu.pipeline_mode<synchronous>, transform_indices = @transform_1, window_bounds = array<i64: 16, 3>}, {pipeline_mode = #tpu.pipeline_mode<synchronous>, transform_indices = @transform_2, window_bounds = array<i64: 16, 1>}, {transform_indices = @transform_3, window_bounds = array<i64: 1, 16, 256>}]} {
    %c0 = arith.constant 0 : index
    %c0_0 = arith.constant 0 : index
    %c0_1 = arith.constant 0 : index
    %0 = vector.load %arg2[%c0, %c0_0, %c0_1] : memref<1x3x256xf32, #tpu.memory_space<vmem>>, vector<1x3x256xf32>
    %1 = vector.shape_cast %0 : vector<1x3x256xf32> to vector<3x256xf32>
    %c0_2 = arith.constant 0 : index
    %c0_3 = arith.constant 0 : index
    %2 = vector.load %arg3[%c0_2, %c0_3] : memref<16x3xf32, #tpu.memory_space<vmem>>, vector<16x3xf32>
    %cst = arith.constant 0.000000e+00 : f32
    %3 = vector.broadcast %cst : f32 to vector<16x256xf32>
    %4 = vector.extract_strided_slice %2 {offsets = [0, 0], sizes = [16, 1], strides = [1, 1]} : vector<16x3xf32> to vector<16x1xf32>
    %5 = vector.extract_strided_slice %1 {offsets = [0, 0], sizes = [1, 256], strides = [1, 1]} : vector<3x256xf32> to vector<1x256xf32>
    %6 = vector.broadcast %4 : vector<16x1xf32> to vector<16x256xf32>
    %7 = vector.broadcast %5 : vector<1x256xf32> to vector<16x256xf32>
    %8 = arith.mulf %6, %7 : vector<16x256xf32>
    %9 = arith.addf %3, %8 : vector<16x256xf32>
    %10 = vector.extract_strided_slice %2 {offsets = [0, 1], sizes = [16, 1], strides = [1, 1]} : vector<16x3xf32> to vector<16x1xf32>
    %11 = vector.extract_strided_slice %1 {offsets = [1, 0], sizes = [1, 256], strides = [1, 1]} : vector<3x256xf32> to vector<1x256xf32>
    %12 = vector.broadcast %10 : vector<16x1xf32> to vector<16x256xf32>
    %13 = vector.broadcast %11 : vector<1x256xf32> to vector<16x256xf32>
    %14 = arith.mulf %12, %13 : vector<16x256xf32>
    %15 = arith.addf %9, %14 : vector<16x256xf32>
    %16 = vector.extract_strided_slice %2 {offsets = [0, 2], sizes = [16, 1], strides = [1, 1]} : vector<16x3xf32> to vector<16x1xf32>
    %17 = vector.extract_strided_slice %1 {offsets = [2, 0], sizes = [1, 256], strides = [1, 1]} : vector<3x256xf32> to vector<1x256xf32>
    %18 = vector.broadcast %16 : vector<16x1xf32> to vector<16x256xf32>
    %19 = vector.broadcast %17 : vector<1x256xf32> to vector<16x256xf32>
    %20 = arith.mulf %18, %19 : vector<16x256xf32>
    %21 = arith.addf %15, %20 : vector<16x256xf32>
    %c0_4 = arith.constant 0 : index
    %c0_5 = arith.constant 0 : index
    %22 = vector.load %arg4[%c0_4, %c0_5] : memref<16x1xf32, #tpu.memory_space<vmem>>, vector<16x1xf32>
    %23 = vector.broadcast %22 : vector<16x1xf32> to vector<16x256xf32>
    %24 = arith.addf %21, %23 : vector<16x256xf32>
    %c0_6 = arith.constant 0 : index
    %c0_7 = arith.constant 0 : index
    %c0_8 = arith.constant 0 : index
    %25 = vector.load %arg5[%c0_6, %c0_7, %c0_8] : memref<1x16x256xf32, #tpu.memory_space<vmem>>, vector<1x16x256xf32>
    %26 = vector.shape_cast %25 : vector<1x16x256xf32> to vector<16x256xf32>
    %27 = vector.shape_cast %24 : vector<16x256xf32> to vector<1x16x256xf32>
    tpu.vector_store %arg5[%c0_6, %c0_7, %c0_8], %27 {strides = array<i32>} : memref<1x16x256xf32, #tpu.memory_space<vmem>>, vector<1x16x256xf32>,
    return
  }
  func.func @transform_0(%arg0: i32, %arg1: i32) -> (i32, i32, i32) {
    %c0_i32 = arith.constant 0 : i32
    %c0_i32_0 = arith.constant 0 : i32
    return %arg0, %c0_i32, %arg1 : i32, i32, i32
  }
  func.func @transform_1(%arg0: i32, %arg1: i32) -> (i32, i32) {
    %c0_i32 = arith.constant 0 : i32
    %c0_i32_0 = arith.constant 0 : i32
    %c0_i32_1 = arith.constant 0 : i32
    return %c0_i32, %c0_i32_0 : i32, i32
  }
  func.func @transform_2(%arg0: i32, %arg1: i32) -> (i32, i32) {
    %c0_i32 = arith.constant 0 : i32
    %c0_i32_0 = arith.constant 0 : i32
    %c0_i32_1 = arith.constant 0 : i32
    return %c0_i32, %c0_i32_0 : i32, i32
  }
  func.func @transform_3(%arg0: i32, %arg1: i32) -> (i32, i32, i32) {
    %c0_i32 = arith.constant 0 : i32
    %c0_i32_0 = arith.constant 0 : i32
    return %arg0, %c0_i32, %arg1 : i32, i32, i32
  }
}

module attributes {stable_mosaic.version = 11 : i64} {
  func.func @_spectral_vpu_kernel(%arg0: i32, %arg1: memref<1x16x128xf32, #tpu.memory_space<vmem>>, %arg2: memref<1x16x128xf32, #tpu.memory_space<vmem>>, %arg3: memref<16x16x128xf32, #tpu.memory_space<vmem>>, %arg4: memref<16x16x128xf32, #tpu.memory_space<vmem>>, %arg5: memref<1x16x128xf32, #tpu.memory_space<vmem>>, %arg6: memref<1x16x128xf32, #tpu.memory_space<vmem>>) attributes {dimension_semantics = [#tpu.dimension_semantics<parallel>], iteration_bounds = array<i64: 2>, scalar_prefetch = 0 : i64, scratch_operands = 0 : i64, tpu.core_type = #tpu.core_type<tc>, window_params = [{transform_indices = @transform_0, window_bounds = array<i64: 1, 16, 128>}, {transform_indices = @transform_1, window_bounds = array<i64: 1, 16, 128>}, {pipeline_mode = #tpu.pipeline_mode<synchronous>, transform_indices = @transform_2, window_bounds = array<i64: 16, 16, 128>}, {pipeline_mode = #tpu.pipeline_mode<synchronous>, transform_indices = @transform_3, window_bounds = array<i64: 16, 16, 128>}, {transform_indices = @transform_4, window_bounds = array<i64: 1, 16, 128>}, {transform_indices = @transform_5, window_bounds = array<i64: 1, 16, 128>}]} {
    %c0 = arith.constant 0 : index
    %c0_0 = arith.constant 0 : index
    %c0_1 = arith.constant 0 : index
    %0 = vector.load %arg1[%c0, %c0_0, %c0_1] : memref<1x16x128xf32, #tpu.memory_space<vmem>>, vector<1x16x128xf32>
    %1 = vector.shape_cast %0 : vector<1x16x128xf32> to vector<16x128xf32>
    %c0_2 = arith.constant 0 : index
    %c0_3 = arith.constant 0 : index
    %c0_4 = arith.constant 0 : index
    %2 = vector.load %arg2[%c0_2, %c0_3, %c0_4] : memref<1x16x128xf32, #tpu.memory_space<vmem>>, vector<1x16x128xf32>
    %3 = vector.shape_cast %2 : vector<1x16x128xf32> to vector<16x128xf32>
    %cst = arith.constant 0.000000e+00 : f32
    %4 = vector.broadcast %cst : f32 to vector<16x128xf32>
    %cst_5 = arith.constant 0.000000e+00 : f32
    %5 = vector.broadcast %cst_5 : f32 to vector<16x128xf32>
    %6 = vector.extract_strided_slice %1 {offsets = [0, 0], sizes = [1, 128], strides = [1, 1]} : vector<16x128xf32> to vector<1x128xf32>
    %7 = vector.extract_strided_slice %3 {offsets = [0, 0], sizes = [1, 128], strides = [1, 1]} : vector<16x128xf32> to vector<1x128xf32>
    %c0_6 = arith.constant 0 : index
    %c0_7 = arith.constant 0 : index
    %c0_8 = arith.constant 0 : index
    %8 = vector.load %arg3[%c0_6, %c0_7, %c0_8] : memref<16x16x128xf32, #tpu.memory_space<vmem>>, vector<1x16x128xf32>
    %9 = vector.shape_cast %8 : vector<1x16x128xf32> to vector<16x128xf32>
    %c0_9 = arith.constant 0 : index
    %c0_10 = arith.constant 0 : index
    %c0_11 = arith.constant 0 : index
    %10 = vector.load %arg4[%c0_9, %c0_10, %c0_11] : memref<16x16x128xf32, #tpu.memory_space<vmem>>, vector<1x16x128xf32>
    %11 = vector.shape_cast %10 : vector<1x16x128xf32> to vector<16x128xf32>
    %12 = vector.broadcast %6 : vector<1x128xf32> to vector<16x128xf32>
    %13 = arith.mulf %12, %9 : vector<16x128xf32>
    %14 = vector.broadcast %7 : vector<1x128xf32> to vector<16x128xf32>
    %15 = arith.mulf %14, %11 : vector<16x128xf32>
    %16 = arith.subf %13, %15 : vector<16x128xf32>
    %17 = arith.addf %4, %16 : vector<16x128xf32>
    %18 = vector.broadcast %6 : vector<1x128xf32> to vector<16x128xf32>
    %19 = arith.mulf %18, %11 : vector<16x128xf32>
    %20 = vector.broadcast %7 : vector<1x128xf32> to vector<16x128xf32>
    %21 = arith.mulf %20, %9 : vector<16x128xf32>
    %22 = arith.addf %19, %21 : vector<16x128xf32>
    %23 = arith.addf %5, %22 : vector<16x128xf32>
    %24 = vector.extract_strided_slice %1 {offsets = [1, 0], sizes = [1, 128], strides = [1, 1]} : vector<16x128xf32> to vector<1x128xf32>
    %25 = vector.extract_strided_slice %3 {offsets = [1, 0], sizes = [1, 128], strides = [1, 1]} : vector<16x128xf32> to vector<1x128xf32>
    %c1 = arith.constant 1 : index
    %c0_12 = arith.constant 0 : index
    %c0_13 = arith.constant 0 : index
    %26 = vector.load %arg3[%c1, %c0_12, %c0_13] : memref<16x16x128xf32, #tpu.memory_space<vmem>>, vector<1x16x128xf32>
    %27 = vector.shape_cast %26 : vector<1x16x128xf32> to vector<16x128xf32>
    %c1_14 = arith.constant 1 : index
    %c0_15 = arith.constant 0 : index
    %c0_16 = arith.constant 0 : index
    %28 = vector.load %arg4[%c1_14, %c0_15, %c0_16] : memref<16x16x128xf32, #tpu.memory_space<vmem>>, vector<1x16x128xf32>
    %29 = vector.shape_cast %28 : vector<1x16x128xf32> to vector<16x128xf32>
    %30 = vector.broadcast %24 : vector<1x128xf32> to vector<16x128xf32>
    %31 = arith.mulf %30, %27 : vector<16x128xf32>
    %32 = vector.broadcast %25 : vector<1x128xf32> to vector<16x128xf32>
    %33 = arith.mulf %32, %29 : vector<16x128xf32>
    %34 = arith.subf %31, %33 : vector<16x128xf32>
    %35 = arith.addf %17, %34 : vector<16x128xf32>
    %36 = vector.broadcast %24 : vector<1x128xf32> to vector<16x128xf32>
    %37 = arith.mulf %36, %29 : vector<16x128xf32>
    %38 = vector.broadcast %25 : vector<1x128xf32> to vector<16x128xf32>
    %39 = arith.mulf %38, %27 : vector<16x128xf32>
    %40 = arith.addf %37, %39 : vector<16x128xf32>
    %41 = arith.addf %23, %40 : vector<16x128xf32>
    %42 = vector.extract_strided_slice %1 {offsets = [2, 0], sizes = [1, 128], strides = [1, 1]} : vector<16x128xf32> to vector<1x128xf32>
    %43 = vector.extract_strided_slice %3 {offsets = [2, 0], sizes = [1, 128], strides = [1, 1]} : vector<16x128xf32> to vector<1x128xf32>
    %c2 = arith.constant 2 : index
    %c0_17 = arith.constant 0 : index
    %c0_18 = arith.constant 0 : index
    %44 = vector.load %arg3[%c2, %c0_17, %c0_18] : memref<16x16x128xf32, #tpu.memory_space<vmem>>, vector<1x16x128xf32>
    %45 = vector.shape_cast %44 : vector<1x16x128xf32> to vector<16x128xf32>
    %c2_19 = arith.constant 2 : index
    %c0_20 = arith.constant 0 : index
    %c0_21 = arith.constant 0 : index
    %46 = vector.load %arg4[%c2_19, %c0_20, %c0_21] : memref<16x16x128xf32, #tpu.memory_space<vmem>>, vector<1x16x128xf32>
    %47 = vector.shape_cast %46 : vector<1x16x128xf32> to vector<16x128xf32>
    %48 = vector.broadcast %42 : vector<1x128xf32> to vector<16x128xf32>
    %49 = arith.mulf %48, %45 : vector<16x128xf32>
    %50 = vector.broadcast %43 : vector<1x128xf32> to vector<16x128xf32>
    %51 = arith.mulf %50, %47 : vector<16x128xf32>
    %52 = arith.subf %49, %51 : vector<16x128xf32>
    %53 = arith.addf %35, %52 : vector<16x128xf32>
    %54 = vector.broadcast %42 : vector<1x128xf32> to vector<16x128xf32>
    %55 = arith.mulf %54, %47 : vector<16x128xf32>
    %56 = vector.broadcast %43 : vector<1x128xf32> to vector<16x128xf32>
    %57 = arith.mulf %56, %45 : vector<16x128xf32>
    %58 = arith.addf %55, %57 : vector<16x128xf32>
    %59 = arith.addf %41, %58 : vector<16x128xf32>
    %60 = vector.extract_strided_slice %1 {offsets = [3, 0], sizes = [1, 128], strides = [1, 1]} : vector<16x128xf32> to vector<1x128xf32>
    %61 = vector.extract_strided_slice %3 {offsets = [3, 0], sizes = [1, 128], strides = [1, 1]} : vector<16x128xf32> to vector<1x128xf32>
    %c3 = arith.constant 3 : index
    %c0_22 = arith.constant 0 : index
    %c0_23 = arith.constant 0 : index
    %62 = vector.load %arg3[%c3, %c0_22, %c0_23] : memref<16x16x128xf32, #tpu.memory_space<vmem>>, vector<1x16x128xf32>
    %63 = vector.shape_cast %62 : vector<1x16x128xf32> to vector<16x128xf32>
    %c3_24 = arith.constant 3 : index
    %c0_25 = arith.constant 0 : index
    %c0_26 = arith.constant 0 : index
    %64 = vector.load %arg4[%c3_24, %c0_25, %c0_26] : memref<16x16x128xf32, #tpu.memory_space<vmem>>, vector<1x16x128xf32>
    %65 = vector.shape_cast %64 : vector<1x16x128xf32> to vector<16x128xf32>
    %66 = vector.broadcast %60 : vector<1x128xf32> to vector<16x128xf32>
    %67 = arith.mulf %66, %63 : vector<16x128xf32>
    %68 = vector.broadcast %61 : vector<1x128xf32> to vector<16x128xf32>
    %69 = arith.mulf %68, %65 : vector<16x128xf32>
    %70 = arith.subf %67, %69 : vector<16x128xf32>
    %71 = arith.addf %53, %70 : vector<16x128xf32>
    %72 = vector.broadcast %60 : vector<1x128xf32> to vector<16x128xf32>
    %73 = arith.mulf %72, %65 : vector<16x128xf32>
    %74 = vector.broadcast %61 : vector<1x128xf32> to vector<16x128xf32>
    %75 = arith.mulf %74, %63 : vector<16x128xf32>
    %76 = arith.addf %73, %75 : vector<16x128xf32>
    %77 = arith.addf %59, %76 : vector<16x128xf32>
    %78 = vector.extract_strided_slice %1 {offsets = [4, 0], sizes = [1, 128], strides = [1, 1]} : vector<16x128xf32> to vector<1x128xf32>
    %79 = vector.extract_strided_slice %3 {offsets = [4, 0], sizes = [1, 128], strides = [1, 1]} : vector<16x128xf32> to vector<1x128xf32>
    %c4 = arith.constant 4 : index
    %c0_27 = arith.constant 0 : index
    %c0_28 = arith.constant 0 : index
    %80 = vector.load %arg3[%c4, %c0_27, %c0_28] : memref<16x16x128xf32, #tpu.memory_space<vmem>>, vector<1x16x128xf32>
    %81 = vector.shape_cast %80 : vector<1x16x128xf32> to vector<16x128xf32>
    %c4_29 = arith.constant 4 : index
    %c0_30 = arith.constant 0 : index
    %c0_31 = arith.constant 0 : index
    %82 = vector.load %arg4[%c4_29, %c0_30, %c0_31] : memref<16x16x128xf32, #tpu.memory_space<vmem>>, vector<1x16x128xf32>
    %83 = vector.shape_cast %82 : vector<1x16x128xf32> to vector<16x128xf32>
    %84 = vector.broadcast %78 : vector<1x128xf32> to vector<16x128xf32>
    %85 = arith.mulf %84, %81 : vector<16x128xf32>
    %86 = vector.broadcast %79 : vector<1x128xf32> to vector<16x128xf32>
    %87 = arith.mulf %86, %83 : vector<16x128xf32>
    %88 = arith.subf %85, %87 : vector<16x128xf32>
    %89 = arith.addf %71, %88 : vector<16x128xf32>
    %90 = vector.broadcast %78 : vector<1x128xf32> to vector<16x128xf32>
    %91 = arith.mulf %90, %83 : vector<16x128xf32>
    %92 = vector.broadcast %79 : vector<1x128xf32> to vector<16x128xf32>
    %93 = arith.mulf %92, %81 : vector<16x128xf32>
    %94 = arith.addf %91, %93 : vector<16x128xf32>
    %95 = arith.addf %77, %94 : vector<16x128xf32>
    %96 = vector.extract_strided_slice %1 {offsets = [5, 0], sizes = [1, 128], strides = [1, 1]} : vector<16x128xf32> to vector<1x128xf32>
    %97 = vector.extract_strided_slice %3 {offsets = [5, 0], sizes = [1, 128], strides = [1, 1]} : vector<16x128xf32> to vector<1x128xf32>
    %c5 = arith.constant 5 : index
    %c0_32 = arith.constant 0 : index
    %c0_33 = arith.constant 0 : index
    %98 = vector.load %arg3[%c5, %c0_32, %c0_33] : memref<16x16x128xf32, #tpu.memory_space<vmem>>, vector<1x16x128xf32>
    %99 = vector.shape_cast %98 : vector<1x16x128xf32> to vector<16x128xf32>
    %c5_34 = arith.constant 5 : index
    %c0_35 = arith.constant 0 : index
    %c0_36 = arith.constant 0 : index
    %100 = vector.load %arg4[%c5_34, %c0_35, %c0_36] : memref<16x16x128xf32, #tpu.memory_space<vmem>>, vector<1x16x128xf32>
    %101 = vector.shape_cast %100 : vector<1x16x128xf32> to vector<16x128xf32>
    %102 = vector.broadcast %96 : vector<1x128xf32> to vector<16x128xf32>
    %103 = arith.mulf %102, %99 : vector<16x128xf32>
    %104 = vector.broadcast %97 : vector<1x128xf32> to vector<16x128xf32>
    %105 = arith.mulf %104, %101 : vector<16x128xf32>
    %106 = arith.subf %103, %105 : vector<16x128xf32>
    %107 = arith.addf %89, %106 : vector<16x128xf32>
    %108 = vector.broadcast %96 : vector<1x128xf32> to vector<16x128xf32>
    %109 = arith.mulf %108, %101 : vector<16x128xf32>
    %110 = vector.broadcast %97 : vector<1x128xf32> to vector<16x128xf32>
    %111 = arith.mulf %110, %99 : vector<16x128xf32>
    %112 = arith.addf %109, %111 : vector<16x128xf32>
    %113 = arith.addf %95, %112 : vector<16x128xf32>
    %114 = vector.extract_strided_slice %1 {offsets = [6, 0], sizes = [1, 128], strides = [1, 1]} : vector<16x128xf32> to vector<1x128xf32>
    %115 = vector.extract_strided_slice %3 {offsets = [6, 0], sizes = [1, 128], strides = [1, 1]} : vector<16x128xf32> to vector<1x128xf32>
    %c6 = arith.constant 6 : index
    %c0_37 = arith.constant 0 : index
    %c0_38 = arith.constant 0 : index
    %116 = vector.load %arg3[%c6, %c0_37, %c0_38] : memref<16x16x128xf32, #tpu.memory_space<vmem>>, vector<1x16x128xf32>
    %117 = vector.shape_cast %116 : vector<1x16x128xf32> to vector<16x128xf32>
    %c6_39 = arith.constant 6 : index
    %c0_40 = arith.constant 0 : index
    %c0_41 = arith.constant 0 : index
    %118 = vector.load %arg4[%c6_39, %c0_40, %c0_41] : memref<16x16x128xf32, #tpu.memory_space<vmem>>, vector<1x16x128xf32>
    %119 = vector.shape_cast %118 : vector<1x16x128xf32> to vector<16x128xf32>
    %120 = vector.broadcast %114 : vector<1x128xf32> to vector<16x128xf32>
    %121 = arith.mulf %120, %117 : vector<16x128xf32>
    %122 = vector.broadcast %115 : vector<1x128xf32> to vector<16x128xf32>
    %123 = arith.mulf %122, %119 : vector<16x128xf32>
    %124 = arith.subf %121, %123 : vector<16x128xf32>
    %125 = arith.addf %107, %124 : vector<16x128xf32>
    %126 = vector.broadcast %114 : vector<1x128xf32> to vector<16x128xf32>
    %127 = arith.mulf %126, %119 : vector<16x128xf32>
    %128 = vector.broadcast %115 : vector<1x128xf32> to vector<16x128xf32>
    %129 = arith.mulf %128, %117 : vector<16x128xf32>
    %130 = arith.addf %127, %129 : vector<16x128xf32>
    %131 = arith.addf %113, %130 : vector<16x128xf32>
    %132 = vector.extract_strided_slice %1 {offsets = [7, 0], sizes = [1, 128], strides = [1, 1]} : vector<16x128xf32> to vector<1x128xf32>
    %133 = vector.extract_strided_slice %3 {offsets = [7, 0], sizes = [1, 128], strides = [1, 1]} : vector<16x128xf32> to vector<1x128xf32>
    %c7 = arith.constant 7 : index
    %c0_42 = arith.constant 0 : index
    %c0_43 = arith.constant 0 : index
    %134 = vector.load %arg3[%c7, %c0_42, %c0_43] : memref<16x16x128xf32, #tpu.memory_space<vmem>>, vector<1x16x128xf32>
    %135 = vector.shape_cast %134 : vector<1x16x128xf32> to vector<16x128xf32>
    %c7_44 = arith.constant 7 : index
    %c0_45 = arith.constant 0 : index
    %c0_46 = arith.constant 0 : index
    %136 = vector.load %arg4[%c7_44, %c0_45, %c0_46] : memref<16x16x128xf32, #tpu.memory_space<vmem>>, vector<1x16x128xf32>
    %137 = vector.shape_cast %136 : vector<1x16x128xf32> to vector<16x128xf32>
    %138 = vector.broadcast %132 : vector<1x128xf32> to vector<16x128xf32>
    %139 = arith.mulf %138, %135 : vector<16x128xf32>
    %140 = vector.broadcast %133 : vector<1x128xf32> to vector<16x128xf32>
    %141 = arith.mulf %140, %137 : vector<16x128xf32>
    %142 = arith.subf %139, %141 : vector<16x128xf32>
    %143 = arith.addf %125, %142 : vector<16x128xf32>
    %144 = vector.broadcast %132 : vector<1x128xf32> to vector<16x128xf32>
    %145 = arith.mulf %144, %137 : vector<16x128xf32>
    %146 = vector.broadcast %133 : vector<1x128xf32> to vector<16x128xf32>
    %147 = arith.mulf %146, %135 : vector<16x128xf32>
    %148 = arith.addf %145, %147 : vector<16x128xf32>
    %149 = arith.addf %131, %148 : vector<16x128xf32>
    %150 = vector.extract_strided_slice %1 {offsets = [8, 0], sizes = [1, 128], strides = [1, 1]} : vector<16x128xf32> to vector<1x128xf32>
    %151 = vector.extract_strided_slice %3 {offsets = [8, 0], sizes = [1, 128], strides = [1, 1]} : vector<16x128xf32> to vector<1x128xf32>
    %c8 = arith.constant 8 : index
    %c0_47 = arith.constant 0 : index
    %c0_48 = arith.constant 0 : index
    %152 = vector.load %arg3[%c8, %c0_47, %c0_48] : memref<16x16x128xf32, #tpu.memory_space<vmem>>, vector<1x16x128xf32>
    %153 = vector.shape_cast %152 : vector<1x16x128xf32> to vector<16x128xf32>
    %c8_49 = arith.constant 8 : index
    %c0_50 = arith.constant 0 : index
    %c0_51 = arith.constant 0 : index
    %154 = vector.load %arg4[%c8_49, %c0_50, %c0_51] : memref<16x16x128xf32, #tpu.memory_space<vmem>>, vector<1x16x128xf32>
    %155 = vector.shape_cast %154 : vector<1x16x128xf32> to vector<16x128xf32>
    %156 = vector.broadcast %150 : vector<1x128xf32> to vector<16x128xf32>
    %157 = arith.mulf %156, %153 : vector<16x128xf32>
    %158 = vector.broadcast %151 : vector<1x128xf32> to vector<16x128xf32>
    %159 = arith.mulf %158, %155 : vector<16x128xf32>
    %160 = arith.subf %157, %159 : vector<16x128xf32>
    %161 = arith.addf %143, %160 : vector<16x128xf32>
    %162 = vector.broadcast %150 : vector<1x128xf32> to vector<16x128xf32>
    %163 = arith.mulf %162, %155 : vector<16x128xf32>
    %164 = vector.broadcast %151 : vector<1x128xf32> to vector<16x128xf32>
    %165 = arith.mulf %164, %153 : vector<16x128xf32>
    %166 = arith.addf %163, %165 : vector<16x128xf32>
    %167 = arith.addf %149, %166 : vector<16x128xf32>
    %168 = vector.extract_strided_slice %1 {offsets = [9, 0], sizes = [1, 128], strides = [1, 1]} : vector<16x128xf32> to vector<1x128xf32>
    %169 = vector.extract_strided_slice %3 {offsets = [9, 0], sizes = [1, 128], strides = [1, 1]} : vector<16x128xf32> to vector<1x128xf32>
    %c9 = arith.constant 9 : index
    %c0_52 = arith.constant 0 : index
    %c0_53 = arith.constant 0 : index
    %170 = vector.load %arg3[%c9, %c0_52, %c0_53] : memref<16x16x128xf32, #tpu.memory_space<vmem>>, vector<1x16x128xf32>
    %171 = vector.shape_cast %170 : vector<1x16x128xf32> to vector<16x128xf32>
    %c9_54 = arith.constant 9 : index
    %c0_55 = arith.constant 0 : index
    %c0_56 = arith.constant 0 : index
    %172 = vector.load %arg4[%c9_54, %c0_55, %c0_56] : memref<16x16x128xf32, #tpu.memory_space<vmem>>, vector<1x16x128xf32>
    %173 = vector.shape_cast %172 : vector<1x16x128xf32> to vector<16x128xf32>
    %174 = vector.broadcast %168 : vector<1x128xf32> to vector<16x128xf32>
    %175 = arith.mulf %174, %171 : vector<16x128xf32>
    %176 = vector.broadcast %169 : vector<1x128xf32> to vector<16x128xf32>
    %177 = arith.mulf %176, %173 : vector<16x128xf32>
    %178 = arith.subf %175, %177 : vector<16x128xf32>
    %179 = arith.addf %161, %178 : vector<16x128xf32>
    %180 = vector.broadcast %168 : vector<1x128xf32> to vector<16x128xf32>
    %181 = arith.mulf %180, %173 : vector<16x128xf32>
    %182 = vector.broadcast %169 : vector<1x128xf32> to vector<16x128xf32>
    %183 = arith.mulf %182, %171 : vector<16x128xf32>
    %184 = arith.addf %181, %183 : vector<16x128xf32>
    %185 = arith.addf %167, %184 : vector<16x128xf32>
    %186 = vector.extract_strided_slice %1 {offsets = [10, 0], sizes = [1, 128], strides = [1, 1]} : vector<16x128xf32> to vector<1x128xf32>
    %187 = vector.extract_strided_slice %3 {offsets = [10, 0], sizes = [1, 128], strides = [1, 1]} : vector<16x128xf32> to vector<1x128xf32>
    %c10 = arith.constant 10 : index
    %c0_57 = arith.constant 0 : index
    %c0_58 = arith.constant 0 : index
    %188 = vector.load %arg3[%c10, %c0_57, %c0_58] : memref<16x16x128xf32, #tpu.memory_space<vmem>>, vector<1x16x128xf32>
    %189 = vector.shape_cast %188 : vector<1x16x128xf32> to vector<16x128xf32>
    %c10_59 = arith.constant 10 : index
    %c0_60 = arith.constant 0 : index
    %c0_61 = arith.constant 0 : index
    %190 = vector.load %arg4[%c10_59, %c0_60, %c0_61] : memref<16x16x128xf32, #tpu.memory_space<vmem>>, vector<1x16x128xf32>
    %191 = vector.shape_cast %190 : vector<1x16x128xf32> to vector<16x128xf32>
    %192 = vector.broadcast %186 : vector<1x128xf32> to vector<16x128xf32>
    %193 = arith.mulf %192, %189 : vector<16x128xf32>
    %194 = vector.broadcast %187 : vector<1x128xf32> to vector<16x128xf32>
    %195 = arith.mulf %194, %191 : vector<16x128xf32>
    %196 = arith.subf %193, %195 : vector<16x128xf32>
    %197 = arith.addf %179, %196 : vector<16x128xf32>
    %198 = vector.broadcast %186 : vector<1x128xf32> to vector<16x128xf32>
    %199 = arith.mulf %198, %191 : vector<16x128xf32>
    %200 = vector.broadcast %187 : vector<1x128xf32> to vector<16x128xf32>
    %201 = arith.mulf %200, %189 : vector<16x128xf32>
    %202 = arith.addf %199, %201 : vector<16x128xf32>
    %203 = arith.addf %185, %202 : vector<16x128xf32>
    %204 = vector.extract_strided_slice %1 {offsets = [11, 0], sizes = [1, 128], strides = [1, 1]} : vector<16x128xf32> to vector<1x128xf32>
    %205 = vector.extract_strided_slice %3 {offsets = [11, 0], sizes = [1, 128], strides = [1, 1]} : vector<16x128xf32> to vector<1x128xf32>
    %c11 = arith.constant 11 : index
    %c0_62 = arith.constant 0 : index
    %c0_63 = arith.constant 0 : index
    %206 = vector.load %arg3[%c11, %c0_62, %c0_63] : memref<16x16x128xf32, #tpu.memory_space<vmem>>, vector<1x16x128xf32>
    %207 = vector.shape_cast %206 : vector<1x16x128xf32> to vector<16x128xf32>
    %c11_64 = arith.constant 11 : index
    %c0_65 = arith.constant 0 : index
    %c0_66 = arith.constant 0 : index
    %208 = vector.load %arg4[%c11_64, %c0_65, %c0_66] : memref<16x16x128xf32, #tpu.memory_space<vmem>>, vector<1x16x128xf32>
    %209 = vector.shape_cast %208 : vector<1x16x128xf32> to vector<16x128xf32>
    %210 = vector.broadcast %204 : vector<1x128xf32> to vector<16x128xf32>
    %211 = arith.mulf %210, %207 : vector<16x128xf32>
    %212 = vector.broadcast %205 : vector<1x128xf32> to vector<16x128xf32>
    %213 = arith.mulf %212, %209 : vector<16x128xf32>
    %214 = arith.subf %211, %213 : vector<16x128xf32>
    %215 = arith.addf %197, %214 : vector<16x128xf32>
    %216 = vector.broadcast %204 : vector<1x128xf32> to vector<16x128xf32>
    %217 = arith.mulf %216, %209 : vector<16x128xf32>
    %218 = vector.broadcast %205 : vector<1x128xf32> to vector<16x128xf32>
    %219 = arith.mulf %218, %207 : vector<16x128xf32>
    %220 = arith.addf %217, %219 : vector<16x128xf32>
    %221 = arith.addf %203, %220 : vector<16x128xf32>
    %222 = vector.extract_strided_slice %1 {offsets = [12, 0], sizes = [1, 128], strides = [1, 1]} : vector<16x128xf32> to vector<1x128xf32>
    %223 = vector.extract_strided_slice %3 {offsets = [12, 0], sizes = [1, 128], strides = [1, 1]} : vector<16x128xf32> to vector<1x128xf32>
    %c12 = arith.constant 12 : index
    %c0_67 = arith.constant 0 : index
    %c0_68 = arith.constant 0 : index
    %224 = vector.load %arg3[%c12, %c0_67, %c0_68] : memref<16x16x128xf32, #tpu.memory_space<vmem>>, vector<1x16x128xf32>
    %225 = vector.shape_cast %224 : vector<1x16x128xf32> to vector<16x128xf32>
    %c12_69 = arith.constant 12 : index
    %c0_70 = arith.constant 0 : index
    %c0_71 = arith.constant 0 : index
    %226 = vector.load %arg4[%c12_69, %c0_70, %c0_71] : memref<16x16x128xf32, #tpu.memory_space<vmem>>, vector<1x16x128xf32>
    %227 = vector.shape_cast %226 : vector<1x16x128xf32> to vector<16x128xf32>
    %228 = vector.broadcast %222 : vector<1x128xf32> to vector<16x128xf32>
    %229 = arith.mulf %228, %225 : vector<16x128xf32>
    %230 = vector.broadcast %223 : vector<1x128xf32> to vector<16x128xf32>
    %231 = arith.mulf %230, %227 : vector<16x128xf32>
    %232 = arith.subf %229, %231 : vector<16x128xf32>
    %233 = arith.addf %215, %232 : vector<16x128xf32>
    %234 = vector.broadcast %222 : vector<1x128xf32> to vector<16x128xf32>
    %235 = arith.mulf %234, %227 : vector<16x128xf32>
    %236 = vector.broadcast %223 : vector<1x128xf32> to vector<16x128xf32>
    %237 = arith.mulf %236, %225 : vector<16x128xf32>
    %238 = arith.addf %235, %237 : vector<16x128xf32>
    %239 = arith.addf %221, %238 : vector<16x128xf32>
    %240 = vector.extract_strided_slice %1 {offsets = [13, 0], sizes = [1, 128], strides = [1, 1]} : vector<16x128xf32> to vector<1x128xf32>
    %241 = vector.extract_strided_slice %3 {offsets = [13, 0], sizes = [1, 128], strides = [1, 1]} : vector<16x128xf32> to vector<1x128xf32>
    %c13 = arith.constant 13 : index
    %c0_72 = arith.constant 0 : index
    %c0_73 = arith.constant 0 : index
    %242 = vector.load %arg3[%c13, %c0_72, %c0_73] : memref<16x16x128xf32, #tpu.memory_space<vmem>>, vector<1x16x128xf32>
    %243 = vector.shape_cast %242 : vector<1x16x128xf32> to vector<16x128xf32>
    %c13_74 = arith.constant 13 : index
    %c0_75 = arith.constant 0 : index
    %c0_76 = arith.constant 0 : index
    %244 = vector.load %arg4[%c13_74, %c0_75, %c0_76] : memref<16x16x128xf32, #tpu.memory_space<vmem>>, vector<1x16x128xf32>
    %245 = vector.shape_cast %244 : vector<1x16x128xf32> to vector<16x128xf32>
    %246 = vector.broadcast %240 : vector<1x128xf32> to vector<16x128xf32>
    %247 = arith.mulf %246, %243 : vector<16x128xf32>
    %248 = vector.broadcast %241 : vector<1x128xf32> to vector<16x128xf32>
    %249 = arith.mulf %248, %245 : vector<16x128xf32>
    %250 = arith.subf %247, %249 : vector<16x128xf32>
    %251 = arith.addf %233, %250 : vector<16x128xf32>
    %252 = vector.broadcast %240 : vector<1x128xf32> to vector<16x128xf32>
    %253 = arith.mulf %252, %245 : vector<16x128xf32>
    %254 = vector.broadcast %241 : vector<1x128xf32> to vector<16x128xf32>
    %255 = arith.mulf %254, %243 : vector<16x128xf32>
    %256 = arith.addf %253, %255 : vector<16x128xf32>
    %257 = arith.addf %239, %256 : vector<16x128xf32>
    %258 = vector.extract_strided_slice %1 {offsets = [14, 0], sizes = [1, 128], strides = [1, 1]} : vector<16x128xf32> to vector<1x128xf32>
    %259 = vector.extract_strided_slice %3 {offsets = [14, 0], sizes = [1, 128], strides = [1, 1]} : vector<16x128xf32> to vector<1x128xf32>
    %c14 = arith.constant 14 : index
    %c0_77 = arith.constant 0 : index
    %c0_78 = arith.constant 0 : index
    %260 = vector.load %arg3[%c14, %c0_77, %c0_78] : memref<16x16x128xf32, #tpu.memory_space<vmem>>, vector<1x16x128xf32>
    %261 = vector.shape_cast %260 : vector<1x16x128xf32> to vector<16x128xf32>
    %c14_79 = arith.constant 14 : index
    %c0_80 = arith.constant 0 : index
    %c0_81 = arith.constant 0 : index
    %262 = vector.load %arg4[%c14_79, %c0_80, %c0_81] : memref<16x16x128xf32, #tpu.memory_space<vmem>>, vector<1x16x128xf32>
    %263 = vector.shape_cast %262 : vector<1x16x128xf32> to vector<16x128xf32>
    %264 = vector.broadcast %258 : vector<1x128xf32> to vector<16x128xf32>
    %265 = arith.mulf %264, %261 : vector<16x128xf32>
    %266 = vector.broadcast %259 : vector<1x128xf32> to vector<16x128xf32>
    %267 = arith.mulf %266, %263 : vector<16x128xf32>
    %268 = arith.subf %265, %267 : vector<16x128xf32>
    %269 = arith.addf %251, %268 : vector<16x128xf32>
    %270 = vector.broadcast %258 : vector<1x128xf32> to vector<16x128xf32>
    %271 = arith.mulf %270, %263 : vector<16x128xf32>
    %272 = vector.broadcast %259 : vector<1x128xf32> to vector<16x128xf32>
    %273 = arith.mulf %272, %261 : vector<16x128xf32>
    %274 = arith.addf %271, %273 : vector<16x128xf32>
    %275 = arith.addf %257, %274 : vector<16x128xf32>
    %276 = vector.extract_strided_slice %1 {offsets = [15, 0], sizes = [1, 128], strides = [1, 1]} : vector<16x128xf32> to vector<1x128xf32>
    %277 = vector.extract_strided_slice %3 {offsets = [15, 0], sizes = [1, 128], strides = [1, 1]} : vector<16x128xf32> to vector<1x128xf32>
    %c15 = arith.constant 15 : index
    %c0_82 = arith.constant 0 : index
    %c0_83 = arith.constant 0 : index
    %278 = vector.load %arg3[%c15, %c0_82, %c0_83] : memref<16x16x128xf32, #tpu.memory_space<vmem>>, vector<1x16x128xf32>
    %279 = vector.shape_cast %278 : vector<1x16x128xf32> to vector<16x128xf32>
    %c15_84 = arith.constant 15 : index
    %c0_85 = arith.constant 0 : index
    %c0_86 = arith.constant 0 : index
    %280 = vector.load %arg4[%c15_84, %c0_85, %c0_86] : memref<16x16x128xf32, #tpu.memory_space<vmem>>, vector<1x16x128xf32>
    %281 = vector.shape_cast %280 : vector<1x16x128xf32> to vector<16x128xf32>
    %282 = vector.broadcast %276 : vector<1x128xf32> to vector<16x128xf32>
    %283 = arith.mulf %282, %279 : vector<16x128xf32>
    %284 = vector.broadcast %277 : vector<1x128xf32> to vector<16x128xf32>
    %285 = arith.mulf %284, %281 : vector<16x128xf32>
    %286 = arith.subf %283, %285 : vector<16x128xf32>
    %287 = arith.addf %269, %286 : vector<16x128xf32>
    %288 = vector.broadcast %276 : vector<1x128xf32> to vector<16x128xf32>
    %289 = arith.mulf %288, %281 : vector<16x128xf32>
    %290 = vector.broadcast %277 : vector<1x128xf32> to vector<16x128xf32>
    %291 = arith.mulf %290, %279 : vector<16x128xf32>
    %292 = arith.addf %289, %291 : vector<16x128xf32>
    %293 = arith.addf %275, %292 : vector<16x128xf32>
    %c0_87 = arith.constant 0 : index
    %c0_88 = arith.constant 0 : index
    %c0_89 = arith.constant 0 : index
    %294 = vector.load %arg5[%c0_87, %c0_88, %c0_89] : memref<1x16x128xf32, #tpu.memory_space<vmem>>, vector<1x16x128xf32>
    %295 = vector.shape_cast %294 : vector<1x16x128xf32> to vector<16x128xf32>
    %296 = vector.shape_cast %287 : vector<16x128xf32> to vector<1x16x128xf32>
    tpu.vector_store %arg5[%c0_87, %c0_88, %c0_89], %296 {strides = array<i32>} : memref<1x16x128xf32, #tpu.memory_space<vmem>>, vector<1x16x128xf32>,
    %c0_90 = arith.constant 0 : index
    %c0_91 = arith.constant 0 : index
    %c0_92 = arith.constant 0 : index
    %297 = vector.load %arg6[%c0_90, %c0_91, %c0_92] : memref<1x16x128xf32, #tpu.memory_space<vmem>>, vector<1x16x128xf32>
    %298 = vector.shape_cast %297 : vector<1x16x128xf32> to vector<16x128xf32>
    %299 = vector.shape_cast %293 : vector<16x128xf32> to vector<1x16x128xf32>
    tpu.vector_store %arg6[%c0_90, %c0_91, %c0_92], %299 {strides = array<i32>} : memref<1x16x128xf32, #tpu.memory_space<vmem>>, vector<1x16x128xf32>,
    return
  }
  func.func @transform_0(%arg0: i32) -> (i32, i32, i32) {
    %c0_i32 = arith.constant 0 : i32
    %c0_i32_0 = arith.constant 0 : i32
    %c0_i32_1 = arith.constant 0 : i32
    return %arg0, %c0_i32, %c0_i32_0 : i32, i32, i32
  }
  func.func @transform_1(%arg0: i32) -> (i32, i32, i32) {
    %c0_i32 = arith.constant 0 : i32
    %c0_i32_0 = arith.constant 0 : i32
    %c0_i32_1 = arith.constant 0 : i32
    return %arg0, %c0_i32, %c0_i32_0 : i32, i32, i32
  }
  func.func @transform_2(%arg0: i32) -> (i32, i32, i32) {
    %c0_i32 = arith.constant 0 : i32
    %c0_i32_0 = arith.constant 0 : i32
    %c0_i32_1 = arith.constant 0 : i32
    %c0_i32_2 = arith.constant 0 : i32
    return %c0_i32, %c0_i32_0, %c0_i32_1 : i32, i32, i32
  }
  func.func @transform_3(%arg0: i32) -> (i32, i32, i32) {
    %c0_i32 = arith.constant 0 : i32
    %c0_i32_0 = arith.constant 0 : i32
    %c0_i32_1 = arith.constant 0 : i32
    %c0_i32_2 = arith.constant 0 : i32
    return %c0_i32, %c0_i32_0, %c0_i32_1 : i32, i32, i32
  }
  func.func @transform_4(%arg0: i32) -> (i32, i32, i32) {
    %c0_i32 = arith.constant 0 : i32
    %c0_i32_0 = arith.constant 0 : i32
    %c0_i32_1 = arith.constant 0 : i32
    return %arg0, %c0_i32, %c0_i32_0 : i32, i32, i32
  }
  func.func @transform_5(%arg0: i32) -> (i32, i32, i32) {
    %c0_i32 = arith.constant 0 : i32
    %c0_i32_0 = arith.constant 0 : i32
    %c0_i32_1 = arith.constant 0 : i32
    return %arg0, %c0_i32, %c0_i32_0 : i32, i32, i32
  }
}

module attributes {stable_mosaic.version = 11 : i64} {
  func.func @_linres_stats_kernel(%arg0: i32, %arg1: i32, %arg2: memref<1x16x256xf32, #tpu.memory_space<vmem>>, %arg3: memref<16x16xf32, #tpu.memory_space<vmem>>, %arg4: memref<16x1xf32, #tpu.memory_space<vmem>>, %arg5: memref<1x16x256xf32, #tpu.memory_space<vmem>>, %arg6: memref<1x16x1xf32, #tpu.memory_space<vmem>>, %arg7: memref<1x16x1xf32, #tpu.memory_space<vmem>>) attributes {dimension_semantics = [#tpu.dimension_semantics<parallel>, #tpu.dimension_semantics<arbitrary>], iteration_bounds = array<i64: 2, 1>, scalar_prefetch = 0 : i64, scratch_operands = 0 : i64, tpu.core_type = #tpu.core_type<tc>, window_params = [{transform_indices = @transform_0, window_bounds = array<i64: 1, 16, 256>}, {pipeline_mode = #tpu.pipeline_mode<synchronous>, transform_indices = @transform_1, window_bounds = array<i64: 16, 16>}, {pipeline_mode = #tpu.pipeline_mode<synchronous>, transform_indices = @transform_2, window_bounds = array<i64: 16, 1>}, {transform_indices = @transform_3, window_bounds = array<i64: 1, 16, 256>}, {transform_indices = @transform_4, window_bounds = array<i64: 1, 16, 1>}, {transform_indices = @transform_5, window_bounds = array<i64: 1, 16, 1>}]} {
    %c0 = arith.constant 0 : index
    %c0_0 = arith.constant 0 : index
    %c0_1 = arith.constant 0 : index
    %0 = vector.load %arg2[%c0, %c0_0, %c0_1] : memref<1x16x256xf32, #tpu.memory_space<vmem>>, vector<1x16x256xf32>
    %1 = vector.shape_cast %0 : vector<1x16x256xf32> to vector<16x256xf32>
    %c0_2 = arith.constant 0 : index
    %c0_3 = arith.constant 0 : index
    %2 = vector.load %arg3[%c0_2, %c0_3] : memref<16x16xf32, #tpu.memory_space<vmem>>, vector<16x16xf32>
    %cst = arith.constant dense<0.000000e+00> : vector<16x256xf32>
    %3 = tpu.matmul %2, %1, %cst {dimension_numbers = #tpu.dot_dimension_numbers<[1], [0], [0], [1], [0, 0, 1, 1], [], []>} : vector<16x16xf32>, vector<16x256xf32>, vector<16x256xf32> -> vector<16x256xf32>
    %c0_4 = arith.constant 0 : index
    %c0_5 = arith.constant 0 : index
    %4 = vector.load %arg4[%c0_4, %c0_5] : memref<16x1xf32, #tpu.memory_space<vmem>>, vector<16x1xf32>
    %5 = vector.broadcast %4 : vector<16x1xf32> to vector<16x256xf32>
    %6 = arith.addf %3, %5 : vector<16x256xf32>
    %7 = arith.addf %1, %6 : vector<16x256xf32>
    %cst_6 = arith.constant 0.000000e+00 : f32
    %8 = vector.broadcast %cst_6 : f32 to vector<16x256xf32>
    %9 = arith.maximumf %7, %8 : vector<16x256xf32>
    %c0_7 = arith.constant 0 : index
    %c0_8 = arith.constant 0 : index
    %c0_9 = arith.constant 0 : index
    %10 = vector.load %arg5[%c0_7, %c0_8, %c0_9] : memref<1x16x256xf32, #tpu.memory_space<vmem>>, vector<1x16x256xf32>
    %11 = vector.shape_cast %10 : vector<1x16x256xf32> to vector<16x256xf32>
    %12 = vector.shape_cast %9 : vector<16x256xf32> to vector<1x16x256xf32>
    tpu.vector_store %arg5[%c0_7, %c0_8, %c0_9], %12 {strides = array<i32>} : memref<1x16x256xf32, #tpu.memory_space<vmem>>, vector<1x16x256xf32>,
    %c0_i32 = arith.constant 0 : i32
    %13 = arith.cmpi eq, %arg1, %c0_i32 : i32
    %14 = arith.extui %13 : i1 to i32
    %c0_i32_10 = arith.constant 0 : i32
    %15 = arith.cmpi ne, %14, %c0_i32_10 : i32
    scf.if %15 {
      %cst_25 = arith.constant 0.000000e+00 : f32
      %33 = vector.broadcast %cst_25 : f32 to vector<16x1xf32>
      %c0_26 = arith.constant 0 : index
      %c0_27 = arith.constant 0 : index
      %c0_28 = arith.constant 0 : index
      %34 = vector.load %arg6[%c0_26, %c0_27, %c0_28] : memref<1x16x1xf32, #tpu.memory_space<vmem>>, vector<1x16x1xf32>
      %35 = vector.shape_cast %34 : vector<1x16x1xf32> to vector<16x1xf32>
      %36 = vector.shape_cast %33 : vector<16x1xf32> to vector<1x16x1xf32>
      tpu.vector_store %arg6[%c0_26, %c0_27, %c0_28], %36 {strides = array<i32>} : memref<1x16x1xf32, #tpu.memory_space<vmem>>, vector<1x16x1xf32>,
      %cst_29 = arith.constant 0.000000e+00 : f32
      %37 = vector.broadcast %cst_29 : f32 to vector<16x1xf32>
      %c0_30 = arith.constant 0 : index
      %c0_31 = arith.constant 0 : index
      %c0_32 = arith.constant 0 : index
      %38 = vector.load %arg7[%c0_30, %c0_31, %c0_32] : memref<1x16x1xf32, #tpu.memory_space<vmem>>, vector<1x16x1xf32>
      %39 = vector.shape_cast %38 : vector<1x16x1xf32> to vector<16x1xf32>
      %40 = vector.shape_cast %37 : vector<16x1xf32> to vector<1x16x1xf32>
      tpu.vector_store %arg7[%c0_30, %c0_31, %c0_32], %40 {strides = array<i32>} : memref<1x16x1xf32, #tpu.memory_space<vmem>>, vector<1x16x1xf32>,
    } else {
    }
    %c0_11 = arith.constant 0 : index
    %c0_12 = arith.constant 0 : index
    %c0_13 = arith.constant 0 : index
    %16 = vector.load %arg6[%c0_11, %c0_12, %c0_13] : memref<1x16x1xf32, #tpu.memory_space<vmem>>, vector<1x16x1xf32>
    %17 = vector.shape_cast %16 : vector<1x16x1xf32> to vector<16x1xf32>
    %cst_14 = arith.constant dense<0.000000e+00> : vector<16xf32>
    %18 = vector.multi_reduction <add>, %9, %cst_14 [1] : vector<16x256xf32> to vector<16xf32>
    %19 = vector.shape_cast %18 : vector<16xf32> to vector<16x1xf32>
    %20 = arith.addf %17, %19 : vector<16x1xf32>
    %c0_15 = arith.constant 0 : index
    %c0_16 = arith.constant 0 : index
    %c0_17 = arith.constant 0 : index
    %21 = vector.load %arg6[%c0_15, %c0_16, %c0_17] : memref<1x16x1xf32, #tpu.memory_space<vmem>>, vector<1x16x1xf32>
    %22 = vector.shape_cast %21 : vector<1x16x1xf32> to vector<16x1xf32>
    %23 = vector.shape_cast %20 : vector<16x1xf32> to vector<1x16x1xf32>
    tpu.vector_store %arg6[%c0_15, %c0_16, %c0_17], %23 {strides = array<i32>} : memref<1x16x1xf32, #tpu.memory_space<vmem>>, vector<1x16x1xf32>,
    %c0_18 = arith.constant 0 : index
    %c0_19 = arith.constant 0 : index
    %c0_20 = arith.constant 0 : index
    %24 = vector.load %arg7[%c0_18, %c0_19, %c0_20] : memref<1x16x1xf32, #tpu.memory_space<vmem>>, vector<1x16x1xf32>
    %25 = vector.shape_cast %24 : vector<1x16x1xf32> to vector<16x1xf32>
    %26 = arith.mulf %9, %9 : vector<16x256xf32>
    %cst_21 = arith.constant dense<0.000000e+00> : vector<16xf32>
    %27 = vector.multi_reduction <add>, %26, %cst_21 [1] : vector<16x256xf32> to vector<16xf32>
    %28 = vector.shape_cast %27 : vector<16xf32> to vector<16x1xf32>
    %29 = arith.addf %25, %28 : vector<16x1xf32>
    %c0_22 = arith.constant 0 : index
    %c0_23 = arith.constant 0 : index
    %c0_24 = arith.constant 0 : index
    %30 = vector.load %arg7[%c0_22, %c0_23, %c0_24] : memref<1x16x1xf32, #tpu.memory_space<vmem>>, vector<1x16x1xf32>
    %31 = vector.shape_cast %30 : vector<1x16x1xf32> to vector<16x1xf32>
    %32 = vector.shape_cast %29 : vector<16x1xf32> to vector<1x16x1xf32>
    tpu.vector_store %arg7[%c0_22, %c0_23, %c0_24], %32 {strides = array<i32>} : memref<1x16x1xf32, #tpu.memory_space<vmem>>, vector<1x16x1xf32>,
    return
  }
  func.func @transform_0(%arg0: i32, %arg1: i32) -> (i32, i32, i32) {
    %c0_i32 = arith.constant 0 : i32
    %c0_i32_0 = arith.constant 0 : i32
    return %arg0, %c0_i32, %arg1 : i32, i32, i32
  }
  func.func @transform_1(%arg0: i32, %arg1: i32) -> (i32, i32) {
    %c0_i32 = arith.constant 0 : i32
    %c0_i32_0 = arith.constant 0 : i32
    %c0_i32_1 = arith.constant 0 : i32
    return %c0_i32, %c0_i32_0 : i32, i32
  }
  func.func @transform_2(%arg0: i32, %arg1: i32) -> (i32, i32) {
    %c0_i32 = arith.constant 0 : i32
    %c0_i32_0 = arith.constant 0 : i32
    %c0_i32_1 = arith.constant 0 : i32
    return %c0_i32, %c0_i32_0 : i32, i32
  }
  func.func @transform_3(%arg0: i32, %arg1: i32) -> (i32, i32, i32) {
    %c0_i32 = arith.constant 0 : i32
    %c0_i32_0 = arith.constant 0 : i32
    return %arg0, %c0_i32, %arg1 : i32, i32, i32
  }
  func.func @transform_4(%arg0: i32, %arg1: i32) -> (i32, i32, i32) {
    %c0_i32 = arith.constant 0 : i32
    %c0_i32_0 = arith.constant 0 : i32
    %c0_i32_1 = arith.constant 0 : i32
    return %arg0, %c0_i32, %c0_i32_0 : i32, i32, i32
  }
  func.func @transform_5(%arg0: i32, %arg1: i32) -> (i32, i32, i32) {
    %c0_i32 = arith.constant 0 : i32
    %c0_i32_0 = arith.constant 0 : i32
    %c0_i32_1 = arith.constant 0 : i32
    return %arg0, %c0_i32, %c0_i32_0 : i32, i32, i32
  }
}

module attributes {stable_mosaic.version = 11 : i64} {
  func.func @_bn_apply_kernel(%arg0: i32, %arg1: i32, %arg2: memref<1x16x256xf32, #tpu.memory_space<vmem>>, %arg3: memref<16x1xf32, #tpu.memory_space<vmem>>, %arg4: memref<16x1xf32, #tpu.memory_space<vmem>>, %arg5: memref<1x16x256xf32, #tpu.memory_space<vmem>>) attributes {dimension_semantics = [#tpu.dimension_semantics<parallel>, #tpu.dimension_semantics<parallel>], iteration_bounds = array<i64: 2, 1>, scalar_prefetch = 0 : i64, scratch_operands = 0 : i64, tpu.core_type = #tpu.core_type<tc>, window_params = [{transform_indices = @transform_0, window_bounds = array<i64: 1, 16, 256>}, {pipeline_mode = #tpu.pipeline_mode<synchronous>, transform_indices = @transform_1, window_bounds = array<i64: 16, 1>}, {pipeline_mode = #tpu.pipeline_mode<synchronous>, transform_indices = @transform_2, window_bounds = array<i64: 16, 1>}, {transform_indices = @transform_3, window_bounds = array<i64: 1, 16, 256>}]} {
    %c0 = arith.constant 0 : index
    %c0_0 = arith.constant 0 : index
    %c0_1 = arith.constant 0 : index
    %0 = vector.load %arg2[%c0, %c0_0, %c0_1] : memref<1x16x256xf32, #tpu.memory_space<vmem>>, vector<1x16x256xf32>
    %1 = vector.shape_cast %0 : vector<1x16x256xf32> to vector<16x256xf32>
    %c0_2 = arith.constant 0 : index
    %c0_3 = arith.constant 0 : index
    %2 = vector.load %arg3[%c0_2, %c0_3] : memref<16x1xf32, #tpu.memory_space<vmem>>, vector<16x1xf32>
    %3 = vector.broadcast %2 : vector<16x1xf32> to vector<16x256xf32>
    %4 = arith.mulf %1, %3 : vector<16x256xf32>
    %c0_4 = arith.constant 0 : index
    %c0_5 = arith.constant 0 : index
    %5 = vector.load %arg4[%c0_4, %c0_5] : memref<16x1xf32, #tpu.memory_space<vmem>>, vector<16x1xf32>
    %6 = vector.broadcast %5 : vector<16x1xf32> to vector<16x256xf32>
    %7 = arith.addf %4, %6 : vector<16x256xf32>
    %c0_6 = arith.constant 0 : index
    %c0_7 = arith.constant 0 : index
    %c0_8 = arith.constant 0 : index
    %8 = vector.load %arg5[%c0_6, %c0_7, %c0_8] : memref<1x16x256xf32, #tpu.memory_space<vmem>>, vector<1x16x256xf32>
    %9 = vector.shape_cast %8 : vector<1x16x256xf32> to vector<16x256xf32>
    %10 = vector.shape_cast %7 : vector<16x256xf32> to vector<1x16x256xf32>
    tpu.vector_store %arg5[%c0_6, %c0_7, %c0_8], %10 {strides = array<i32>} : memref<1x16x256xf32, #tpu.memory_space<vmem>>, vector<1x16x256xf32>,
    return
  }
  func.func @transform_0(%arg0: i32, %arg1: i32) -> (i32, i32, i32) {
    %c0_i32 = arith.constant 0 : i32
    %c0_i32_0 = arith.constant 0 : i32
    return %arg0, %c0_i32, %arg1 : i32, i32, i32
  }
  func.func @transform_1(%arg0: i32, %arg1: i32) -> (i32, i32) {
    %c0_i32 = arith.constant 0 : i32
    %c0_i32_0 = arith.constant 0 : i32
    %c0_i32_1 = arith.constant 0 : i32
    return %c0_i32, %c0_i32_0 : i32, i32
  }
  func.func @transform_2(%arg0: i32, %arg1: i32) -> (i32, i32) {
    %c0_i32 = arith.constant 0 : i32
    %c0_i32_0 = arith.constant 0 : i32
    %c0_i32_1 = arith.constant 0 : i32
    return %c0_i32, %c0_i32_0 : i32, i32
  }
  func.func @transform_3(%arg0: i32, %arg1: i32) -> (i32, i32, i32) {
    %c0_i32 = arith.constant 0 : i32
    %c0_i32_0 = arith.constant 0 : i32
    return %arg0, %c0_i32, %arg1 : i32, i32, i32
  }
}

module attributes {stable_mosaic.version = 11 : i64} {
  func.func @_pointwise_linear_kernel(%arg0: i32, %arg1: i32, %arg2: memref<1x16x256xf32, #tpu.memory_space<vmem>>, %arg3: memref<1x16xf32, #tpu.memory_space<vmem>>, %arg4: memref<1x1xf32, #tpu.memory_space<vmem>>, %arg5: memref<1x1x256xf32, #tpu.memory_space<vmem>>) attributes {dimension_semantics = [#tpu.dimension_semantics<parallel>, #tpu.dimension_semantics<parallel>], iteration_bounds = array<i64: 2, 1>, scalar_prefetch = 0 : i64, scratch_operands = 0 : i64, tpu.core_type = #tpu.core_type<tc>, window_params = [{transform_indices = @transform_0, window_bounds = array<i64: 1, 16, 256>}, {pipeline_mode = #tpu.pipeline_mode<synchronous>, transform_indices = @transform_1, window_bounds = array<i64: 1, 16>}, {pipeline_mode = #tpu.pipeline_mode<synchronous>, transform_indices = @transform_2, window_bounds = array<i64: 1, 1>}, {transform_indices = @transform_3, window_bounds = array<i64: 1, 1, 256>}]} {
    %c0 = arith.constant 0 : index
    %c0_0 = arith.constant 0 : index
    %c0_1 = arith.constant 0 : index
    %0 = vector.load %arg2[%c0, %c0_0, %c0_1] : memref<1x16x256xf32, #tpu.memory_space<vmem>>, vector<1x16x256xf32>
    %1 = vector.shape_cast %0 : vector<1x16x256xf32> to vector<16x256xf32>
    %c0_2 = arith.constant 0 : index
    %c0_3 = arith.constant 0 : index
    %2 = vector.load %arg3[%c0_2, %c0_3] : memref<1x16xf32, #tpu.memory_space<vmem>>, vector<1x16xf32>
    %cst = arith.constant dense<0.000000e+00> : vector<1x256xf32>
    %3 = tpu.matmul %2, %1, %cst {dimension_numbers = #tpu.dot_dimension_numbers<[1], [0], [0], [1], [0, 0, 1, 1], [], []>} : vector<1x16xf32>, vector<16x256xf32>, vector<1x256xf32> -> vector<1x256xf32>
    %c0_4 = arith.constant 0 : index
    %c0_5 = arith.constant 0 : index
    %4 = vector.load %arg4[%c0_4, %c0_5] : memref<1x1xf32, #tpu.memory_space<vmem>>, vector<1x1xf32>
    %5 = vector.broadcast %4 : vector<1x1xf32> to vector<1x256xf32>
    %6 = arith.addf %3, %5 : vector<1x256xf32>
    %c0_6 = arith.constant 0 : index
    %c0_7 = arith.constant 0 : index
    %c0_8 = arith.constant 0 : index
    %7 = vector.load %arg5[%c0_6, %c0_7, %c0_8] : memref<1x1x256xf32, #tpu.memory_space<vmem>>, vector<1x1x256xf32>
    %8 = vector.shape_cast %7 : vector<1x1x256xf32> to vector<1x256xf32>
    %9 = vector.shape_cast %6 : vector<1x256xf32> to vector<1x1x256xf32>
    tpu.vector_store %arg5[%c0_6, %c0_7, %c0_8], %9 {strides = array<i32>} : memref<1x1x256xf32, #tpu.memory_space<vmem>>, vector<1x1x256xf32>,
    return
  }
  func.func @transform_0(%arg0: i32, %arg1: i32) -> (i32, i32, i32) {
    %c0_i32 = arith.constant 0 : i32
    %c0_i32_0 = arith.constant 0 : i32
    return %arg0, %c0_i32, %arg1 : i32, i32, i32
  }
  func.func @transform_1(%arg0: i32, %arg1: i32) -> (i32, i32) {
    %c0_i32 = arith.constant 0 : i32
    %c0_i32_0 = arith.constant 0 : i32
    %c0_i32_1 = arith.constant 0 : i32
    return %c0_i32, %c0_i32_0 : i32, i32
  }
  func.func @transform_2(%arg0: i32, %arg1: i32) -> (i32, i32) {
    %c0_i32 = arith.constant 0 : i32
    %c0_i32_0 = arith.constant 0 : i32
    %c0_i32_1 = arith.constant 0 : i32
    return %c0_i32, %c0_i32_0 : i32, i32
  }
  func.func @transform_3(%arg0: i32, %arg1: i32) -> (i32, i32, i32) {
    %c0_i32 = arith.constant 0 : i32
    %c0_i32_0 = arith.constant 0 : i32
    return %arg0, %c0_i32, %arg1 : i32, i32, i32
  }
}

</mosaic_0001>

<llo_original>
// kernel: fno_forward.8
$region0: #{fno_forward.8}
  #allocation0 [shape = 'u32[]', space=smem, size = 0x4, offset = 0x4, fixed_abs, tag = 'smem constant byte address 0x4 - core index']
  #allocation1 [shape = 'u32[144,128]{1,0:T(1,128)}', space=vmem, size = 0x12000, scoped, tag = 'internal scratch']
  %s0 = inlined_call_operand.vmem [shape: f32[2,3,256], index: 0, kind: input, shape index: {}]
  %s1 = inlined_call_operand.vmem [shape: f32[16,3], index: 1, kind: input, shape index: {}]
  %s2 = inlined_call_operand.vmem [shape: f32[16,1], index: 2, kind: input, shape index: {}]
  %s3 = inlined_call_operand.vmem [shape: f32[2,16,256], index: 3, kind: output, shape index: {}]
  %s4 = sld [smem:[#allocation0]]
  $region45: #{fno_forward.8} parent=0
    _
  %s6 = ssub.s32 1, %s4
  %s7 = scalar_select 0, %s6, %s4
  loop: start=0, step=1, limit=4
  $region2: #{fno_forward.8} parent=0 // loop_pre_header
    _
  $region3: #{fno_forward.8} parent=0 // loop_header
    %s9 = sphi 0, %s13
    %p10 = scmp.ge.s32.totalorder %s9, 4
    %s16 = sphi 0, %s28
    %s17 = sphi 0, %s24
    %s18 = sphi 0, %s16
    %s19 = sphi 0, %s17
    %s20 = sphi 0, %s18
    %s21 = sphi 0, %s19
    %s33 = sphi 0, %s35
    %s36 = sphi 0, %s33
    %s37 = sphi 0, %s36
    %s53 = sphi 0, %s37
    %s57 = sphi 0, %s57
    %s59 = sphi 0, %s57
    %s60 = sphi 0, %s59
    %s74 = sphi 0, %s60
    %s78 = sphi 0, %s78
    %s80 = sphi 0, %s78
    %s81 = sphi 0, %s80
    %s95 = sphi 0, %s81
    %s103 = sphi 0, %s105
    %s106 = sphi 0, %s103
    %s107 = sphi 0, %s106
    %s123 = sphi 0, %s107
  $region4: #{fno_forward.8} parent=0 // loop_header_branch
    %12 = sbr.rel (%p10) target = $region8
  $region5: #{fno_forward.8} parent=0 // loop_body
    %s14 = ssub.s32 %s9, 1
    %s15 = ssub.s32 %s9, 2
    %s22 = sadd.s32 1, %s17
    %p23 = scmp.ge.s32.totalorder %s22, 1
    %s24 = scalar_select %p23, 0, %s22
    %s25 = sadd.s32 1, %s16
    %s26 = scalar_select %p23, %s25, %s16
    %p27 = scmp.ge.s32.totalorder %s26, 2
    %s28 = scalar_select %p27, 0, %s26
    %s29 = ssub.s32 %s16, %s28
    %s30 = ssub.s32 %s17, %s24
    %s31 = sor.u32 %s29, %s30
    %p32 = scmp.eq.s32.totalorder %s31, 0
    %s34 = sadd.s32 %s33, 1
    %s35 = scalar_select %p32, %s33, %s34
    %p38 = pneg %p32
    %p39 = scmp.eq.s32.totalorder %s9, 1
    %p40 = por %p38, %p39
    %p41 = scmp.ne.s32.totalorder %s33, %s36
    %p42 = scmp.eq.s32.totalorder %s9, 0
    %p43 = por %p41, %p42
    %p44 = scmp.ne.s32.totalorder %s33, %s36
    %p45 = scmp.eq.s32.totalorder %s14, 1
    %p46 = por %p44, %p45
    %p47 = scmp.ne.s32.totalorder %s36, %s37
    %p48 = scmp.eq.s32.totalorder %s14, 0
    %p49 = por %p47, %p48
    %p50 = scmp.ne.s32.totalorder %s36, %s37
    %p51 = scmp.eq.s32.totalorder %s15, 1
    %p52 = por %p50, %p51
    %p54 = scmp.ne.s32.totalorder %s37, %s53
    %p55 = scmp.eq.s32.totalorder %s15, 0
    %p56 = por %p54, %p55
    %s58 = sadd.s32 %s57, 1
    %p61 = scmp.eq.s32.totalorder %s9, 1
    %p62 = scmp.ne.s32.totalorder %s57, %s59
    %p63 = scmp.eq.s32.totalorder %s9, 0
    %p64 = por %p62, %p63
    %p65 = scmp.ne.s32.totalorder %s57, %s59
    %p66 = scmp.eq.s32.totalorder %s14, 1
    %p67 = por %p65, %p66
    %p68 = scmp.ne.s32.totalorder %s59, %s60
    %p69 = scmp.eq.s32.totalorder %s14, 0
    %p70 = por %p68, %p69
    %p71 = scmp.ne.s32.totalorder %s59, %s60
    %p72 = scmp.eq.s32.totalorder %s15, 1
    %p73 = por %p71, %p72
    %p75 = scmp.ne.s32.totalorder %s60, %s74
    %p76 = scmp.eq.s32.totalorder %s15, 0
    %p77 = por %p75, %p76
    %s79 = sadd.s32 %s78, 1
    %p82 = scmp.eq.s32.totalorder %s9, 1
    %p83 = scmp.ne.s32.totalorder %s78, %s80
    %p84 = scmp.eq.s32.totalorder %s9, 0
    %p85 = por %p83, %p84
    %p86 = scmp.ne.s32.totalorder %s78, %s80
    %p87 = scmp.eq.s32.totalorder %s14, 1
    %p88 = por %p86, %p87
    %p89 = scmp.ne.s32.totalorder %s80, %s81
    %p90 = scmp.eq.s32.totalorder %s14, 0
    %p91 = por %p89, %p90
    %p92 = scmp.ne.s32.totalorder %s80, %s81
    %p93 = scmp.eq.s32.totalorder %s15, 1
    %p94 = por %p92, %p93
    %p96 = scmp.ne.s32.totalorder %s81, %s95
    %p97 = scmp.eq.s32.totalorder %s15, 0
    %p98 = por %p96, %p97
    %s99 = ssub.s32 %s16, %s28
    %s100 = ssub.s32 %s17, %s24
    %s101 = sor.u32 %s99, %s100
    %p102 = scmp.eq.s32.totalorder %s101, 0
    %s104 = sadd.s32 %s103, 1
    %s105 = scalar_select %p102, %s103, %s104
    %p108 = pneg %p102
    %p109 = scmp.eq.s32.totalorder %s9, 1
    %p110 = por %p108, %p109
    %p111 = scmp.ne.s32.totalorder %s103, %s106
    %p112 = scmp.eq.s32.totalorder %s9, 0
    %p113 = por %p111, %p112
    %p114 = scmp.ne.s32.totalorder %s103, %s106
    %p115 = scmp.eq.s32.totalorder %s14, 1
    %p116 = por %p114, %p115
    %p117 = scmp.ne.s32.totalorder %s106, %s107
    %p118 = scmp.eq.s32.totalorder %s14, 0
    %p119 = por %p117, %p118
    %p120 = scmp.ne.s32.totalorder %s106, %s107
    %p121 = scmp.eq.s32.totalorder %s15, 1
    %p122 = por %p120, %p121
    %p124 = scmp.ne.s32.totalorder %s107, %s123
    %p125 = scmp.eq.s32.totalorder %s15, 0
    %p126 = por %p124, %p125
    %p127 = scmp.le.s32.totalorder 1, %s9
    %p128 = scmp.lt.s32.totalorder %s9, 3
    %p129 = pnand %p127, %p128
    %p130 = pneg %p129
    // Predicated region
    $region9: #{fno_forward.8} parent=5 // pred_check
      _
    $region10: #{fno_forward.8} parent=5 // pred_check_branch
      %132 = sbr.rel (%p129) target = $region12
    $region11: #{fno_forward.8} parent=5 // pred_region
      %s133 = ssub.s32 %s9, 1
      // Predicated region
      $region13: #{fno_forward.8} parent=11 // pred_check
        %p134 = pneg %p70
      $region14: #{fno_forward.8} parent=11 // pred_check_branch
        %136 = sbr.rel (%p134) target = $region16
      $region15: #{fno_forward.8} parent=11 // pred_region
        _
      $region16: #{fno_forward.8} parent=11 // pred_fallthru
        _
      // Predicated region
      $region17: #{fno_forward.8} parent=11 // pred_check
        %p137 = pneg %p91
      $region18: #{fno_forward.8} parent=11 // pred_check_branch
        %139 = sbr.rel (%p137) target = $region20
      $region19: #{fno_forward.8} parent=11 // pred_region
        _
      $region20: #{fno_forward.8} parent=11 // pred_fallthru
        _
    $region12: #{fno_forward.8} parent=5 // pred_fallthru
      _
    %p140 = scmp.lt.s32.totalorder %s9, 2
    // Predicated region
    $region21: #{fno_forward.8} parent=5 // pred_check
      %p141 = pneg %p140
    $region22: #{fno_forward.8} parent=5 // pred_check_branch
      %143 = sbr.rel (%p141) target = $region24
    $region23: #{fno_forward.8} parent=5 // pred_region
      // Predicated region
      $region25: #{fno_forward.8} parent=23 // pred_check
        %p144 = pneg %p43
      $region26: #{fno_forward.8} parent=23 // pred_check_branch
        %146 = sbr.rel (%p144) target = $region28
      $region27: #{fno_forward.8} parent=23 // pred_region
        %s147 = smul.u32 2, %s17
        %p148 = scmp.lt.s32.totalorder %s16, 1
        %s149 = scalar_select %p148, %s16, 1
        %p150 = scmp.lt.s32.totalorder %s147, 1
        %s151 = scalar_select %p150, %s147, 1
        %s152 = smul.addr %s149, 2
        %s153 = sadd.s32 %s151, %s152
        %s154 = smul.addr %s153, 4
        %s155 = scalar_lea.vmem %s0, %s154
        %s156 = smul.u32 2, %s17
      $region28: #{fno_forward.8} parent=23 // pred_fallthru
        _
    $region24: #{fno_forward.8} parent=5 // pred_fallthru
      _
    %p157 = scmp.le.s32.totalorder 1, %s9
    %p158 = scmp.lt.s32.totalorder %s9, 3
    %p159 = pnand %p157, %p158
    %p160 = pneg %p159
    // Predicated region
    $region29: #{fno_forward.8} parent=5 // pred_check
      _
    $region30: #{fno_forward.8} parent=5 // pred_check_branch
      %162 = sbr.rel (%p159) target = $region32
    $region31: #{fno_forward.8} parent=5 // pred_region
      %s163 = ssub.s32 %s9, 1
      %s164 = smul.u32 2, %s19
      %p165 = scmp.lt.s32.totalorder %s18, 1
      %s166 = scalar_select %p165, %s18, 1
      %p167 = scmp.lt.s32.totalorder %s164, 1
      %s168 = scalar_select %p167, %s164, 1
      %s169 = smul.addr %s166, 2
      %s170 = sadd.s32 %s168, %s169
      %s171 = smul.addr %s170, 4
      %s172 = scalar_lea.vmem %s0, %s171
      %p173 = pneg %p49
      %p174 = pneg %p46
      %p175 = pneg %p70
      %p176 = pneg %p67
      %p177 = pneg %p91
      %p178 = pneg %p88
      %p179 = pneg %p119
      %p180 = pneg %p116
      %s181 = smul.u32 2, %s19
      %p182 = scmp.lt.s32.totalorder %s18, 1
      %s183 = scalar_select %p182, %s18, 1
      %p184 = scmp.lt.s32.totalorder %s181, 1
      %s185 = scalar_select %p184, %s181, 1
      %s186 = smul.addr %s183, 4
      %s187 = sadd.s32 %s185, %s186
      %s188 = smul.addr %s187, 8
      %s189 = scalar_lea.vmem %s3, %s188
      %s190 = smul.u32 2, %s19
      %p191 = scmp.lt.s32.totalorder %s18, 1
      %s192 = scalar_select %p191, %s18, 1
      %p193 = scmp.lt.s32.totalorder %s190, 1
      %s194 = scalar_select %p193, %s190, 1
      %s195 = smul.addr %s192, 2
      %s196 = sadd.s32 %s194, %s195
      %s197 = smul.addr %s196, 4
      %s198 = scalar_lea.vmem %s0, %s197
      %s199 = smul.u32 2, %s19
      %s200 = smul.u32 2, %s19
      %p201 = scmp.lt.s32.totalorder %s18, 1
      %s202 = scalar_select %p201, %s18, 1
      %p203 = scmp.lt.s32.totalorder %s200, 1
      %s204 = scalar_select %p203, %s200, 1
      %s205 = smul.addr %s202, 4
      %s206 = sadd.s32 %s204, %s205
      %s207 = smul.addr %s206, 8
      %s208 = scalar_lea.vmem %s3, %s207
      %s209 = smul.u32 2, %s19
      %v210 = vld [vmem:[%s198] sm:$0x77]
      %v211 = vld [vmem:[%s1] sm:$0xff]
      %v212 = vld [vmem:[%s1 + $0x8] sm:$0xff]
      %214 = vset.pattern.permute.xlu0 0
      %215 = vperm.xlu0 %214, %v211
      %v216 = vpop.permute.xlu0 %215
      %219 = vset.pattern.permute.xlu0 0
      %220 = vperm.xlu0 %219, %v212
      %v221 = vpop.permute.xlu0 %220
      %v224 = vlaneseq
      %v225 = vshrl.u32 %v224, 7
      %v226 = vsub.s32 0, %v225
      %v227 = vrot.slane %v210, %v226
      %v228 = vlaneseq
      %v229 = vshrl.u32 %v228, 7
      %v230 = vsub.s32 4, %v229
      %v231 = vrot.slane %v210, %v230
      %v234 = vlaneseq
      %v235 = vshrl.u32 %v234, 7
      %v236 = vsub.s32 0, %v235
      %v237 = vrot.slane %v227, %v236
      %v238 = vlaneseq
      %v239 = vshrl.u32 %v238, 7
      %v240 = vsub.s32 0, %v239
      %v241 = vrot.slane %v231, %v240
      %v242 = vmul.f32 %v216, %v237
      %v243 = vmul.f32 %v216, %v241
      %v244 = vmul.f32 %v221, %v237
      %v245 = vmul.f32 %v221, %v241
      %v246 = vadd.f32 %v242, 0.0
      %v247 = vadd.f32 %v243, 0.0
      %v248 = vadd.f32 %v244, 0.0
      %v249 = vadd.f32 %v245, 0.0
      %250 = vset.pattern.permute.xlu0 1
      %251 = vperm.xlu0 %250, %v211
      %v252 = vpop.permute.xlu0 %251
      %254 = vset.pattern.permute.xlu0 1
      %255 = vperm.xlu0 %254, %v212
      %v256 = vpop.permute.xlu0 %255
      %v258 = vlaneseq
      %v259 = vshrl.u32 %v258, 7
      %v260 = vsub.s32 1, %v259
      %v261 = vrot.slane %v210, %v260
      %v262 = vlaneseq
      %v263 = vshrl.u32 %v262, 7
      %v264 = vsub.s32 5, %v263
      %v265 = vrot.slane %v210, %v264
      %v268 = vlaneseq
      %v269 = vshrl.u32 %v268, 7
      %v270 = vsub.s32 1, %v269
      %v271 = vrot.slane %v261, %v270
      %v272 = vlaneseq
      %v273 = vshrl.u32 %v272, 7
      %v274 = vsub.s32 1, %v273
      %v275 = vrot.slane %v265, %v274
      %v276 = vmul.f32 %v252, %v271
      %v277 = vmul.f32 %v252, %v275
      %v278 = vmul.f32 %v256, %v271
      %v279 = vmul.f32 %v256, %v275
      %v280 = vadd.f32 %v246, %v276
      %v281 = vadd.f32 %v247, %v277
      %v282 = vadd.f32 %v248, %v278
      %v283 = vadd.f32 %v249, %v279
      %284 = vset.pattern.permute.xlu0 2
      %285 = vperm.xlu0 %284, %v211
      %v286 = vpop.permute.xlu0 %285
      %288 = vset.pattern.permute.xlu0 2
      %289 = vperm.xlu0 %288, %v212
      %v290 = vpop.permute.xlu0 %289
      %v292 = vlaneseq
      %v293 = vshrl.u32 %v292, 7
      %v294 = vsub.s32 2, %v293
      %v295 = vrot.slane %v210, %v294
      %v296 = vlaneseq
      %v297 = vshrl.u32 %v296, 7
      %v298 = vsub.s32 6, %v297
      %v299 = vrot.slane %v210, %v298
      %v302 = vlaneseq
      %v303 = vshrl.u32 %v302, 7
      %v304 = vsub.s32 2, %v303
      %v305 = vrot.slane %v295, %v304
      %v306 = vlaneseq
      %v307 = vshrl.u32 %v306, 7
      %v308 = vsub.s32 2, %v307
      %v309 = vrot.slane %v299, %v308
      %v310 = vmul.f32 %v286, %v305
      %v311 = vmul.f32 %v286, %v309
      %v312 = vmul.f32 %v290, %v305
      %v313 = vmul.f32 %v290, %v309
      %v314 = vadd.f32 %v280, %v310
      %v315 = vadd.f32 %v281, %v311
      %v316 = vadd.f32 %v282, %v312
      %v317 = vadd.f32 %v283, %v313
      %v318 = vld [vmem:[%s2] sm:$0xff]
      %v319 = vld [vmem:[%s2 + $0x8] sm:$0xff]
      %321 = vset.pattern.permute.xlu0 0
      %322 = vperm.xlu0 %321, %v318
      %v323 = vpop.permute.xlu0 %322
      %326 = vset.pattern.permute.xlu0 0
      %327 = vperm.xlu0 %326, %v319
      %v328 = vpop.permute.xlu0 %327
      %v330 = vadd.f32 %v314, %v323
      %v331 = vadd.f32 %v315, %v323
      %v332 = vadd.f32 %v316, %v328
      %v333 = vadd.f32 %v317, %v328
      %334 = vst [vmem:[%s208] sm:$0xff] %v330
      %335 = vst [vmem:[%s208 + $0x8] sm:$0xff] %v331
      %336 = vst [vmem:[%s208 + $0x10] sm:$0xff] %v332
      %337 = vst [vmem:[%s208 + $0x18] sm:$0xff] %v333
      %s338 = smul.u32 2, %s19
      %p339 = scmp.lt.s32.totalorder %s18, 1
      %s340 = scalar_select %p339, %s18, 1
      %p341 = scmp.lt.s32.totalorder %s338, 1
      %s342 = scalar_select %p341, %s338, 1
      %s343 = smul.addr %s340, 4
      %s344 = sadd.s32 %s342, %s343
      %s345 = smul.addr %s344, 8
      %s346 = scalar_lea.vmem %s3, %s345
      // Predicated region
      $region33: #{fno_forward.8} parent=31 // pred_check
        %p347 = pneg %p116
      $region34: #{fno_forward.8} parent=31 // pred_check_branch
        %349 = sbr.rel (%p347) target = $region36
      $region35: #{fno_forward.8} parent=31 // pred_region
        %s350 = smul.u32 2, %s19
      $region36: #{fno_forward.8} parent=31 // pred_fallthru
        _
    $region32: #{fno_forward.8} parent=5 // pred_fallthru
      _
    %p351 = scmp.le.s32.totalorder 2, %s9
    // Predicated region
    $region37: #{fno_forward.8} parent=5 // pred_check
      %p352 = pneg %p351
    $region38: #{fno_forward.8} parent=5 // pred_check_branch
      %354 = sbr.rel (%p352) target = $region40
    $region39: #{fno_forward.8} parent=5 // pred_region
      %s355 = ssub.s32 %s9, 2
      // Predicated region
      $region41: #{fno_forward.8} parent=39 // pred_check
        %p356 = pneg %p122
      $region42: #{fno_forward.8} parent=39 // pred_check_branch
        %358 = sbr.rel (%p356) target = $region44
      $region43: #{fno_forward.8} parent=39 // pred_region
        %s359 = smul.u32 2, %s21
        %p360 = scmp.lt.s32.totalorder %s20, 1
        %s361 = scalar_select %p360, %s20, 1
        %p362 = scmp.lt.s32.totalorder %s359, 1
        %s363 = scalar_select %p362, %s359, 1
        %s364 = smul.addr %s361, 4
        %s365 = sadd.s32 %s363, %s364
        %s366 = smul.addr %s365, 8
        %s367 = scalar_lea.vmem %s3, %s366
      $region44: #{fno_forward.8} parent=39 // pred_fallthru
        _
    $region40: #{fno_forward.8} parent=5 // pred_fallthru
      _
  $region6: #{fno_forward.8} parent=0 // loop_footer
    %s13 = sadd.s32 1, %s9
  $region7: #{fno_forward.8} parent=0 // loop_footer_branch
    %8 = sbr.rel target = $region3
  $region8: #{fno_forward.8} parent=0 // loop_exit
    _

// kernel: fno_forward.9
$region0: #{fno_forward.9}
  #allocation0 [shape = 'u32[]', space=smem, size = 0x4, offset = 0x4, fixed_abs, tag = 'smem constant byte address 0x4 - core index']
  #allocation1 [shape = 'u32[144,128]{1,0:T(1,128)}', space=vmem, size = 0x12000, scoped, tag = 'internal scratch']
  %s0 = inlined_call_operand.vmem [shape: f32[2,16,128], index: 0, kind: input, shape index: {}]
  %s1 = inlined_call_operand.vmem [shape: f32[2,16,128], index: 1, kind: input, shape index: {}]
  %s2 = inlined_call_operand.vmem [shape: f32[16,16,128], index: 2, kind: input, shape index: {}]
  %s3 = inlined_call_operand.vmem [shape: f32[16,16,128], index: 3, kind: input, shape index: {}]
  %s4 = inlined_call_operand.vmem [shape: f32[2,16,128], index: 4, kind: output, shape index: {0}]
  %s5 = inlined_call_operand.vmem [shape: f32[2,16,128], index: 5, kind: output, shape index: {1}]
  %6 = xla_tuple %s4, %s5
  %s7 = sld [smem:[#allocation0]]
  $region57: #{fno_forward.9} parent=0
    _
  %s9 = ssub.s32 1, %s7
  %s10 = scalar_select 0, %s9, %s7
  loop: start=0, step=1, limit=4
  $region2: #{fno_forward.9} parent=0 // loop_pre_header
    _
  $region3: #{fno_forward.9} parent=0 // loop_header
    %s12 = sphi 0, %s16
    %p13 = scmp.ge.s32.totalorder %s12, 4
    %s22 = sphi 0, %s24
    %s25 = sphi 0, %s22
    %s26 = sphi 0, %s25
    %s42 = sphi 0, %s26
    %s48 = sphi 0, %s50
    %s51 = sphi 0, %s48
    %s52 = sphi 0, %s51
    %s68 = sphi 0, %s52
    %s72 = sphi 0, %s72
    %s74 = sphi 0, %s72
    %s75 = sphi 0, %s74
    %s89 = sphi 0, %s75
    %s93 = sphi 0, %s93
    %s95 = sphi 0, %s93
    %s96 = sphi 0, %s95
    %s110 = sphi 0, %s96
    %s116 = sphi 0, %s118
    %s119 = sphi 0, %s116
    %s120 = sphi 0, %s119
    %s136 = sphi 0, %s120
    %s142 = sphi 0, %s144
    %s145 = sphi 0, %s142
    %s146 = sphi 0, %s145
    %s162 = sphi 0, %s146
  $region4: #{fno_forward.9} parent=0 // loop_header_branch
    %15 = sbr.rel (%p13) target = $region8
  $region5: #{fno_forward.9} parent=0 // loop_body
    %s17 = ssub.s32 %s12, 1
    %s18 = ssub.s32 %s12, 2
    %s19 = sadd.s32 %s12, 1
    %s20 = ssub.s32 %s12, %s19
    %p21 = scmp.eq.s32.totalorder %s20, 0
    %s23 = sadd.s32 %s22, 1
    %s24 = scalar_select %p21, %s22, %s23
    %p27 = pneg %p21
    %p28 = scmp.eq.s32.totalorder %s12, 1
    %p29 = por %p27, %p28
    %p30 = scmp.ne.s32.totalorder %s22, %s25
    %p31 = scmp.eq.s32.totalorder %s12, 0
    %p32 = por %p30, %p31
    %p33 = scmp.ne.s32.totalorder %s22, %s25
    %p34 = scmp.eq.s32.totalorder %s17, 1
    %p35 = por %p33, %p34
    %p36 = scmp.ne.s32.totalorder %s25, %s26
    %p37 = scmp.eq.s32.totalorder %s17, 0
    %p38 = por %p36, %p37
    %p39 = scmp.ne.s32.totalorder %s25, %s26
    %p40 = scmp.eq.s32.totalorder %s18, 1
    %p41 = por %p39, %p40
    %p43 = scmp.ne.s32.totalorder %s26, %s42
    %p44 = scmp.eq.s32.totalorder %s18, 0
    %p45 = por %p43, %p44
    %s46 = ssub.s32 %s12, %s19
    %p47 = scmp.eq.s32.totalorder %s46, 0
    %s49 = sadd.s32 %s48, 1
    %s50 = scalar_select %p47, %s48, %s49
    %p53 = pneg %p47
    %p54 = scmp.eq.s32.totalorder %s12, 1
    %p55 = por %p53, %p54
    %p56 = scmp.ne.s32.totalorder %s48, %s51
    %p57 = scmp.eq.s32.totalorder %s12, 0
    %p58 = por %p56, %p57
    %p59 = scmp.ne.s32.totalorder %s48, %s51
    %p60 = scmp.eq.s32.totalorder %s17, 1
    %p61 = por %p59, %p60
    %p62 = scmp.ne.s32.totalorder %s51, %s52
    %p63 = scmp.eq.s32.totalorder %s17, 0
    %p64 = por %p62, %p63
    %p65 = scmp.ne.s32.totalorder %s51, %s52
    %p66 = scmp.eq.s32.totalorder %s18, 1
    %p67 = por %p65, %p66
    %p69 = scmp.ne.s32.totalorder %s52, %s68
    %p70 = scmp.eq.s32.totalorder %s18, 0
    %p71 = por %p69, %p70
    %s73 = sadd.s32 %s72, 1
    %p76 = scmp.eq.s32.totalorder %s12, 1
    %p77 = scmp.ne.s32.totalorder %s72, %s74
    %p78 = scmp.eq.s32.totalorder %s12, 0
    %p79 = por %p77, %p78
    %p80 = scmp.ne.s32.totalorder %s72, %s74
    %p81 = scmp.eq.s32.totalorder %s17, 1
    %p82 = por %p80, %p81
    %p83 = scmp.ne.s32.totalorder %s74, %s75
    %p84 = scmp.eq.s32.totalorder %s17, 0
    %p85 = por %p83, %p84
    %p86 = scmp.ne.s32.totalorder %s74, %s75
    %p87 = scmp.eq.s32.totalorder %s18, 1
    %p88 = por %p86, %p87
    %p90 = scmp.ne.s32.totalorder %s75, %s89
    %p91 = scmp.eq.s32.totalorder %s18, 0
    %p92 = por %p90, %p91
    %s94 = sadd.s32 %s93, 1
    %p97 = scmp.eq.s32.totalorder %s12, 1
    %p98 = scmp.ne.s32.totalorder %s93, %s95
    %p99 = scmp.eq.s32.totalorder %s12, 0
    %p100 = por %p98, %p99
    %p101 = scmp.ne.s32.totalorder %s93, %s95
    %p102 = scmp.eq.s32.totalorder %s17, 1
    %p103 = por %p101, %p102
    %p104 = scmp.ne.s32.totalorder %s95, %s96
    %p105 = scmp.eq.s32.totalorder %s17, 0
    %p106 = por %p104, %p105
    %p107 = scmp.ne.s32.totalorder %s95, %s96
    %p108 = scmp.eq.s32.totalorder %s18, 1
    %p109 = por %p107, %p108
    %p111 = scmp.ne.s32.totalorder %s96, %s110
    %p112 = scmp.eq.s32.totalorder %s18, 0
    %p113 = por %p111, %p112
    %s114 = ssub.s32 %s12, %s19
    %p115 = scmp.eq.s32.totalorder %s114, 0
    %s117 = sadd.s32 %s116, 1
    %s118 = scalar_select %p115, %s116, %s117
    %p121 = pneg %p115
    %p122 = scmp.eq.s32.totalorder %s12, 1
    %p123 = por %p121, %p122
    %p124 = scmp.ne.s32.totalorder %s116, %s119
    %p125 = scmp.eq.s32.totalorder %s12, 0
    %p126 = por %p124, %p125
    %p127 = scmp.ne.s32.totalorder %s116, %s119
    %p128 = scmp.eq.s32.totalorder %s17, 1
    %p129 = por %p127, %p128
    %p130 = scmp.ne.s32.totalorder %s119, %s120
    %p131 = scmp.eq.s32.totalorder %s17, 0
    %p132 = por %p130, %p131
    %p133 = scmp.ne.s32.totalorder %s119, %s120
    %p134 = scmp.eq.s32.totalorder %s18, 1
    %p135 = por %p133, %p134
    %p137 = scmp.ne.s32.totalorder %s120, %s136
    %p138 = scmp.eq.s32.totalorder %s18, 0
    %p139 = por %p137, %p138
    %s140 = ssub.s32 %s12, %s19
    %p141 = scmp.eq.s32.totalorder %s140, 0
    %s143 = sadd.s32 %s142, 1
    %s144 = scalar_select %p141, %s142, %s143
    %p147 = pneg %p141
    %p148 = scmp.eq.s32.totalorder %s12, 1
    %p149 = por %p147, %p148
    %p150 = scmp.ne.s32.totalorder %s142, %s145
    %p151 = scmp.eq.s32.totalorder %s12, 0
    %p152 = por %p150, %p151
    %p153 = scmp.ne.s32.totalorder %s142, %s145
    %p154 = scmp.eq.s32.totalorder %s17, 1
    %p155 = por %p153, %p154
    %p156 = scmp.ne.s32.totalorder %s145, %s146
    %p157 = scmp.eq.s32.totalorder %s17, 0
    %p158 = por %p156, %p157
    %p159 = scmp.ne.s32.totalorder %s145, %s146
    %p160 = scmp.eq.s32.totalorder %s18, 1
    %p161 = por %p159, %p160
    %p163 = scmp.ne.s32.totalorder %s146, %s162
    %p164 = scmp.eq.s32.totalorder %s18, 0
    %p165 = por %p163, %p164
    %p166 = scmp.le.s32.totalorder 1, %s12
    %p167 = scmp.lt.s32.totalorder %s12, 3
    %p168 = pnand %p166, %p167
    %p169 = pneg %p168
    // Predicated region
    $region9: #{fno_forward.9} parent=5 // pred_check
      _
    $region10: #{fno_forward.9} parent=5 // pred_check_branch
      %171 = sbr.rel (%p168) target = $region12
    $region11: #{fno_forward.9} parent=5 // pred_region
      %s172 = ssub.s32 %s12, 1
      // Predicated region
      $region13: #{fno_forward.9} parent=11 // pred_check
        %p173 = pneg %p85
      $region14: #{fno_forward.9} parent=11 // pred_check_branch
        %175 = sbr.rel (%p173) target = $region16
      $region15: #{fno_forward.9} parent=11 // pred_region
        _
      $region16: #{fno_forward.9} parent=11 // pred_fallthru
        _
      // Predicated region
      $region17: #{fno_forward.9} parent=11 // pred_check
        %p176 = pneg %p106
      $region18: #{fno_forward.9} parent=11 // pred_check_branch
        %178 = sbr.rel (%p176) target = $region20
      $region19: #{fno_forward.9} parent=11 // pred_region
        _
      $region20: #{fno_forward.9} parent=11 // pred_fallthru
        _
    $region12: #{fno_forward.9} parent=5 // pred_fallthru
      _
    %p179 = scmp.lt.s32.totalorder %s12, 2
    // Predicated region
    $region21: #{fno_forward.9} parent=5 // pred_check
      %p180 = pneg %p179
    $region22: #{fno_forward.9} parent=5 // pred_check_branch
      %182 = sbr.rel (%p180) target = $region24
    $region23: #{fno_forward.9} parent=5 // pred_region
      // Predicated region
      $region25: #{fno_forward.9} parent=23 // pred_check
        %p183 = pneg %p32
      $region26: #{fno_forward.9} parent=23 // pred_check_branch
        %185 = sbr.rel (%p183) target = $region28
      $region27: #{fno_forward.9} parent=23 // pred_region
        %p186 = scmp.lt.s32.totalorder %s12, 1
        %s187 = scalar_select %p186, %s12, 1
        %s188 = smul.addr %s187, 2
        %s189 = smul.addr %s188, 8
        %s190 = scalar_lea.vmem %s0, %s189
      $region28: #{fno_forward.9} parent=23 // pred_fallthru
        _
      // Predicated region
      $region29: #{fno_forward.9} parent=23 // pred_check
        %p191 = pneg %p58
      $region30: #{fno_forward.9} parent=23 // pred_check_branch
        %193 = sbr.rel (%p191) target = $region32
      $region31: #{fno_forward.9} parent=23 // pred_region
        %p194 = scmp.lt.s32.totalorder %s12, 1
        %s195 = scalar_select %p194, %s12, 1
        %s196 = smul.addr %s195, 2
        %s197 = smul.addr %s196, 8
        %s198 = scalar_lea.vmem %s1, %s197
      $region32: #{fno_forward.9} parent=23 // pred_fallthru
        _
    $region24: #{fno_forward.9} parent=5 // pred_fallthru
      _
    %p199 = scmp.le.s32.totalorder 1, %s12
    %p200 = scmp.lt.s32.totalorder %s12, 3
    %p201 = pnand %p199, %p200
    %p202 = pneg %p201
    // Predicated region
    $region33: #{fno_forward.9} parent=5 // pred_check
      _
    $region34: #{fno_forward.9} parent=5 // pred_check_branch
      %204 = sbr.rel (%p201) target = $region36
    $region35: #{fno_forward.9} parent=5 // pred_region
      %s205 = ssub.s32 %s12, 1
      %p206 = scmp.lt.s32.totalorder %s17, 1
      %s207 = scalar_select %p206, %s17, 1
      %s208 = smul.addr %s207, 2
      %s209 = smul.addr %s208, 8
      %s210 = scalar_lea.vmem %s0, %s209
      %p211 = pneg %p38
      %p212 = pneg %p35
      %p213 = scmp.lt.s32.totalorder %s17, 1
      %s214 = scalar_select %p213, %s17, 1
      %s215 = smul.addr %s214, 2
      %s216 = smul.addr %s215, 8
      %s217 = scalar_lea.vmem %s1, %s216
      %p218 = pneg %p64
      %p219 = pneg %p61
      %p220 = pneg %p85
      %p221 = pneg %p82
      %p222 = pneg %p106
      %p223 = pneg %p103
      %p224 = pneg %p132
      %p225 = pneg %p129
      %p226 = scmp.lt.s32.totalorder %s17, 1
      %s227 = scalar_select %p226, %s17, 1
      %s228 = smul.addr %s227, 2
      %s229 = smul.addr %s228, 8
      %s230 = scalar_lea.vmem %s4, %s229
      %p231 = pneg %p158
      %p232 = pneg %p155
      %p233 = scmp.lt.s32.totalorder %s17, 1
      %s234 = scalar_select %p233, %s17, 1
      %s235 = smul.addr %s234, 2
      %s236 = smul.addr %s235, 8
      %s237 = scalar_lea.vmem %s5, %s236
      %p238 = scmp.lt.s32.totalorder %s17, 1
      %s239 = scalar_select %p238, %s17, 1
      %s240 = smul.addr %s239, 2
      %s241 = smul.addr %s240, 8
      %s242 = scalar_lea.vmem %s0, %s241
      %p243 = scmp.lt.s32.totalorder %s17, 1
      %s244 = scalar_select %p243, %s17, 1
      %s245 = smul.addr %s244, 2
      %s246 = smul.addr %s245, 8
      %s247 = scalar_lea.vmem %s1, %s246
      %p248 = scmp.lt.s32.totalorder %s17, 1
      %s249 = scalar_select %p248, %s17, 1
      %s250 = smul.addr %s249, 2
      %s251 = smul.addr %s250, 8
      %s252 = scalar_lea.vmem %s4, %s251
      %p253 = scmp.lt.s32.totalorder %s17, 1
      %s254 = scalar_select %p253, %s17, 1
      %s255 = smul.addr %s254, 2
      %s256 = smul.addr %s255, 8
      %s257 = scalar_lea.vmem %s5, %s256
      %v258 = vld [vmem:[%s242] sm:$0xff]
      %v259 = vld [vmem:[%s242 + $0x8] sm:$0xff]
      %v260 = vld [vmem:[%s247] sm:$0xff]
      %v261 = vld [vmem:[%s247 + $0x8] sm:$0xff]
      %v262 = vld [vmem:[%s2] sm:$0xff]
      %v263 = vld [vmem:[%s2 + $0x8] sm:$0xff]
      %v264 = vld [vmem:[%s3] sm:$0xff]
      %v265 = vld [vmem:[%s3 + $0x8] sm:$0xff]
      %v266 = vlaneseq
      %v267 = vshrl.u32 %v266, 7
      %v268 = vsub.s32 0, %v267
      %v269 = vrot.slane %v258, %v268
      %v270 = vmul.f32 %v269, %v262
      %v271 = vmul.f32 %v269, %v263
      %v272 = vlaneseq
      %v273 = vshrl.u32 %v272, 7
      %v274 = vsub.s32 0, %v273
      %v275 = vrot.slane %v260, %v274
      %v276 = vmul.f32 %v275, %v264
      %v277 = vmul.f32 %v275, %v265
      %v278 = vsub.f32 %v270, %v276
      %v279 = vsub.f32 %v271, %v277
      %v280 = vadd.f32 %v278, 0.0
      %v281 = vadd.f32 %v279, 0.0
      %v282 = vmul.f32 %v269, %v264
      %v283 = vmul.f32 %v269, %v265
      %v284 = vmul.f32 %v275, %v262
      %v285 = vmul.f32 %v275, %v263
      %v286 = vadd.f32 %v282, %v284
      %v287 = vadd.f32 %v283, %v285
      %v288 = vadd.f32 %v286, 0.0
      %v289 = vadd.f32 %v287, 0.0
      %s290 = scalar_lea.vmem %s2, 16
      %v291 = vld [vmem:[%s290] sm:$0xff]
      %v292 = vld [vmem:[%s290 + $0x8] sm:$0xff]
      %s293 = scalar_lea.vmem %s3, 16
      %v294 = vld [vmem:[%s293] sm:$0xff]
      %v295 = vld [vmem:[%s293 + $0x8] sm:$0xff]
      %v296 = vlaneseq
      %v297 = vshrl.u32 %v296, 7
      %v298 = vsub.s32 1, %v297
      %v299 = vrot.slane %v258, %v298
      %v300 = vmul.f32 %v299, %v291
      %v301 = vmul.f32 %v299, %v292
      %v302 = vlaneseq
      %v303 = vshrl.u32 %v302, 7
      %v304 = vsub.s32 1, %v303
      %v305 = vrot.slane %v260, %v304
      %v306 = vmul.f32 %v305, %v294
      %v307 = vmul.f32 %v305, %v295
      %v308 = vsub.f32 %v300, %v306
      %v309 = vsub.f32 %v301, %v307
      %v310 = vadd.f32 %v280, %v308
      %v311 = vadd.f32 %v281, %v309
      %v312 = vmul.f32 %v299, %v294
      %v313 = vmul.f32 %v299, %v295
      %v314 = vmul.f32 %v305, %v291
      %v315 = vmul.f32 %v305, %v292
      %v316 = vadd.f32 %v312, %v314
      %v317 = vadd.f32 %v313, %v315
      %v318 = vadd.f32 %v288, %v316
      %v319 = vadd.f32 %v289, %v317
      %s320 = scalar_lea.vmem %s2, 32
      %v321 = vld [vmem:[%s320] sm:$0xff]
      %v322 = vld [vmem:[%s320 + $0x8] sm:$0xff]
      %s323 = scalar_lea.vmem %s3, 32
      %v324 = vld [vmem:[%s323] sm:$0xff]
      %v325 = vld [vmem:[%s323 + $0x8] sm:$0xff]
      %v326 = vlaneseq
      %v327 = vshrl.u32 %v326, 7
      %v328 = vsub.s32 2, %v327
      %v329 = vrot.slane %v258, %v328
      %v330 = vmul.f32 %v329, %v321
      %v331 = vmul.f32 %v329, %v322
      %v332 = vlaneseq
      %v333 = vshrl.u32 %v332, 7
      %v334 = vsub.s32 2, %v333
      %v335 = vrot.slane %v260, %v334
      %v336 = vmul.f32 %v335, %v324
      %v337 = vmul.f32 %v335, %v325
      %v338 = vsub.f32 %v330, %v336
      %v339 = vsub.f32 %v331, %v337
      %v340 = vadd.f32 %v310, %v338
      %v341 = vadd.f32 %v311, %v339
      %v342 = vmul.f32 %v329, %v324
      %v343 = vmul.f32 %v329, %v325
      %v344 = vmul.f32 %v335, %v321
      %v345 = vmul.f32 %v335, %v322
      %v346 = vadd.f32 %v342, %v344
      %v347 = vadd.f32 %v343, %v345
      %v348 = vadd.f32 %v318, %v346
      %v349 = vadd.f32 %v319, %v347
      %s350 = scalar_lea.vmem %s2, 48
      %v351 = vld [vmem:[%s350] sm:$0xff]
      %v352 = vld [vmem:[%s350 + $0x8] sm:$0xff]
      %s353 = scalar_lea.vmem %s3, 48
      %v354 = vld [vmem:[%s353] sm:$0xff]
      %v355 = vld [vmem:[%s353 + $0x8] sm:$0xff]
      %v356 = vlaneseq
      %v357 = vshrl.u32 %v356, 7
      %v358 = vsub.s32 3, %v357
      %v359 = vrot.slane %v258, %v358
      %v360 = vmul.f32 %v359, %v351
      %v361 = vmul.f32 %v359, %v352
      %v362 = vlaneseq
      %v363 = vshrl.u32 %v362, 7
      %v364 = vsub.s32 3, %v363
      %v365 = vrot.slane %v260, %v364
      %v366 = vmul.f32 %v365, %v354
      %v367 = vmul.f32 %v365, %v355
      %v368 = vsub.f32 %v360, %v366
      %v369 = vsub.f32 %v361, %v367
      %v370 = vadd.f32 %v340, %v368
      %v371 = vadd.f32 %v341, %v369
      %v372 = vmul.f32 %v359, %v354
      %v373 = vmul.f32 %v359, %v355
      %v374 = vmul.f32 %v365, %v351
      %v375 = vmul.f32 %v365, %v352
      %v376 = vadd.f32 %v372, %v374
      %v377 = vadd.f32 %v373, %v375
      %v378 = vadd.f32 %v348, %v376
      %v379 = vadd.f32 %v349, %v377
      %s380 = scalar_lea.vmem %s2, 64
      %v381 = vld [vmem:[%s380] sm:$0xff]
      %v382 = vld [vmem:[%s380 + $0x8] sm:$0xff]
      %s383 = scalar_lea.vmem %s3, 64
      %v384 = vld [vmem:[%s383] sm:$0xff]
      %v385 = vld [vmem:[%s383 + $0x8] sm:$0xff]
      %v386 = vlaneseq
      %v387 = vshrl.u32 %v386, 7
      %v388 = vsub.s32 4, %v387
      %v389 = vrot.slane %v258, %v388
      %v390 = vmul.f32 %v389, %v381
      %v391 = vmul.f32 %v389, %v382
      %v392 = vlaneseq
      %v393 = vshrl.u32 %v392, 7
      %v394 = vsub.s32 4, %v393
      %v395 = vrot.slane %v260, %v394
      %v396 = vmul.f32 %v395, %v384
      %v397 = vmul.f32 %v395, %v385
      %v398 = vsub.f32 %v390, %v396
      %v399 = vsub.f32 %v391, %v397
      %v400 = vadd.f32 %v370, %v398
      %v401 = vadd.f32 %v371, %v399
      %v402 = vmul.f32 %v389, %v384
      %v403 = vmul.f32 %v389, %v385
      %v404 = vmul.f32 %v395, %v381
      %v405 = vmul.f32 %v395, %v382
      %v406 = vadd.f32 %v402, %v404
      %v407 = vadd.f32 %v403, %v405
      %v408 = vadd.f32 %v378, %v406
      %v409 = vadd.f32 %v379, %v407
      %s410 = scalar_lea.vmem %s2, 80
      %v411 = vld [vmem:[%s410] sm:$0xff]
      %v412 = vld [vmem:[%s410 + $0x8] sm:$0xff]
      %s413 = scalar_lea.vmem %s3, 80
      %v414 = vld [vmem:[%s413] sm:$0xff]
      %v415 = vld [vmem:[%s413 + $0x8] sm:$0xff]
      %v416 = vlaneseq
      %v417 = vshrl.u32 %v416, 7
      %v418 = vsub.s32 5, %v417
      %v419 = vrot.slane %v258, %v418
      %v420 = vmul.f32 %v419, %v411
      %v421 = vmul.f32 %v419, %v412
      %v422 = vlaneseq
      %v423 = vshrl.u32 %v422, 7
      %v424 = vsub.s32 5, %v423
      %v425 = vrot.slane %v260, %v424
      %v426 = vmul.f32 %v425, %v414
      %v427 = vmul.f32 %v425, %v415
      %v428 = vsub.f32 %v420, %v426
      %v429 = vsub.f32 %v421, %v427
      %v430 = vadd.f32 %v400, %v428
      %v431 = vadd.f32 %v401, %v429
      %v432 = vmul.f32 %v419, %v414
      %v433 = vmul.f32 %v419, %v415
      %v434 = vmul.f32 %v425, %v411
      %v435 = vmul.f32 %v425, %v412
      %v436 = vadd.f32 %v432, %v434
      %v437 = vadd.f32 %v433, %v435
      %v438 = vadd.f32 %v408, %v436
      %v439 = vadd.f32 %v409, %v437
      %s440 = scalar_lea.vmem %s2, 96
      %v441 = vld [vmem:[%s440] sm:$0xff]
      %v442 = vld [vmem:[%s440 + $0x8] sm:$0xff]
      %s443 = scalar_lea.vmem %s3, 96
      %v444 = vld [vmem:[%s443] sm:$0xff]
      %v445 = vld [vmem:[%s443 + $0x8] sm:$0xff]
      %v446 = vlaneseq
      %v447 = vshrl.u32 %v446, 7
      %v448 = vsub.s32 6, %v447
      %v449 = vrot.slane %v258, %v448
      %v450 = vmul.f32 %v449, %v441
      %v451 = vmul.f32 %v449, %v442
      %v452 = vlaneseq
      %v453 = vshrl.u32 %v452, 7
      %v454 = vsub.s32 6, %v453
      %v455 = vrot.slane %v260, %v454
      %v456 = vmul.f32 %v455, %v444
      %v457 = vmul.f32 %v455, %v445
      %v458 = vsub.f32 %v450, %v456
      %v459 = vsub.f32 %v451, %v457
      %v460 = vadd.f32 %v430, %v458
      %v461 = vadd.f32 %v431, %v459
      %v462 = vmul.f32 %v449, %v444
      %v463 = vmul.f32 %v449, %v445
      %v464 = vmul.f32 %v455, %v441
      %v465 = vmul.f32 %v455, %v442
      %v466 = vadd.f32 %v462, %v464
      %v467 = vadd.f32 %v463, %v465
      %v468 = vadd.f32 %v438, %v466
      %v469 = vadd.f32 %v439, %v467
      %s470 = scalar_lea.vmem %s2, 112
      %v471 = vld [vmem:[%s470] sm:$0xff]
      %v472 = vld [vmem:[%s470 + $0x8] sm:$0xff]
      %s473 = scalar_lea.vmem %s3, 112
      %v474 = vld [vmem:[%s473] sm:$0xff]
      %v475 = vld [vmem:[%s473 + $0x8] sm:$0xff]
      %v476 = vlaneseq
      %v477 = vshrl.u32 %v476, 7
      %v478 = vsub.s32 7, %v477
      %v479 = vrot.slane %v258, %v478
      %v480 = vmul.f32 %v479, %v471
      %v481 = vmul.f32 %v479, %v472
      %v482 = vlaneseq
      %v483 = vshrl.u32 %v482, 7
      %v484 = vsub.s32 7, %v483
      %v485 = vrot.slane %v260, %v484
      %v486 = vmul.f32 %v485, %v474
      %v487 = vmul.f32 %v485, %v475
      %v488 = vsub.f32 %v480, %v486
      %v489 = vsub.f32 %v481, %v487
      %v490 = vadd.f32 %v460, %v488
      %v491 = vadd.f32 %v461, %v489
      %v492 = vmul.f32 %v479, %v474
      %v493 = vmul.f32 %v479, %v475
      %v494 = vmul.f32 %v485, %v471
      %v495 = vmul.f32 %v485, %v472
      %v496 = vadd.f32 %v492, %v494
      %v497 = vadd.f32 %v493, %v495
      %v498 = vadd.f32 %v468, %v496
      %v499 = vadd.f32 %v469, %v497
      %s500 = scalar_lea.vmem %s2, 128
      %v501 = vld [vmem:[%s500] sm:$0xff]
      %v502 = vld [vmem:[%s500 + $0x8] sm:$0xff]
      %s503 = scalar_lea.vmem %s3, 128
      %v504 = vld [vmem:[%s503] sm:$0xff]
      %v505 = vld [vmem:[%s503 + $0x8] sm:$0xff]
      %v506 = vlaneseq
      %v507 = vshrl.u32 %v506, 7
      %v508 = vsub.s32 0, %v507
      %v509 = vrot.slane %v259, %v508
      %v510 = vmul.f32 %v509, %v501
      %v511 = vmul.f32 %v509, %v502
      %v512 = vlaneseq
      %v513 = vshrl.u32 %v512, 7
      %v514 = vsub.s32 0, %v513
      %v515 = vrot.slane %v261, %v514
      %v516 = vmul.f32 %v515, %v504
      %v517 = vmul.f32 %v515, %v505
      %v518 = vsub.f32 %v510, %v516
      %v519 = vsub.f32 %v511, %v517
      %v520 = vadd.f32 %v490, %v518
      %v521 = vadd.f32 %v491, %v519
      %v522 = vmul.f32 %v509, %v504
      %v523 = vmul.f32 %v509, %v505
      %v524 = vmul.f32 %v515, %v501
      %v525 = vmul.f32 %v515, %v502
      %v526 = vadd.f32 %v522, %v524
      %v527 = vadd.f32 %v523, %v525
      %v528 = vadd.f32 %v498, %v526
      %v529 = vadd.f32 %v499, %v527
      %s530 = scalar_lea.vmem %s2, 144
      %v531 = vld [vmem:[%s530] sm:$0xff]
      %v532 = vld [vmem:[%s530 + $0x8] sm:$0xff]
      %s533 = scalar_lea.vmem %s3, 144
      %v534 = vld [vmem:[%s533] sm:$0xff]
      %v535 = vld [vmem:[%s533 + $0x8] sm:$0xff]
      %v536 = vlaneseq
      %v537 = vshrl.u32 %v536, 7
      %v538 = vsub.s32 1, %v537
      %v539 = vrot.slane %v259, %v538
      %v540 = vmul.f32 %v539, %v531
      %v541 = vmul.f32 %v539, %v532
      %v542 = vlaneseq
      %v543 = vshrl.u32 %v542, 7
      %v544 = vsub.s32 1, %v543
      %v545 = vrot.slane %v261, %v544
      %v546 = vmul.f32 %v545, %v534
      %v547 = vmul.f32 %v545, %v535
      %v548 = vsub.f32 %v540, %v546
      %v549 = vsub.f32 %v541, %v547
      %v550 = vadd.f32 %v520, %v548
      %v551 = vadd.f32 %v521, %v549
      %v552 = vmul.f32 %v539, %v534
      %v553 = vmul.f32 %v539, %v535
      %v554 = vmul.f32 %v545, %v531
      %v555 = vmul.f32 %v545, %v532
      %v556 = vadd.f32 %v552, %v554
      %v557 = vadd.f32 %v553, %v555
      %v558 = vadd.f32 %v528, %v556
      %v559 = vadd.f32 %v529, %v557
      %s560 = scalar_lea.vmem %s2, 160
      %v561 = vld [vmem:[%s560] sm:$0xff]
      %v562 = vld [vmem:[%s560 + $0x8] sm:$0xff]
      %s563 = scalar_lea.vmem %s3, 160
      %v564 = vld [vmem:[%s563] sm:$0xff]
      %v565 = vld [vmem:[%s563 + $0x8] sm:$0xff]
      %v566 = vlaneseq
      %v567 = vshrl.u32 %v566, 7
      %v568 = vsub.s32 2, %v567
      %v569 = vrot.slane %v259, %v568
      %v570 = vmul.f32 %v569, %v561
      %v571 = vmul.f32 %v569, %v562
      %v572 = vlaneseq
      %v573 = vshrl.u32 %v572, 7
      %v574 = vsub.s32 2, %v573
      %v575 = vrot.slane %v261, %v574
      %v576 = vmul.f32 %v575, %v564
      %v577 = vmul.f32 %v575, %v565
      %v578 = vsub.f32 %v570, %v576
      %v579 = vsub.f32 %v571, %v577
      %v580 = vadd.f32 %v550, %v578
      %v581 = vadd.f32 %v551, %v579
      %v582 = vmul.f32 %v569, %v564
      %v583 = vmul.f32 %v569, %v565
      %v584 = vmul.f32 %v575, %v561
      %v585 = vmul.f32 %v575, %v562
      %v586 = vadd.f32 %v582, %v584
      %v587 = vadd.f32 %v583, %v585
      %v588 = vadd.f32 %v558, %v586
      %v589 = vadd.f32 %v559, %v587
      %s590 = scalar_lea.vmem %s2, 176
      %v591 = vld [vmem:[%s590] sm:$0xff]
      %v592 = vld [vmem:[%s590 + $0x8] sm:$0xff]
      %s593 = scalar_lea.vmem %s3, 176
      %v594 = vld [vmem:[%s593] sm:$0xff]
      %v595 = vld [vmem:[%s593 + $0x8] sm:$0xff]
      %v596 = vlaneseq
      %v597 = vshrl.u32 %v596, 7
      %v598 = vsub.s32 3, %v597
      %v599 = vrot.slane %v259, %v598
      %v600 = vmul.f32 %v599, %v591
      %v601 = vmul.f32 %v599, %v592
      %v602 = vlaneseq
      %v603 = vshrl.u32 %v602, 7
      %v604 = vsub.s32 3, %v603
      %v605 = vrot.slane %v261, %v604
      %v606 = vmul.f32 %v605, %v594
      %v607 = vmul.f32 %v605, %v595
      %v608 = vsub.f32 %v600, %v606
      %v609 = vsub.f32 %v601, %v607
      %v610 = vadd.f32 %v580, %v608
      %v611 = vadd.f32 %v581, %v609
      %v612 = vmul.f32 %v599, %v594
      %v613 = vmul.f32 %v599, %v595
      %v614 = vmul.f32 %v605, %v591
      %v615 = vmul.f32 %v605, %v592
      %v616 = vadd.f32 %v612, %v614
      %v617 = vadd.f32 %v613, %v615
      %v618 = vadd.f32 %v588, %v616
      %v619 = vadd.f32 %v589, %v617
      %s620 = scalar_lea.vmem %s2, 192
      %v621 = vld [vmem:[%s620] sm:$0xff]
      %v622 = vld [vmem:[%s620 + $0x8] sm:$0xff]
      %s623 = scalar_lea.vmem %s3, 192
      %v624 = vld [vmem:[%s623] sm:$0xff]
      %v625 = vld [vmem:[%s623 + $0x8] sm:$0xff]
      %v626 = vlaneseq
      %v627 = vshrl.u32 %v626, 7
      %v628 = vsub.s32 4, %v627
      %v629 = vrot.slane %v259, %v628
      %v630 = vmul.f32 %v629, %v621
      %v631 = vmul.f32 %v629, %v622
      %v632 = vlaneseq
      %v633 = vshrl.u32 %v632, 7
      %v634 = vsub.s32 4, %v633
      %v635 = vrot.slane %v261, %v634
      %v636 = vmul.f32 %v635, %v624
      %v637 = vmul.f32 %v635, %v625
      %v638 = vsub.f32 %v630, %v636
      %v639 = vsub.f32 %v631, %v637
      %v640 = vadd.f32 %v610, %v638
      %v641 = vadd.f32 %v611, %v639
      %v642 = vmul.f32 %v629, %v624
      %v643 = vmul.f32 %v629, %v625
      %v644 = vmul.f32 %v635, %v621
      %v645 = vmul.f32 %v635, %v622
      %v646 = vadd.f32 %v642, %v644
      %v647 = vadd.f32 %v643, %v645
      %v648 = vadd.f32 %v618, %v646
      %v649 = vadd.f32 %v619, %v647
      %s650 = scalar_lea.vmem %s2, 208
      %v651 = vld [vmem:[%s650] sm:$0xff]
      %v652 = vld [vmem:[%s650 + $0x8] sm:$0xff]
      %s653 = scalar_lea.vmem %s3, 208
      %v654 = vld [vmem:[%s653] sm:$0xff]
      %v655 = vld [vmem:[%s653 + $0x8] sm:$0xff]
      %v656 = vlaneseq
      %v657 = vshrl.u32 %v656, 7
      %v658 = vsub.s32 5, %v657
      %v659 = vrot.slane %v259, %v658
      %v660 = vmul.f32 %v659, %v651
      %v661 = vmul.f32 %v659, %v652
      %v662 = vlaneseq
      %v663 = vshrl.u32 %v662, 7
      %v664 = vsub.s32 5, %v663
      %v665 = vrot.slane %v261, %v664
      %v666 = vmul.f32 %v665, %v654
      %v667 = vmul.f32 %v665, %v655
      %v668 = vsub.f32 %v660, %v666
      %v669 = vsub.f32 %v661, %v667
      %v670 = vadd.f32 %v640, %v668
      %v671 = vadd.f32 %v641, %v669
      %v672 = vmul.f32 %v659, %v654
      %v673 = vmul.f32 %v659, %v655
      %v674 = vmul.f32 %v665, %v651
      %v675 = vmul.f32 %v665, %v652
      %v676 = vadd.f32 %v672, %v674
      %v677 = vadd.f32 %v673, %v675
      %v678 = vadd.f32 %v648, %v676
      %v679 = vadd.f32 %v649, %v677
      %s680 = scalar_lea.vmem %s2, 224
      %v681 = vld [vmem:[%s680] sm:$0xff]
      %v682 = vld [vmem:[%s680 + $0x8] sm:$0xff]
      %s683 = scalar_lea.vmem %s3, 224
      %v684 = vld [vmem:[%s683] sm:$0xff]
      %v685 = vld [vmem:[%s683 + $0x8] sm:$0xff]
      %v686 = vlaneseq
      %v687 = vshrl.u32 %v686, 7
      %v688 = vsub.s32 6, %v687
      %v689 = vrot.slane %v259, %v688
      %v690 = vmul.f32 %v689, %v681
      %v691 = vmul.f32 %v689, %v682
      %v692 = vlaneseq
      %v693 = vshrl.u32 %v692, 7
      %v694 = vsub.s32 6, %v693
      %v695 = vrot.slane %v261, %v694
      %v696 = vmul.f32 %v695, %v684
      %v697 = vmul.f32 %v695, %v685
      %v698 = vsub.f32 %v690, %v696
      %v699 = vsub.f32 %v691, %v697
      %v700 = vadd.f32 %v670, %v698
      %v701 = vadd.f32 %v671, %v699
      %v702 = vmul.f32 %v689, %v684
      %v703 = vmul.f32 %v689, %v685
      %v704 = vmul.f32 %v695, %v681
      %v705 = vmul.f32 %v695, %v682
      %v706 = vadd.f32 %v702, %v704
      %v707 = vadd.f32 %v703, %v705
      %v708 = vadd.f32 %v678, %v706
      %v709 = vadd.f32 %v679, %v707
      %s710 = scalar_lea.vmem %s2, 240
      %v711 = vld [vmem:[%s710] sm:$0xff]
      %v712 = vld [vmem:[%s710 + $0x8] sm:$0xff]
      %s713 = scalar_lea.vmem %s3, 240
      %v714 = vld [vmem:[%s713] sm:$0xff]
      %v715 = vld [vmem:[%s713 + $0x8] sm:$0xff]
      %v716 = vlaneseq
      %v717 = vshrl.u32 %v716, 7
      %v718 = vsub.s32 7, %v717
      %v719 = vrot.slane %v259, %v718
      %v720 = vmul.f32 %v719, %v711
      %v721 = vmul.f32 %v719, %v712
      %v722 = vlaneseq
      %v723 = vshrl.u32 %v722, 7
      %v724 = vsub.s32 7, %v723
      %v725 = vrot.slane %v261, %v724
      %v726 = vmul.f32 %v725, %v714
      %v727 = vmul.f32 %v725, %v715
      %v728 = vsub.f32 %v720, %v726
      %v729 = vsub.f32 %v721, %v727
      %v730 = vadd.f32 %v700, %v728
      %v731 = vadd.f32 %v701, %v729
      %v732 = vmul.f32 %v719, %v714
      %v733 = vmul.f32 %v719, %v715
      %v734 = vmul.f32 %v725, %v711
      %v735 = vmul.f32 %v725, %v712
      %v736 = vadd.f32 %v732, %v734
      %v737 = vadd.f32 %v733, %v735
      %v738 = vadd.f32 %v708, %v736
      %v739 = vadd.f32 %v709, %v737
      %740 = vst [vmem:[%s252] sm:$0xff] %v730
      %741 = vst [vmem:[%s252 + $0x8] sm:$0xff] %v731
      %742 = vst [vmem:[%s257] sm:$0xff] %v738
      %743 = vst [vmem:[%s257 + $0x8] sm:$0xff] %v739
      %p744 = scmp.lt.s32.totalorder %s17, 1
      %s745 = scalar_select %p744, %s17, 1
      %s746 = smul.addr %s745, 2
      %s747 = smul.addr %s746, 8
      %s748 = scalar_lea.vmem %s4, %s747
      %p749 = scmp.lt.s32.totalorder %s17, 1
      %s750 = scalar_select %p749, %s17, 1
      %s751 = smul.addr %s750, 2
      %s752 = smul.addr %s751, 8
      %s753 = scalar_lea.vmem %s5, %s752
      // Predicated region
      $region37: #{fno_forward.9} parent=35 // pred_check
        %p754 = pneg %p129
      $region38: #{fno_forward.9} parent=35 // pred_check_branch
        %756 = sbr.rel (%p754) target = $region40
      $region39: #{fno_forward.9} parent=35 // pred_region
        _
      $region40: #{fno_forward.9} parent=35 // pred_fallthru
        _
      // Predicated region
      $region41: #{fno_forward.9} parent=35 // pred_check
        %p757 = pneg %p155
      $region42: #{fno_forward.9} parent=35 // pred_check_branch
        %759 = sbr.rel (%p757) target = $region44
      $region43: #{fno_forward.9} parent=35 // pred_region
        _
      $region44: #{fno_forward.9} parent=35 // pred_fallthru
        _
    $region36: #{fno_forward.9} parent=5 // pred_fallthru
      _
    %p760 = scmp.le.s32.totalorder 2, %s12
    // Predicated region
    $region45: #{fno_forward.9} parent=5 // pred_check
      %p761 = pneg %p760
    $region46: #{fno_forward.9} parent=5 // pred_check_branch
      %763 = sbr.rel (%p761) target = $region48
    $region47: #{fno_forward.9} parent=5 // pred_region
      %s764 = ssub.s32 %s12, 2
      // Predicated region
      $region49: #{fno_forward.9} parent=47 // pred_check
        %p765 = pneg %p135
      $region50: #{fno_forward.9} parent=47 // pred_check_branch
        %767 = sbr.rel (%p765) target = $region52
      $region51: #{fno_forward.9} parent=47 // pred_region
        %p768 = scmp.lt.s32.totalorder %s18, 1
        %s769 = scalar_select %p768, %s18, 1
        %s770 = smul.addr %s769, 2
        %s771 = smul.addr %s770, 8
        %s772 = scalar_lea.vmem %s4, %s771
      $region52: #{fno_forward.9} parent=47 // pred_fallthru
        _
      // Predicated region
      $region53: #{fno_forward.9} parent=47 // pred_check
        %p773 = pneg %p161
      $region54: #{fno_forward.9} parent=47 // pred_check_branch
        %775 = sbr.rel (%p773) target = $region56
      $region55: #{fno_forward.9} parent=47 // pred_region
        %p776 = scmp.lt.s32.totalorder %s18, 1
        %s777 = scalar_select %p776, %s18, 1
        %s778 = smul.addr %s777, 2
        %s779 = smul.addr %s778, 8
        %s780 = scalar_lea.vmem %s5, %s779
      $region56: #{fno_forward.9} parent=47 // pred_fallthru
        _
    $region48: #{fno_forward.9} parent=5 // pred_fallthru
      _
  $region6: #{fno_forward.9} parent=0 // loop_footer
    %s16 = sadd.s32 1, %s12
  $region7: #{fno_forward.9} parent=0 // loop_footer_branch
    %11 = sbr.rel target = $region3
  $region8: #{fno_forward.9} parent=0 // loop_exit
    _

// kernel: reverse.4
$region0: #{reverse.4}
  #allocation0 [shape = 's32[1]{0}', space=sflag, size = 0x4, scoped, tag = 'scoped memory for reverse.4']
  %s0 = inlined_call_operand.vmem [shape: f32[2,16,16,7], index: 0, kind: input, shape index: {}]
  %s1 = inlined_call_operand.vmem [shape: f32[2,16,16,7], index: 1, kind: output, shape index: {}]
  %s2 = scalar_lea.vmem %s0, 96
  %v3 = vld [vmem:[%s2] sm:$0xff]
  %4 = vst [vmem:[%s1] sm:$0xff] %v3
  %s5 = scalar_lea.vmem %s0, 208
  %v6 = vld [vmem:[%s5] sm:$0xff]
  %s7 = scalar_lea.vmem %s1, 112
  %8 = vst [vmem:[%s7] sm:$0xff] %v6
  %s9 = scalar_lea.vmem %s0, 80
  %v10 = vld [vmem:[%s9] sm:$0xff]
  %s11 = scalar_lea.vmem %s1, 16
  %12 = vst [vmem:[%s11] sm:$0xff] %v10
  %s13 = scalar_lea.vmem %s0, 192
  %v14 = vld [vmem:[%s13] sm:$0xff]
  %s15 = scalar_lea.vmem %s1, 128
  %16 = vst [vmem:[%s15] sm:$0xff] %v14
  %s17 = scalar_lea.vmem %s0, 64
  %v18 = vld [vmem:[%s17] sm:$0xff]
  %s19 = scalar_lea.vmem %s1, 32
  %20 = vst [vmem:[%s19] sm:$0xff] %v18
  %s21 = scalar_lea.vmem %s0, 176
  %v22 = vld [vmem:[%s21] sm:$0xff]
  %s23 = scalar_lea.vmem %s1, 144
  %24 = vst [vmem:[%s23] sm:$0xff] %v22
  %s25 = scalar_lea.vmem %s0, 48
  %v26 = vld [vmem:[%s25] sm:$0xff]
  %s27 = scalar_lea.vmem %s1, 48
  %28 = vst [vmem:[%s27] sm:$0xff] %v26
  %s29 = scalar_lea.vmem %s0, 160
  %v30 = vld [vmem:[%s29] sm:$0xff]
  %s31 = scalar_lea.vmem %s1, 160
  %32 = vst [vmem:[%s31] sm:$0xff] %v30
  %s33 = scalar_lea.vmem %s0, 32
  %v34 = vld [vmem:[%s33] sm:$0xff]
  %s35 = scalar_lea.vmem %s1, 64
  %36 = vst [vmem:[%s35] sm:$0xff] %v34
  %s37 = scalar_lea.vmem %s0, 144
  %v38 = vld [vmem:[%s37] sm:$0xff]
  %s39 = scalar_lea.vmem %s1, 176
  %40 = vst [vmem:[%s39] sm:$0xff] %v38
  %s41 = scalar_lea.vmem %s0, 16
  %v42 = vld [vmem:[%s41] sm:$0xff]
  %s43 = scalar_lea.vmem %s1, 80
  %44 = vst [vmem:[%s43] sm:$0xff] %v42
  %s45 = scalar_lea.vmem %s0, 128
  %v46 = vld [vmem:[%s45] sm:$0xff]
  %s47 = scalar_lea.vmem %s1, 192
  %48 = vst [vmem:[%s47] sm:$0xff] %v46
  %v49 = vld [vmem:[%s0] sm:$0xff]
  %s50 = scalar_lea.vmem %s1, 96
  %51 = vst [vmem:[%s50] sm:$0xff] %v49
  %s52 = scalar_lea.vmem %s0, 112
  %v53 = vld [vmem:[%s52] sm:$0xff]
  %s54 = scalar_lea.vmem %s1, 208
  %55 = vst [vmem:[%s54] sm:$0xff] %v53
  %s56 = scalar_lea.vmem %s0, 104
  %v57 = vld [vmem:[%s56] sm:$0xff]
  %s58 = scalar_lea.vmem %s1, 8
  %59 = vst [vmem:[%s58] sm:$0xff] %v57
  %s60 = scalar_lea.vmem %s0, 216
  %v61 = vld [vmem:[%s60] sm:$0xff]
  %s62 = scalar_lea.vmem %s1, 120
  %63 = vst [vmem:[%s62] sm:$0xff] %v61
  %s64 = scalar_lea.vmem %s0, 88
  %v65 = vld [vmem:[%s64] sm:$0xff]
  %s66 = scalar_lea.vmem %s1, 24
  %67 = vst [vmem:[%s66] sm:$0xff] %v65
  %s68 = scalar_lea.vmem %s0, 200
  %v69 = vld [vmem:[%s68] sm:$0xff]
  %s70 = scalar_lea.vmem %s1, 136
  %71 = vst [vmem:[%s70] sm:$0xff] %v69
  %s72 = scalar_lea.vmem %s0, 72
  %v73 = vld [vmem:[%s72] sm:$0xff]
  %s74 = scalar_lea.vmem %s1, 40
  %75 = vst [vmem:[%s74] sm:$0xff] %v73
  %s76 = scalar_lea.vmem %s0, 184
  %v77 = vld [vmem:[%s76] sm:$0xff]
  %s78 = scalar_lea.vmem %s1, 152
  %79 = vst [vmem:[%s78] sm:$0xff] %v77
  %s80 = scalar_lea.vmem %s0, 56
  %v81 = vld [vmem:[%s80] sm:$0xff]
  %s82 = scalar_lea.vmem %s1, 56
  %83 = vst [vmem:[%s82] sm:$0xff] %v81
  %s84 = scalar_lea.vmem %s0, 168
  %v85 = vld [vmem:[%s84] sm:$0xff]
  %s86 = scalar_lea.vmem %s1, 168
  %87 = vst [vmem:[%s86] sm:$0xff] %v85
  %s88 = scalar_lea.vmem %s0, 40
  %v89 = vld [vmem:[%s88] sm:$0xff]
  %s90 = scalar_lea.vmem %s1, 72
  %91 = vst [vmem:[%s90] sm:$0xff] %v89
  %s92 = scalar_lea.vmem %s0, 152
  %v93 = vld [vmem:[%s92] sm:$0xff]
  %s94 = scalar_lea.vmem %s1, 184
  %95 = vst [vmem:[%s94] sm:$0xff] %v93
  %s96 = scalar_lea.vmem %s0, 24
  %v97 = vld [vmem:[%s96] sm:$0xff]
  %s98 = scalar_lea.vmem %s1, 88
  %99 = vst [vmem:[%s98] sm:$0xff] %v97
  %s100 = scalar_lea.vmem %s0, 136
  %v101 = vld [vmem:[%s100] sm:$0xff]
  %s102 = scalar_lea.vmem %s1, 200
  %103 = vst [vmem:[%s102] sm:$0xff] %v101
  %s104 = scalar_lea.vmem %s0, 8
  %v105 = vld [vmem:[%s104] sm:$0xff]
  %s106 = scalar_lea.vmem %s1, 104
  %107 = vst [vmem:[%s106] sm:$0xff] %v105
  %s108 = scalar_lea.vmem %s0, 120
  %v109 = vld [vmem:[%s108] sm:$0xff]
  %s110 = scalar_lea.vmem %s1, 216
  %111 = vst [vmem:[%s110] sm:$0xff] %v109

// kernel: fno_forward.10
$region0: #{fno_forward.10}
  #allocation0 [shape = 'u32[]', space=smem, size = 0x4, offset = 0x4, fixed_abs, tag = 'smem constant byte address 0x4 - core index']
  #allocation1 [shape = 'u32[144,128]{1,0:T(1,128)}', space=vmem, size = 0x12000, scoped, tag = 'internal scratch']
  %s0 = inlined_call_operand.vmem [shape: f32[2,16,256], index: 0, kind: input, shape index: {}]
  %s1 = inlined_call_operand.vmem [shape: f32[16,16], index: 1, kind: input, shape index: {}]
  %s2 = inlined_call_operand.vmem [shape: f32[16,1], index: 2, kind: input, shape index: {}]
  %s3 = inlined_call_operand.vmem [shape: f32[2,16,256], index: 3, kind: output, shape index: {0}]
  %s4 = inlined_call_operand.vmem [shape: f32[2,16,1], index: 4, kind: output, shape index: {1}]
  %s5 = inlined_call_operand.vmem [shape: f32[2,16,1], index: 5, kind: output, shape index: {2}]
  %6 = xla_tuple %s3, %s4, %s5
  %s7 = sld [smem:[#allocation0]]
  $region65: #{fno_forward.10} parent=0
    _
  %s9 = ssub.s32 1, %s7
  %s10 = scalar_select 0, %s9, %s7
  loop: start=0, step=1, limit=4
  $region2: #{fno_forward.10} parent=0 // loop_pre_header
    _
  $region3: #{fno_forward.10} parent=0 // loop_header
    %s12 = sphi 0, %s16
    %p13 = scmp.ge.s32.totalorder %s12, 4
    %s19 = sphi 0, %s31
    %s20 = sphi 0, %s27
    %s21 = sphi 0, %s19
    %s22 = sphi 0, %s20
    %s23 = sphi 0, %s21
    %s24 = sphi 0, %s22
    %s36 = sphi 0, %s38
    %s39 = sphi 0, %s36
    %s40 = sphi 0, %s39
    %s56 = sphi 0, %s40
    %s60 = sphi 0, %s60
    %s62 = sphi 0, %s60
    %s63 = sphi 0, %s62
    %s77 = sphi 0, %s63
    %s81 = sphi 0, %s81
    %s83 = sphi 0, %s81
    %s84 = sphi 0, %s83
    %s98 = sphi 0, %s84
    %s106 = sphi 0, %s108
    %s109 = sphi 0, %s106
    %s110 = sphi 0, %s109
    %s126 = sphi 0, %s110
    %s132 = sphi 0, %s134
    %s135 = sphi 0, %s132
    %s136 = sphi 0, %s135
    %s152 = sphi 0, %s136
    %s158 = sphi 0, %s160
    %s161 = sphi 0, %s158
    %s162 = sphi 0, %s161
    %s178 = sphi 0, %s162
  $region4: #{fno_forward.10} parent=0 // loop_header_branch
    %15 = sbr.rel (%p13) target = $region8
  $region5: #{fno_forward.10} parent=0 // loop_body
    %s17 = ssub.s32 %s12, 1
    %s18 = ssub.s32 %s12, 2
    %s25 = sadd.s32 1, %s20
    %p26 = scmp.ge.s32.totalorder %s25, 1
    %s27 = scalar_select %p26, 0, %s25
    %s28 = sadd.s32 1, %s19
    %s29 = scalar_select %p26, %s28, %s19
    %p30 = scmp.ge.s32.totalorder %s29, 2
    %s31 = scalar_select %p30, 0, %s29
    %s32 = ssub.s32 %s19, %s31
    %s33 = ssub.s32 %s20, %s27
    %s34 = sor.u32 %s32, %s33
    %p35 = scmp.eq.s32.totalorder %s34, 0
    %s37 = sadd.s32 %s36, 1
    %s38 = scalar_select %p35, %s36, %s37
    %p41 = pneg %p35
    %p42 = scmp.eq.s32.totalorder %s12, 1
    %p43 = por %p41, %p42
    %p44 = scmp.ne.s32.totalorder %s36, %s39
    %p45 = scmp.eq.s32.totalorder %s12, 0
    %p46 = por %p44, %p45
    %p47 = scmp.ne.s32.totalorder %s36, %s39
    %p48 = scmp.eq.s32.totalorder %s17, 1
    %p49 = por %p47, %p48
    %p50 = scmp.ne.s32.totalorder %s39, %s40
    %p51 = scmp.eq.s32.totalorder %s17, 0
    %p52 = por %p50, %p51
    %p53 = scmp.ne.s32.totalorder %s39, %s40
    %p54 = scmp.eq.s32.totalorder %s18, 1
    %p55 = por %p53, %p54
    %p57 = scmp.ne.s32.totalorder %s40, %s56
    %p58 = scmp.eq.s32.totalorder %s18, 0
    %p59 = por %p57, %p58
    %s61 = sadd.s32 %s60, 1
    %p64 = scmp.eq.s32.totalorder %s12, 1
    %p65 = scmp.ne.s32.totalorder %s60, %s62
    %p66 = scmp.eq.s32.totalorder %s12, 0
    %p67 = por %p65, %p66
    %p68 = scmp.ne.s32.totalorder %s60, %s62
    %p69 = scmp.eq.s32.totalorder %s17, 1
    %p70 = por %p68, %p69
    %p71 = scmp.ne.s32.totalorder %s62, %s63
    %p72 = scmp.eq.s32.totalorder %s17, 0
    %p73 = por %p71, %p72
    %p74 = scmp.ne.s32.totalorder %s62, %s63
    %p75 = scmp.eq.s32.totalorder %s18, 1
    %p76 = por %p74, %p75
    %p78 = scmp.ne.s32.totalorder %s63, %s77
    %p79 = scmp.eq.s32.totalorder %s18, 0
    %p80 = por %p78, %p79
    %s82 = sadd.s32 %s81, 1
    %p85 = scmp.eq.s32.totalorder %s12, 1
    %p86 = scmp.ne.s32.totalorder %s81, %s83
    %p87 = scmp.eq.s32.totalorder %s12, 0
    %p88 = por %p86, %p87
    %p89 = scmp.ne.s32.totalorder %s81, %s83
    %p90 = scmp.eq.s32.totalorder %s17, 1
    %p91 = por %p89, %p90
    %p92 = scmp.ne.s32.totalorder %s83, %s84
    %p93 = scmp.eq.s32.totalorder %s17, 0
    %p94 = por %p92, %p93
    %p95 = scmp.ne.s32.totalorder %s83, %s84
    %p96 = scmp.eq.s32.totalorder %s18, 1
    %p97 = por %p95, %p96
    %p99 = scmp.ne.s32.totalorder %s84, %s98
    %p100 = scmp.eq.s32.totalorder %s18, 0
    %p101 = por %p99, %p100
    %s102 = ssub.s32 %s19, %s31
    %s103 = ssub.s32 %s20, %s27
    %s104 = sor.u32 %s102, %s103
    %p105 = scmp.eq.s32.totalorder %s104, 0
    %s107 = sadd.s32 %s106, 1
    %s108 = scalar_select %p105, %s106, %s107
    %p111 = pneg %p105
    %p112 = scmp.eq.s32.totalorder %s12, 1
    %p113 = por %p111, %p112
    %p114 = scmp.ne.s32.totalorder %s106, %s109
    %p115 = scmp.eq.s32.totalorder %s12, 0
    %p116 = por %p114, %p115
    %p117 = scmp.ne.s32.totalorder %s106, %s109
    %p118 = scmp.eq.s32.totalorder %s17, 1
    %p119 = por %p117, %p118
    %p120 = scmp.ne.s32.totalorder %s109, %s110
    %p121 = scmp.eq.s32.totalorder %s17, 0
    %p122 = por %p120, %p121
    %p123 = scmp.ne.s32.totalorder %s109, %s110
    %p124 = scmp.eq.s32.totalorder %s18, 1
    %p125 = por %p123, %p124
    %p127 = scmp.ne.s32.totalorder %s110, %s126
    %p128 = scmp.eq.s32.totalorder %s18, 0
    %p129 = por %p127, %p128
    %s130 = ssub.s32 %s19, %s31
    %p131 = scmp.eq.s32.totalorder %s130, 0
    %s133 = sadd.s32 %s132, 1
    %s134 = scalar_select %p131, %s132, %s133
    %p137 = pneg %p131
    %p138 = scmp.eq.s32.totalorder %s12, 1
    %p139 = por %p137, %p138
    %p140 = scmp.ne.s32.totalorder %s132, %s135
    %p141 = scmp.eq.s32.totalorder %s12, 0
    %p142 = por %p140, %p141
    %p143 = scmp.ne.s32.totalorder %s132, %s135
    %p144 = scmp.eq.s32.totalorder %s17, 1
    %p145 = por %p143, %p144
    %p146 = scmp.ne.s32.totalorder %s135, %s136
    %p147 = scmp.eq.s32.totalorder %s17, 0
    %p148 = por %p146, %p147
    %p149 = scmp.ne.s32.totalorder %s135, %s136
    %p150 = scmp.eq.s32.totalorder %s18, 1
    %p151 = por %p149, %p150
    %p153 = scmp.ne.s32.totalorder %s136, %s152
    %p154 = scmp.eq.s32.totalorder %s18, 0
    %p155 = por %p153, %p154
    %s156 = ssub.s32 %s19, %s31
    %p157 = scmp.eq.s32.totalorder %s156, 0
    %s159 = sadd.s32 %s158, 1
    %s160 = scalar_select %p157, %s158, %s159
    %p163 = pneg %p157
    %p164 = scmp.eq.s32.totalorder %s12, 1
    %p165 = por %p163, %p164
    %p166 = scmp.ne.s32.totalorder %s158, %s161
    %p167 = scmp.eq.s32.totalorder %s12, 0
    %p168 = por %p166, %p167
    %p169 = scmp.ne.s32.totalorder %s158, %s161
    %p170 = scmp.eq.s32.totalorder %s17, 1
    %p171 = por %p169, %p170
    %p172 = scmp.ne.s32.totalorder %s161, %s162
    %p173 = scmp.eq.s32.totalorder %s17, 0
    %p174 = por %p172, %p173
    %p175 = scmp.ne.s32.totalorder %s161, %s162
    %p176 = scmp.eq.s32.totalorder %s18, 1
    %p177 = por %p175, %p176
    %p179 = scmp.ne.s32.totalorder %s162, %s178
    %p180 = scmp.eq.s32.totalorder %s18, 0
    %p181 = por %p179, %p180
    %p182 = scmp.le.s32.totalorder 1, %s12
    %p183 = scmp.lt.s32.totalorder %s12, 3
    %p184 = pnand %p182, %p183
    %p185 = pneg %p184
    // Predicated region
    $region9: #{fno_forward.10} parent=5 // pred_check
      _
    $region10: #{fno_forward.10} parent=5 // pred_check_branch
      %187 = sbr.rel (%p184) target = $region12
    $region11: #{fno_forward.10} parent=5 // pred_region
      %s188 = ssub.s32 %s12, 1
      // Predicated region
      $region13: #{fno_forward.10} parent=11 // pred_check
        %p189 = pneg %p73
      $region14: #{fno_forward.10} parent=11 // pred_check_branch
        %191 = sbr.rel (%p189) target = $region16
      $region15: #{fno_forward.10} parent=11 // pred_region
        _
      $region16: #{fno_forward.10} parent=11 // pred_fallthru
        _
      // Predicated region
      $region17: #{fno_forward.10} parent=11 // pred_check
        %p192 = pneg %p94
      $region18: #{fno_forward.10} parent=11 // pred_check_branch
        %194 = sbr.rel (%p192) target = $region20
      $region19: #{fno_forward.10} parent=11 // pred_region
        _
      $region20: #{fno_forward.10} parent=11 // pred_fallthru
        _
    $region12: #{fno_forward.10} parent=5 // pred_fallthru
      _
    %p195 = scmp.lt.s32.totalorder %s12, 2
    // Predicated region
    $region21: #{fno_forward.10} parent=5 // pred_check
      %p196 = pneg %p195
    $region22: #{fno_forward.10} parent=5 // pred_check_branch
      %198 = sbr.rel (%p196) target = $region24
    $region23: #{fno_forward.10} parent=5 // pred_region
      // Predicated region
      $region25: #{fno_forward.10} parent=23 // pred_check
        %p199 = pneg %p46
      $region26: #{fno_forward.10} parent=23 // pred_check_branch
        %201 = sbr.rel (%p199) target = $region28
      $region27: #{fno_forward.10} parent=23 // pred_region
        %s202 = smul.u32 2, %s20
        %p203 = scmp.lt.s32.totalorder %s19, 1
        %s204 = scalar_select %p203, %s19, 1
        %p205 = scmp.lt.s32.totalorder %s202, 1
        %s206 = scalar_select %p205, %s202, 1
        %s207 = smul.addr %s204, 4
        %s208 = sadd.s32 %s206, %s207
        %s209 = smul.addr %s208, 8
        %s210 = scalar_lea.vmem %s0, %s209
        %s211 = smul.u32 2, %s20
      $region28: #{fno_forward.10} parent=23 // pred_fallthru
        _
    $region24: #{fno_forward.10} parent=5 // pred_fallthru
      _
    %p212 = scmp.le.s32.totalorder 1, %s12
    %p213 = scmp.lt.s32.totalorder %s12, 3
    %p214 = pnand %p212, %p213
    %p215 = pneg %p214
    // Predicated region
    $region29: #{fno_forward.10} parent=5 // pred_check
      _
    $region30: #{fno_forward.10} parent=5 // pred_check_branch
      %217 = sbr.rel (%p214) target = $region32
    $region31: #{fno_forward.10} parent=5 // pred_region
      %s218 = ssub.s32 %s12, 1
      %s219 = smul.u32 2, %s22
      %p220 = scmp.lt.s32.totalorder %s21, 1
      %s221 = scalar_select %p220, %s21, 1
      %p222 = scmp.lt.s32.totalorder %s219, 1
      %s223 = scalar_select %p222, %s219, 1
      %s224 = smul.addr %s221, 4
      %s225 = sadd.s32 %s223, %s224
      %s226 = smul.addr %s225, 8
      %s227 = scalar_lea.vmem %s0, %s226
      %p228 = pneg %p52
      %p229 = pneg %p49
      %p230 = pneg %p73
      %p231 = pneg %p70
      %p232 = pneg %p94
      %p233 = pneg %p91
      %p234 = pneg %p122
      %p235 = pneg %p119
      %s236 = smul.u32 2, %s22
      %p237 = scmp.lt.s32.totalorder %s21, 1
      %s238 = scalar_select %p237, %s21, 1
      %p239 = scmp.lt.s32.totalorder %s236, 1
      %s240 = scalar_select %p239, %s236, 1
      %s241 = smul.addr %s238, 4
      %s242 = sadd.s32 %s240, %s241
      %s243 = smul.addr %s242, 8
      %s244 = scalar_lea.vmem %s3, %s243
      %p245 = pneg %p148
      %p246 = pneg %p145
      %p247 = scmp.lt.s32.totalorder %s21, 1
      %s248 = scalar_select %p247, %s21, 1
      %s249 = smul.addr %s248, 2
      %s250 = smul.addr %s249, 8
      %s251 = scalar_lea.vmem %s4, %s250
      %p252 = pneg %p174
      %p253 = pneg %p171
      %p254 = scmp.lt.s32.totalorder %s21, 1
      %s255 = scalar_select %p254, %s21, 1
      %s256 = smul.addr %s255, 2
      %s257 = smul.addr %s256, 8
      %s258 = scalar_lea.vmem %s5, %s257
      %s259 = smul.u32 2, %s22
      %p260 = scmp.lt.s32.totalorder %s21, 1
      %s261 = scalar_select %p260, %s21, 1
      %p262 = scmp.lt.s32.totalorder %s259, 1
      %s263 = scalar_select %p262, %s259, 1
      %s264 = smul.addr %s261, 4
      %s265 = sadd.s32 %s263, %s264
      %s266 = smul.addr %s265, 8
      %s267 = scalar_lea.vmem %s0, %s266
      %s268 = smul.u32 2, %s22
      %s269 = smul.u32 2, %s22
      %p270 = scmp.lt.s32.totalorder %s21, 1
      %s271 = scalar_select %p270, %s21, 1
      %p272 = scmp.lt.s32.totalorder %s269, 1
      %s273 = scalar_select %p272, %s269, 1
      %s274 = smul.addr %s271, 4
      %s275 = sadd.s32 %s273, %s274
      %s276 = smul.addr %s275, 8
      %s277 = scalar_lea.vmem %s3, %s276
      %s278 = smul.u32 2, %s22
      %p279 = scmp.lt.s32.totalorder %s21, 1
      %s280 = scalar_select %p279, %s21, 1
      %s281 = smul.addr %s280, 2
      %s282 = smul.addr %s281, 8
      %s283 = scalar_lea.vmem %s4, %s282
      %p284 = scmp.lt.s32.totalorder %s21, 1
      %s285 = scalar_select %p284, %s21, 1
      %s286 = smul.addr %s285, 2
      %s287 = smul.addr %s286, 8
      %s288 = scalar_lea.vmem %s5, %s287
      %v289 = vld [vmem:[%s267] sm:$0xff]
      %v290 = vld [vmem:[%s267 + $0x8] sm:$0xff]
      %v291 = vld [vmem:[%s267 + $0x10] sm:$0xff]
      %v292 = vld [vmem:[%s267 + $0x18] sm:$0xff]
      %v293 = vld [vmem:[%s1] sm:$0xff]
      %v294 = vld [vmem:[%s1 + $0x8] sm:$0xff]
      %v295 = vld [vmem:[%s2] sm:$0xff]
      %v296 = vld [vmem:[%s2 + $0x8] sm:$0xff]
      %298 = vset.pattern.permute.xlu0 0
      %299 = vperm.xlu0 %298, %v295
      %v300 = vpop.permute.xlu0 %299
      %303 = vset.pattern.permute.xlu0 0
      %304 = vperm.xlu0 %303, %v296
      %v305 = vpop.permute.xlu0 %304
      %vm307 = vcmask 130048
      %v309 = vsel %vm307, %v293, 0
      %v312 = vsel %vm307, %v294, 0
      %314 = vmatprep.subr.mxu0 %v290
      %315 = vmatpush1.msra.mxu0 %v289
      %316 = vmatprep.subr.mxu0 %v292
      %317 = vmatpush1.msra.mxu0 %v291
      %318 = vmatprep.subr.mxu0 0.0
      %319 = vmatpush1.msra.mxu0 0.0
      %320 = vmatprep.subr.mxu0 0.0
      %321 = vmatpush1.msra.mxu0 0.0
      %322 = vmatprep.subr.mxu0 0.0
      %323 = vmatpush1.msra.mxu0 0.0
      %324 = vmatprep.subr.mxu0 0.0
      %325 = vmatpush1.msra.mxu0 0.0
      %326 = vmatprep.subr.mxu0 0.0
      %327 = vmatpush1.msra.mxu0 0.0
      %328 = vmatprep.subr.mxu0 0.0
      %329 = vmatpush1.msra.mxu0 0.0
      %330 = vmatprep.subr.mxu0 0.0
      %331 = vmatpush1.msra.mxu0 0.0
      %332 = vmatprep.subr.mxu0 0.0
      %333 = vmatpush1.msra.mxu0 0.0
      %334 = vmatprep.subr.mxu0 0.0
      %335 = vmatpush1.msra.mxu0 0.0
      %336 = vmatprep.subr.mxu0 0.0
      %337 = vmatpush1.msra.mxu0 0.0
      %338 = vmatprep.subr.mxu0 0.0
      %339 = vmatpush1.msra.mxu0 0.0
      %340 = vmatprep.subr.mxu0 0.0
      %341 = vmatpush1.msra.mxu0 0.0
      %342 = vmatprep.subr.mxu0 0.0
      %343 = vmatpush1.msra.mxu0 0.0
      %344 = vmatprep.subr.mxu0 0.0
      %345 = vmatpush1.msra.mxu0 0.0
      %346 = vmatprep.subr.mxu0 0.0
      %347 = vmatpush1.msra.mxu0 0.0
      %348 = vmatprep.subr.mxu0 0.0
      %349 = vmatpush1.msra.mxu0 0.0
      %350 = vmatprep.subr.mxu0 0.0
      %351 = vmatpush1.msra.mxu0 0.0
      %352 = vmatprep.subr.mxu0 0.0
      %353 = vmatpush1.msra.mxu0 0.0
      %354 = vmatprep.subr.mxu0 0.0
      %355 = vmatpush1.msra.mxu0 0.0
      %356 = vmatprep.subr.mxu0 0.0
      %357 = vmatpush1.msra.mxu0 0.0
      %358 = vmatprep.subr.mxu0 0.0
      %359 = vmatpush1.msra.mxu0 0.0
      %360 = vmatprep.subr.mxu0 0.0
      %361 = vmatpush1.msra.mxu0 0.0
      %362 = vmatprep.subr.mxu0 0.0
      %363 = vmatpush1.msra.mxu0 0.0
      %364 = vmatprep.subr.mxu0 0.0
      %365 = vmatpush1.msra.mxu0 0.0
      %366 = vmatprep.subr.mxu0 0.0
      %367 = vmatpush1.msra.mxu0 0.0
      %368 = vmatprep.subr.mxu0 0.0
      %369 = vmatpush1.msra.mxu0 0.0
      %370 = vmatprep.subr.mxu0 0.0
      %371 = vmatpush1.msra.mxu0 0.0
      %372 = vmatprep.subr.mxu0 0.0
      %373 = vmatpush1.msra.mxu0 0.0
      %374 = vmatprep.subr.mxu0 0.0
      %375 = vmatpush1.msra.mxu0 0.0
      %376 = vmatprep.subr.mxu0 0.0
      %377 = vmatpush1.msra.mxu0 0.0
      %378 = vmatprep.mubr.f32.mxu0 0.0
      %379 = vmatmul.mubr.f32.gmra.mrb[0].mxu0 %v309
      %v380 = vpop.f32.mrb[0].mxu0
      %v381 = vadd.f32 %v300, %v380
      %v382 = vpop.f32.mrb[0].mxu0
      %v383 = vadd.f32 %v300, %v382
      %384 = vmatprep.mubr.f32.mxu0 0.0
      %385 = vmatmul.mubr.f32.gmra.mrb[0].mxu0 %v312
      %v386 = vpop.f32.mrb[0].mxu0
      %v387 = vadd.f32 %v305, %v386
      %v388 = vpop.f32.mrb[0].mxu0
      %v389 = vadd.f32 %v305, %v388
      %390 = vdwg.mxu0
      %v391 = vadd.f32 %v289, %v381
      %v392 = vadd.f32 %v290, %v383
      %v393 = vadd.f32 %v291, %v387
      %v394 = vadd.f32 %v292, %v389
      %v395 = vmax.f32 %v391, 0.0
      %v396 = vmax.f32 %v392, 0.0
      %v397 = vmax.f32 %v393, 0.0
      %v398 = vmax.f32 %v394, 0.0
      %399 = vst [vmem:[%s277] sm:$0xff] %v395
      %400 = vst [vmem:[%s277 + $0x8] sm:$0xff] %v396
      %401 = vst [vmem:[%s277 + $0x10] sm:$0xff] %v397
      %402 = vst [vmem:[%s277 + $0x18] sm:$0xff] %v398
      %p403 = scmp.eq.s32.totalorder %s22, 0
      // Predicated region
      $region33: #{fno_forward.10} parent=31 // pred_check
        %p404 = pneg %p403
      $region34: #{fno_forward.10} parent=31 // pred_check_branch
        %406 = sbr.rel (%p404) target = $region36
      $region35: #{fno_forward.10} parent=31 // pred_region
        %vm407 = vcmask 7168
        %408 = vst.msk [vmem:[%s283] sm:$0xff] %vm407, 0.0
        %409 = vst.msk [vmem:[%s283 + $0x8] sm:$0xff] %vm407, 0.0
        %410 = vst.msk [vmem:[%s288] sm:$0xff] %vm407, 0.0
        %411 = vst.msk [vmem:[%s288 + $0x8] sm:$0xff] %vm407, 0.0
      $region36: #{fno_forward.10} parent=31 // pred_fallthru
        _
      %v412 = vld [vmem:[%s283] sm:$0xff]
      %v413 = vld [vmem:[%s283 + $0x8] sm:$0xff]
      %v414 = vadd.f32 %v395, %v396
      %415 = vadd.xlane.f32.xlu0 %v414
      %v416 = vpop.xlane.xlu0 %415
      %v417 = vadd.f32 %v397, %v398
      %418 = vadd.xlane.f32.xlu0 %v417
      %v419 = vpop.xlane.xlu0 %418
      %v420 = vadd.f32 %v412, %v416
      %v421 = vadd.f32 %v413, %v419
      %vm422 = vcmask 7168
      %423 = vst.msk [vmem:[%s283] sm:$0xff] %vm422, %v420
      %424 = vst.msk [vmem:[%s283 + $0x8] sm:$0xff] %vm422, %v421
      %v425 = vld [vmem:[%s288] sm:$0xff]
      %v426 = vld [vmem:[%s288 + $0x8] sm:$0xff]
      %v427 = vmul.f32 %v395, %v395
      %v428 = vmul.f32 %v396, %v396
      %v429 = vmul.f32 %v397, %v397
      %v430 = vmul.f32 %v398, %v398
      %v431 = vadd.f32 %v427, %v428
      %432 = vadd.xlane.f32.xlu0 %v431
      %v433 = vpop.xlane.xlu0 %432
      %v434 = vadd.f32 %v429, %v430
      %435 = vadd.xlane.f32.xlu0 %v434
      %v436 = vpop.xlane.xlu0 %435
      %v437 = vadd.f32 %v425, %v433
      %v438 = vadd.f32 %v426, %v436
      %439 = vst.msk [vmem:[%s288] sm:$0xff] %vm422, %v437
      %440 = vst.msk [vmem:[%s288 + $0x8] sm:$0xff] %vm422, %v438
      %s441 = smul.u32 2, %s22
      %p442 = scmp.lt.s32.totalorder %s21, 1
      %s443 = scalar_select %p442, %s21, 1
      %p444 = scmp.lt.s32.totalorder %s441, 1
      %s445 = scalar_select %p444, %s441, 1
      %s446 = smul.addr %s443, 4
      %s447 = sadd.s32 %s445, %s446
      %s448 = smul.addr %s447, 8
      %s449 = scalar_lea.vmem %s3, %s448
      %p450 = scmp.lt.s32.totalorder %s21, 1
      %s451 = scalar_select %p450, %s21, 1
      %s452 = smul.addr %s451, 2
      %s453 = smul.addr %s452, 8
      %s454 = scalar_lea.vmem %s4, %s453
      %p455 = scmp.lt.s32.totalorder %s21, 1
      %s456 = scalar_select %p455, %s21, 1
      %s457 = smul.addr %s456, 2
      %s458 = smul.addr %s457, 8
      %s459 = scalar_lea.vmem %s5, %s458
      // Predicated region
      $region37: #{fno_forward.10} parent=31 // pred_check
        %p460 = pneg %p119
      $region38: #{fno_forward.10} parent=31 // pred_check_branch
        %462 = sbr.rel (%p460) target = $region40
      $region39: #{fno_forward.10} parent=31 // pred_region
        %s463 = smul.u32 2, %s22
      $region40: #{fno_forward.10} parent=31 // pred_fallthru
        _
      // Predicated region
      $region41: #{fno_forward.10} parent=31 // pred_check
        %p464 = pneg %p145
      $region42: #{fno_forward.10} parent=31 // pred_check_branch
        %466 = sbr.rel (%p464) target = $region44
      $region43: #{fno_forward.10} parent=31 // pred_region
        _
      $region44: #{fno_forward.10} parent=31 // pred_fallthru
        _
      // Predicated region
      $region45: #{fno_forward.10} parent=31 // pred_check
        %p467 = pneg %p171
      $region46: #{fno_forward.10} parent=31 // pred_check_branch
        %469 = sbr.rel (%p467) target = $region48
      $region47: #{fno_forward.10} parent=31 // pred_region
        _
      $region48: #{fno_forward.10} parent=31 // pred_fallthru
        _
    $region32: #{fno_forward.10} parent=5 // pred_fallthru
      _
    %p470 = scmp.le.s32.totalorder 2, %s12
    // Predicated region
    $region49: #{fno_forward.10} parent=5 // pred_check
      %p471 = pneg %p470
    $region50: #{fno_forward.10} parent=5 // pred_check_branch
      %473 = sbr.rel (%p471) target = $region52
    $region51: #{fno_forward.10} parent=5 // pred_region
      %s474 = ssub.s32 %s12, 2
      // Predicated region
      $region53: #{fno_forward.10} parent=51 // pred_check
        %p475 = pneg %p125
      $region54: #{fno_forward.10} parent=51 // pred_check_branch
        %477 = sbr.rel (%p475) target = $region56
      $region55: #{fno_forward.10} parent=51 // pred_region
        %s478 = smul.u32 2, %s24
        %p479 = scmp.lt.s32.totalorder %s23, 1
        %s480 = scalar_select %p479, %s23, 1
        %p481 = scmp.lt.s32.totalorder %s478, 1
        %s482 = scalar_select %p481, %s478, 1
        %s483 = smul.addr %s480, 4
        %s484 = sadd.s32 %s482, %s483
        %s485 = smul.addr %s484, 8
        %s486 = scalar_lea.vmem %s3, %s485
      $region56: #{fno_forward.10} parent=51 // pred_fallthru
        _
      // Predicated region
      $region57: #{fno_forward.10} parent=51 // pred_check
        %p487 = pneg %p151
      $region58: #{fno_forward.10} parent=51 // pred_check_branch
        %489 = sbr.rel (%p487) target = $region60
      $region59: #{fno_forward.10} parent=51 // pred_region
        %p490 = scmp.lt.s32.totalorder %s23, 1
        %s491 = scalar_select %p490, %s23, 1
        %s492 = smul.addr %s491, 2
        %s493 = smul.addr %s492, 8
        %s494 = scalar_lea.vmem %s4, %s493
      $region60: #{fno_forward.10} parent=51 // pred_fallthru
        _
      // Predicated region
      $region61: #{fno_forward.10} parent=51 // pred_check
        %p495 = pneg %p177
      $region62: #{fno_forward.10} parent=51 // pred_check_branch
        %497 = sbr.rel (%p495) target = $region64
      $region63: #{fno_forward.10} parent=51 // pred_region
        %p498 = scmp.lt.s32.totalorder %s23, 1
        %s499 = scalar_select %p498, %s23, 1
        %s500 = smul.addr %s499, 2
        %s501 = smul.addr %s500, 8
        %s502 = scalar_lea.vmem %s5, %s501
      $region64: #{fno_forward.10} parent=51 // pred_fallthru
        _
    $region52: #{fno_forward.10} parent=5 // pred_fallthru
      _
  $region6: #{fno_forward.10} parent=0 // loop_footer
    %s16 = sadd.s32 1, %s12
  $region7: #{fno_forward.10} parent=0 // loop_footer_branch
    %11 = sbr.rel target = $region3
  $region8: #{fno_forward.10} parent=0 // loop_exit
    _

// kernel: fno_forward.11
$region0: #{fno_forward.11}
  #allocation0 [shape = 'u32[]', space=smem, size = 0x4, offset = 0x4, fixed_abs, tag = 'smem constant byte address 0x4 - core index']
  #allocation1 [shape = 'u32[144,128]{1,0:T(1,128)}', space=vmem, size = 0x12000, scoped, tag = 'internal scratch']
  %s0 = inlined_call_operand.vmem [shape: f32[2,16,256], index: 0, kind: input, shape index: {}, may-alias: {0,3}]
  %s1 = inlined_call_operand.vmem [shape: f32[16,1], index: 1, kind: input, shape index: {}]
  %s2 = inlined_call_operand.vmem [shape: f32[16,1], index: 2, kind: input, shape index: {}]
  %s3 = inlined_call_operand.vmem [shape: f32[2,16,256], index: 3, kind: output, shape index: {}, may-alias: {0,3}]
  %s4 = sld [smem:[#allocation0]]
  $region45: #{fno_forward.11} parent=0
    _
  %s6 = ssub.s32 1, %s4
  %s7 = scalar_select 0, %s6, %s4
  loop: start=0, step=1, limit=4
  $region2: #{fno_forward.11} parent=0 // loop_pre_header
    _
  $region3: #{fno_forward.11} parent=0 // loop_header
    %s9 = sphi 0, %s13
    %p10 = scmp.ge.s32.totalorder %s9, 4
    %s16 = sphi 0, %s28
    %s17 = sphi 0, %s24
    %s18 = sphi 0, %s16
    %s19 = sphi 0, %s17
    %s20 = sphi 0, %s18
    %s21 = sphi 0, %s19
    %s33 = sphi 0, %s35
    %s36 = sphi 0, %s33
    %s37 = sphi 0, %s36
    %s53 = sphi 0, %s37
    %s57 = sphi 0, %s57
    %s59 = sphi 0, %s57
    %s60 = sphi 0, %s59
    %s74 = sphi 0, %s60
    %s78 = sphi 0, %s78
    %s80 = sphi 0, %s78
    %s81 = sphi 0, %s80
    %s95 = sphi 0, %s81
    %s103 = sphi 0, %s105
    %s106 = sphi 0, %s103
    %s107 = sphi 0, %s106
    %s123 = sphi 0, %s107
  $region4: #{fno_forward.11} parent=0 // loop_header_branch
    %12 = sbr.rel (%p10) target = $region8
  $region5: #{fno_forward.11} parent=0 // loop_body
    %s14 = ssub.s32 %s9, 1
    %s15 = ssub.s32 %s9, 2
    %s22 = sadd.s32 1, %s17
    %p23 = scmp.ge.s32.totalorder %s22, 1
    %s24 = scalar_select %p23, 0, %s22
    %s25 = sadd.s32 1, %s16
    %s26 = scalar_select %p23, %s25, %s16
    %p27 = scmp.ge.s32.totalorder %s26, 2
    %s28 = scalar_select %p27, 0, %s26
    %s29 = ssub.s32 %s16, %s28
    %s30 = ssub.s32 %s17, %s24
    %s31 = sor.u32 %s29, %s30
    %p32 = scmp.eq.s32.totalorder %s31, 0
    %s34 = sadd.s32 %s33, 1
    %s35 = scalar_select %p32, %s33, %s34
    %p38 = pneg %p32
    %p39 = scmp.eq.s32.totalorder %s9, 1
    %p40 = por %p38, %p39
    %p41 = scmp.ne.s32.totalorder %s33, %s36
    %p42 = scmp.eq.s32.totalorder %s9, 0
    %p43 = por %p41, %p42
    %p44 = scmp.ne.s32.totalorder %s33, %s36
    %p45 = scmp.eq.s32.totalorder %s14, 1
    %p46 = por %p44, %p45
    %p47 = scmp.ne.s32.totalorder %s36, %s37
    %p48 = scmp.eq.s32.totalorder %s14, 0
    %p49 = por %p47, %p48
    %p50 = scmp.ne.s32.totalorder %s36, %s37
    %p51 = scmp.eq.s32.totalorder %s15, 1
    %p52 = por %p50, %p51
    %p54 = scmp.ne.s32.totalorder %s37, %s53
    %p55 = scmp.eq.s32.totalorder %s15, 0
    %p56 = por %p54, %p55
    %s58 = sadd.s32 %s57, 1
    %p61 = scmp.eq.s32.totalorder %s9, 1
    %p62 = scmp.ne.s32.totalorder %s57, %s59
    %p63 = scmp.eq.s32.totalorder %s9, 0
    %p64 = por %p62, %p63
    %p65 = scmp.ne.s32.totalorder %s57, %s59
    %p66 = scmp.eq.s32.totalorder %s14, 1
    %p67 = por %p65, %p66
    %p68 = scmp.ne.s32.totalorder %s59, %s60
    %p69 = scmp.eq.s32.totalorder %s14, 0
    %p70 = por %p68, %p69
    %p71 = scmp.ne.s32.totalorder %s59, %s60
    %p72 = scmp.eq.s32.totalorder %s15, 1
    %p73 = por %p71, %p72
    %p75 = scmp.ne.s32.totalorder %s60, %s74
    %p76 = scmp.eq.s32.totalorder %s15, 0
    %p77 = por %p75, %p76
    %s79 = sadd.s32 %s78, 1
    %p82 = scmp.eq.s32.totalorder %s9, 1
    %p83 = scmp.ne.s32.totalorder %s78, %s80
    %p84 = scmp.eq.s32.totalorder %s9, 0
    %p85 = por %p83, %p84
    %p86 = scmp.ne.s32.totalorder %s78, %s80
    %p87 = scmp.eq.s32.totalorder %s14, 1
    %p88 = por %p86, %p87
    %p89 = scmp.ne.s32.totalorder %s80, %s81
    %p90 = scmp.eq.s32.totalorder %s14, 0
    %p91 = por %p89, %p90
    %p92 = scmp.ne.s32.totalorder %s80, %s81
    %p93 = scmp.eq.s32.totalorder %s15, 1
    %p94 = por %p92, %p93
    %p96 = scmp.ne.s32.totalorder %s81, %s95
    %p97 = scmp.eq.s32.totalorder %s15, 0
    %p98 = por %p96, %p97
    %s99 = ssub.s32 %s16, %s28
    %s100 = ssub.s32 %s17, %s24
    %s101 = sor.u32 %s99, %s100
    %p102 = scmp.eq.s32.totalorder %s101, 0
    %s104 = sadd.s32 %s103, 1
    %s105 = scalar_select %p102, %s103, %s104
    %p108 = pneg %p102
    %p109 = scmp.eq.s32.totalorder %s9, 1
    %p110 = por %p108, %p109
    %p111 = scmp.ne.s32.totalorder %s103, %s106
    %p112 = scmp.eq.s32.totalorder %s9, 0
    %p113 = por %p111, %p112
    %p114 = scmp.ne.s32.totalorder %s103, %s106
    %p115 = scmp.eq.s32.totalorder %s14, 1
    %p116 = por %p114, %p115
    %p117 = scmp.ne.s32.totalorder %s106, %s107
    %p118 = scmp.eq.s32.totalorder %s14, 0
    %p119 = por %p117, %p118
    %p120 = scmp.ne.s32.totalorder %s106, %s107
    %p121 = scmp.eq.s32.totalorder %s15, 1
    %p122 = por %p120, %p121
    %p124 = scmp.ne.s32.totalorder %s107, %s123
    %p125 = scmp.eq.s32.totalorder %s15, 0
    %p126 = por %p124, %p125
    %p127 = scmp.le.s32.totalorder 1, %s9
    %p128 = scmp.lt.s32.totalorder %s9, 3
    %p129 = pnand %p127, %p128
    %p130 = pneg %p129
    // Predicated region
    $region9: #{fno_forward.11} parent=5 // pred_check
      _
    $region10: #{fno_forward.11} parent=5 // pred_check_branch
      %132 = sbr.rel (%p129) target = $region12
    $region11: #{fno_forward.11} parent=5 // pred_region
      %s133 = ssub.s32 %s9, 1
      // Predicated region
      $region13: #{fno_forward.11} parent=11 // pred_check
        %p134 = pneg %p70
      $region14: #{fno_forward.11} parent=11 // pred_check_branch
        %136 = sbr.rel (%p134) target = $region16
      $region15: #{fno_forward.11} parent=11 // pred_region
        _
      $region16: #{fno_forward.11} parent=11 // pred_fallthru
        _
      // Predicated region
      $region17: #{fno_forward.11} parent=11 // pred_check
        %p137 = pneg %p91
      $region18: #{fno_forward.11} parent=11 // pred_check_branch
        %139 = sbr.rel (%p137) target = $region20
      $region19: #{fno_forward.11} parent=11 // pred_region
        _
      $region20: #{fno_forward.11} parent=11 // pred_fallthru
        _
    $region12: #{fno_forward.11} parent=5 // pred_fallthru
      _
    %p140 = scmp.lt.s32.totalorder %s9, 2
    // Predicated region
    $region21: #{fno_forward.11} parent=5 // pred_check
      %p141 = pneg %p140
    $region22: #{fno_forward.11} parent=5 // pred_check_branch
      %143 = sbr.rel (%p141) target = $region24
    $region23: #{fno_forward.11} parent=5 // pred_region
      // Predicated region
      $region25: #{fno_forward.11} parent=23 // pred_check
        %p144 = pneg %p43
      $region26: #{fno_forward.11} parent=23 // pred_check_branch
        %146 = sbr.rel (%p144) target = $region28
      $region27: #{fno_forward.11} parent=23 // pred_region
        %s147 = smul.u32 2, %s17
        %p148 = scmp.lt.s32.totalorder %s16, 1
        %s149 = scalar_select %p148, %s16, 1
        %p150 = scmp.lt.s32.totalorder %s147, 1
        %s151 = scalar_select %p150, %s147, 1
        %s152 = smul.addr %s149, 4
        %s153 = sadd.s32 %s151, %s152
        %s154 = smul.addr %s153, 8
        %s155 = scalar_lea.vmem %s0, %s154
        %s156 = smul.u32 2, %s17
      $region28: #{fno_forward.11} parent=23 // pred_fallthru
        _
    $region24: #{fno_forward.11} parent=5 // pred_fallthru
      _
    %p157 = scmp.le.s32.totalorder 1, %s9
    %p158 = scmp.lt.s32.totalorder %s9, 3
    %p159 = pnand %p157, %p158
    %p160 = pneg %p159
    // Predicated region
    $region29: #{fno_forward.11} parent=5 // pred_check
      _
    $region30: #{fno_forward.11} parent=5 // pred_check_branch
      %162 = sbr.rel (%p159) target = $region32
    $region31: #{fno_forward.11} parent=5 // pred_region
      %s163 = ssub.s32 %s9, 1
      %s164 = smul.u32 2, %s19
      %p165 = scmp.lt.s32.totalorder %s18, 1
      %s166 = scalar_select %p165, %s18, 1
      %p167 = scmp.lt.s32.totalorder %s164, 1
      %s168 = scalar_select %p167, %s164, 1
      %s169 = smul.addr %s166, 4
      %s170 = sadd.s32 %s168, %s169
      %s171 = smul.addr %s170, 8
      %s172 = scalar_lea.vmem %s0, %s171
      %p173 = pneg %p49
      %p174 = pneg %p46
      %p175 = pneg %p70
      %p176 = pneg %p67
      %p177 = pneg %p91
      %p178 = pneg %p88
      %p179 = pneg %p119
      %p180 = pneg %p116
      %s181 = smul.u32 2, %s19
      %p182 = scmp.lt.s32.totalorder %s18, 1
      %s183 = scalar_select %p182, %s18, 1
      %p184 = scmp.lt.s32.totalorder %s181, 1
      %s185 = scalar_select %p184, %s181, 1
      %s186 = smul.addr %s183, 4
      %s187 = sadd.s32 %s185, %s186
      %s188 = smul.addr %s187, 8
      %s189 = scalar_lea.vmem %s3, %s188
      %s190 = smul.u32 2, %s19
      %p191 = scmp.lt.s32.totalorder %s18, 1
      %s192 = scalar_select %p191, %s18, 1
      %p193 = scmp.lt.s32.totalorder %s190, 1
      %s194 = scalar_select %p193, %s190, 1
      %s195 = smul.addr %s192, 4
      %s196 = sadd.s32 %s194, %s195
      %s197 = smul.addr %s196, 8
      %s198 = scalar_lea.vmem %s0, %s197
      %s199 = smul.u32 2, %s19
      %s200 = smul.u32 2, %s19
      %p201 = scmp.lt.s32.totalorder %s18, 1
      %s202 = scalar_select %p201, %s18, 1
      %p203 = scmp.lt.s32.totalorder %s200, 1
      %s204 = scalar_select %p203, %s200, 1
      %s205 = smul.addr %s202, 4
      %s206 = sadd.s32 %s204, %s205
      %s207 = smul.addr %s206, 8
      %s208 = scalar_lea.vmem %s3, %s207
      %s209 = smul.u32 2, %s19
      %v210 = vld [vmem:[%s198] sm:$0xff]
      %v211 = vld [vmem:[%s198 + $0x8] sm:$0xff]
      %v212 = vld [vmem:[%s198 + $0x10] sm:$0xff]
      %v213 = vld [vmem:[%s198 + $0x18] sm:$0xff]
      %v214 = vld [vmem:[%s1] sm:$0xff]
      %v215 = vld [vmem:[%s1 + $0x8] sm:$0xff]
      %217 = vset.pattern.permute.xlu0 0
      %218 = vperm.xlu0 %217, %v214
      %v219 = vpop.permute.xlu0 %218
      %222 = vset.pattern.permute.xlu0 0
      %223 = vperm.xlu0 %222, %v215
      %v224 = vpop.permute.xlu0 %223
      %v226 = vmul.f32 %v210, %v219
      %v227 = vmul.f32 %v211, %v219
      %v228 = vmul.f32 %v212, %v224
      %v229 = vmul.f32 %v213, %v224
      %v230 = vld [vmem:[%s2] sm:$0xff]
      %v231 = vld [vmem:[%s2 + $0x8] sm:$0xff]
      %233 = vset.pattern.permute.xlu0 0
      %234 = vperm.xlu0 %233, %v230
      %v235 = vpop.permute.xlu0 %234
      %238 = vset.pattern.permute.xlu0 0
      %239 = vperm.xlu0 %238, %v231
      %v240 = vpop.permute.xlu0 %239
      %v242 = vadd.f32 %v226, %v235
      %v243 = vadd.f32 %v227, %v235
      %v244 = vadd.f32 %v228, %v240
      %v245 = vadd.f32 %v229, %v240
      %246 = vst [vmem:[%s208] sm:$0xff] %v242
      %247 = vst [vmem:[%s208 + $0x8] sm:$0xff] %v243
      %248 = vst [vmem:[%s208 + $0x10] sm:$0xff] %v244
      %249 = vst [vmem:[%s208 + $0x18] sm:$0xff] %v245
      %s250 = smul.u32 2, %s19
      %p251 = scmp.lt.s32.totalorder %s18, 1
      %s252 = scalar_select %p251, %s18, 1
      %p253 = scmp.lt.s32.totalorder %s250, 1
      %s254 = scalar_select %p253, %s250, 1
      %s255 = smul.addr %s252, 4
      %s256 = sadd.s32 %s254, %s255
      %s257 = smul.addr %s256, 8
      %s258 = scalar_lea.vmem %s3, %s257
      // Predicated region
      $region33: #{fno_forward.11} parent=31 // pred_check
        %p259 = pneg %p116
      $region34: #{fno_forward.11} parent=31 // pred_check_branch
        %261 = sbr.rel (%p259) target = $region36
      $region35: #{fno_forward.11} parent=31 // pred_region
        %s262 = smul.u32 2, %s19
      $region36: #{fno_forward.11} parent=31 // pred_fallthru
        _
    $region32: #{fno_forward.11} parent=5 // pred_fallthru
      _
    %p263 = scmp.le.s32.totalorder 2, %s9
    // Predicated region
    $region37: #{fno_forward.11} parent=5 // pred_check
      %p264 = pneg %p263
    $region38: #{fno_forward.11} parent=5 // pred_check_branch
      %266 = sbr.rel (%p264) target = $region40
    $region39: #{fno_forward.11} parent=5 // pred_region
      %s267 = ssub.s32 %s9, 2
      // Predicated region
      $region41: #{fno_forward.11} parent=39 // pred_check
        %p268 = pneg %p122
      $region42: #{fno_forward.11} parent=39 // pred_check_branch
        %270 = sbr.rel (%p268) target = $region44
      $region43: #{fno_forward.11} parent=39 // pred_region
        %s271 = smul.u32 2, %s21
        %p272 = scmp.lt.s32.totalorder %s20, 1
        %s273 = scalar_select %p272, %s20, 1
        %p274 = scmp.lt.s32.totalorder %s271, 1
        %s275 = scalar_select %p274, %s271, 1
        %s276 = smul.addr %s273, 4
        %s277 = sadd.s32 %s275, %s276
        %s278 = smul.addr %s277, 8
        %s279 = scalar_lea.vmem %s3, %s278
      $region44: #{fno_forward.11} parent=39 // pred_fallthru
        _
    $region40: #{fno_forward.11} parent=5 // pred_fallthru
      _
  $region6: #{fno_forward.11} parent=0 // loop_footer
    %s13 = sadd.s32 1, %s9
  $region7: #{fno_forward.11} parent=0 // loop_footer_branch
    %8 = sbr.rel target = $region3
  $region8: #{fno_forward.11} parent=0 // loop_exit
    _

// kernel: fno_forward.15
$region0: #{fno_forward.15}
  #allocation0 [shape = 'u32[]', space=smem, size = 0x4, offset = 0x4, fixed_abs, tag = 'smem constant byte address 0x4 - core index']
  #allocation1 [shape = 'u32[144,128]{1,0:T(1,128)}', space=vmem, size = 0x12000, scoped, tag = 'internal scratch']
  #allocation2 [shape = 'f32[1,1]{1,0:T(1,128)S(1)}', space=vmem, size = 0x200, scoped, tag = 'scoped memory for fno_forward.15']
  %s0 = inlined_call_operand.vmem [shape: f32[2,16,256], index: 0, kind: input, shape index: {}]
  %s1 = inlined_call_operand.vmem [shape: f32[1,16], index: 1, kind: input, shape index: {}]
  %s2 = inlined_call_operand.<no memory space> [shape: f32[1,1], index: 2, kind: input, shape index: {}]
  %s3 = inlined_call_operand.vmem [shape: f32[2,1,256], index: 3, kind: output, shape index: {}]
  %s4 = sld [smem:[#allocation0]]
  $region45: #{fno_forward.15} parent=0
    _
  %s6 = ssub.s32 1, %s4
  %s7 = scalar_select 0, %s6, %s4
  %v8 = vstv %s2
  %9 = vst [vmem:[#allocation2] sm:$0x1] %v8
  loop: start=0, step=1, limit=4
  $region2: #{fno_forward.15} parent=0 // loop_pre_header
    _
  $region3: #{fno_forward.15} parent=0 // loop_header
    %s11 = sphi 0, %s15
    %p12 = scmp.ge.s32.totalorder %s11, 4
    %s18 = sphi 0, %s30
    %s19 = sphi 0, %s26
    %s20 = sphi 0, %s18
    %s21 = sphi 0, %s19
    %s22 = sphi 0, %s20
    %s23 = sphi 0, %s21
    %s35 = sphi 0, %s37
    %s38 = sphi 0, %s35
    %s39 = sphi 0, %s38
    %s55 = sphi 0, %s39
    %s59 = sphi 0, %s59
    %s61 = sphi 0, %s59
    %s62 = sphi 0, %s61
    %s76 = sphi 0, %s62
    %s80 = sphi 0, %s80
    %s82 = sphi 0, %s80
    %s83 = sphi 0, %s82
    %s97 = sphi 0, %s83
    %s105 = sphi 0, %s107
    %s108 = sphi 0, %s105
    %s109 = sphi 0, %s108
    %s125 = sphi 0, %s109
  $region4: #{fno_forward.15} parent=0 // loop_header_branch
    %14 = sbr.rel (%p12) target = $region8
  $region5: #{fno_forward.15} parent=0 // loop_body
    %s16 = ssub.s32 %s11, 1
    %s17 = ssub.s32 %s11, 2
    %s24 = sadd.s32 1, %s19
    %p25 = scmp.ge.s32.totalorder %s24, 1
    %s26 = scalar_select %p25, 0, %s24
    %s27 = sadd.s32 1, %s18
    %s28 = scalar_select %p25, %s27, %s18
    %p29 = scmp.ge.s32.totalorder %s28, 2
    %s30 = scalar_select %p29, 0, %s28
    %s31 = ssub.s32 %s18, %s30
    %s32 = ssub.s32 %s19, %s26
    %s33 = sor.u32 %s31, %s32
    %p34 = scmp.eq.s32.totalorder %s33, 0
    %s36 = sadd.s32 %s35, 1
    %s37 = scalar_select %p34, %s35, %s36
    %p40 = pneg %p34
    %p41 = scmp.eq.s32.totalorder %s11, 1
    %p42 = por %p40, %p41
    %p43 = scmp.ne.s32.totalorder %s35, %s38
    %p44 = scmp.eq.s32.totalorder %s11, 0
    %p45 = por %p43, %p44
    %p46 = scmp.ne.s32.totalorder %s35, %s38
    %p47 = scmp.eq.s32.totalorder %s16, 1
    %p48 = por %p46, %p47
    %p49 = scmp.ne.s32.totalorder %s38, %s39
    %p50 = scmp.eq.s32.totalorder %s16, 0
    %p51 = por %p49, %p50
    %p52 = scmp.ne.s32.totalorder %s38, %s39
    %p53 = scmp.eq.s32.totalorder %s17, 1
    %p54 = por %p52, %p53
    %p56 = scmp.ne.s32.totalorder %s39, %s55
    %p57 = scmp.eq.s32.totalorder %s17, 0
    %p58 = por %p56, %p57
    %s60 = sadd.s32 %s59, 1
    %p63 = scmp.eq.s32.totalorder %s11, 1
    %p64 = scmp.ne.s32.totalorder %s59, %s61
    %p65 = scmp.eq.s32.totalorder %s11, 0
    %p66 = por %p64, %p65
    %p67 = scmp.ne.s32.totalorder %s59, %s61
    %p68 = scmp.eq.s32.totalorder %s16, 1
    %p69 = por %p67, %p68
    %p70 = scmp.ne.s32.totalorder %s61, %s62
    %p71 = scmp.eq.s32.totalorder %s16, 0
    %p72 = por %p70, %p71
    %p73 = scmp.ne.s32.totalorder %s61, %s62
    %p74 = scmp.eq.s32.totalorder %s17, 1
    %p75 = por %p73, %p74
    %p77 = scmp.ne.s32.totalorder %s62, %s76
    %p78 = scmp.eq.s32.totalorder %s17, 0
    %p79 = por %p77, %p78
    %s81 = sadd.s32 %s80, 1
    %p84 = scmp.eq.s32.totalorder %s11, 1
    %p85 = scmp.ne.s32.totalorder %s80, %s82
    %p86 = scmp.eq.s32.totalorder %s11, 0
    %p87 = por %p85, %p86
    %p88 = scmp.ne.s32.totalorder %s80, %s82
    %p89 = scmp.eq.s32.totalorder %s16, 1
    %p90 = por %p88, %p89
    %p91 = scmp.ne.s32.totalorder %s82, %s83
    %p92 = scmp.eq.s32.totalorder %s16, 0
    %p93 = por %p91, %p92
    %p94 = scmp.ne.s32.totalorder %s82, %s83
    %p95 = scmp.eq.s32.totalorder %s17, 1
    %p96 = por %p94, %p95
    %p98 = scmp.ne.s32.totalorder %s83, %s97
    %p99 = scmp.eq.s32.totalorder %s17, 0
    %p100 = por %p98, %p99
    %s101 = ssub.s32 %s18, %s30
    %s102 = ssub.s32 %s19, %s26
    %s103 = sor.u32 %s101, %s102
    %p104 = scmp.eq.s32.totalorder %s103, 0
    %s106 = sadd.s32 %s105, 1
    %s107 = scalar_select %p104, %s105, %s106
    %p110 = pneg %p104
    %p111 = scmp.eq.s32.totalorder %s11, 1
    %p112 = por %p110, %p111
    %p113 = scmp.ne.s32.totalorder %s105, %s108
    %p114 = scmp.eq.s32.totalorder %s11, 0
    %p115 = por %p113, %p114
    %p116 = scmp.ne.s32.totalorder %s105, %s108
    %p117 = scmp.eq.s32.totalorder %s16, 1
    %p118 = por %p116, %p117
    %p119 = scmp.ne.s32.totalorder %s108, %s109
    %p120 = scmp.eq.s32.totalorder %s16, 0
    %p121 = por %p119, %p120
    %p122 = scmp.ne.s32.totalorder %s108, %s109
    %p123 = scmp.eq.s32.totalorder %s17, 1
    %p124 = por %p122, %p123
    %p126 = scmp.ne.s32.totalorder %s109, %s125
    %p127 = scmp.eq.s32.totalorder %s17, 0
    %p128 = por %p126, %p127
    %p129 = scmp.le.s32.totalorder 1, %s11
    %p130 = scmp.lt.s32.totalorder %s11, 3
    %p131 = pnand %p129, %p130
    %p132 = pneg %p131
    // Predicated region
    $region9: #{fno_forward.15} parent=5 // pred_check
      _
    $region10: #{fno_forward.15} parent=5 // pred_check_branch
      %134 = sbr.rel (%p131) target = $region12
    $region11: #{fno_forward.15} parent=5 // pred_region
      %s135 = ssub.s32 %s11, 1
      // Predicated region
      $region13: #{fno_forward.15} parent=11 // pred_check
        %p136 = pneg %p72
      $region14: #{fno_forward.15} parent=11 // pred_check_branch
        %138 = sbr.rel (%p136) target = $region16
      $region15: #{fno_forward.15} parent=11 // pred_region
        _
      $region16: #{fno_forward.15} parent=11 // pred_fallthru
        _
      // Predicated region
      $region17: #{fno_forward.15} parent=11 // pred_check
        %p139 = pneg %p93
      $region18: #{fno_forward.15} parent=11 // pred_check_branch
        %141 = sbr.rel (%p139) target = $region20
      $region19: #{fno_forward.15} parent=11 // pred_region
        _
      $region20: #{fno_forward.15} parent=11 // pred_fallthru
        _
    $region12: #{fno_forward.15} parent=5 // pred_fallthru
      _
    %p142 = scmp.lt.s32.totalorder %s11, 2
    // Predicated region
    $region21: #{fno_forward.15} parent=5 // pred_check
      %p143 = pneg %p142
    $region22: #{fno_forward.15} parent=5 // pred_check_branch
      %145 = sbr.rel (%p143) target = $region24
    $region23: #{fno_forward.15} parent=5 // pred_region
      // Predicated region
      $region25: #{fno_forward.15} parent=23 // pred_check
        %p146 = pneg %p45
      $region26: #{fno_forward.15} parent=23 // pred_check_branch
        %148 = sbr.rel (%p146) target = $region28
      $region27: #{fno_forward.15} parent=23 // pred_region
        %s149 = smul.u32 2, %s19
        %p150 = scmp.lt.s32.totalorder %s18, 1
        %s151 = scalar_select %p150, %s18, 1
        %p152 = scmp.lt.s32.totalorder %s149, 1
        %s153 = scalar_select %p152, %s149, 1
        %s154 = smul.addr %s151, 4
        %s155 = sadd.s32 %s153, %s154
        %s156 = smul.addr %s155, 8
        %s157 = scalar_lea.vmem %s0, %s156
        %s158 = smul.u32 2, %s19
      $region28: #{fno_forward.15} parent=23 // pred_fallthru
        _
    $region24: #{fno_forward.15} parent=5 // pred_fallthru
      _
    %p159 = scmp.le.s32.totalorder 1, %s11
    %p160 = scmp.lt.s32.totalorder %s11, 3
    %p161 = pnand %p159, %p160
    %p162 = pneg %p161
    // Predicated region
    $region29: #{fno_forward.15} parent=5 // pred_check
      _
    $region30: #{fno_forward.15} parent=5 // pred_check_branch
      %164 = sbr.rel (%p161) target = $region32
    $region31: #{fno_forward.15} parent=5 // pred_region
      %s165 = ssub.s32 %s11, 1
      %s166 = smul.u32 2, %s21
      %p167 = scmp.lt.s32.totalorder %s20, 1
      %s168 = scalar_select %p167, %s20, 1
      %p169 = scmp.lt.s32.totalorder %s166, 1
      %s170 = scalar_select %p169, %s166, 1
      %s171 = smul.addr %s168, 4
      %s172 = sadd.s32 %s170, %s171
      %s173 = smul.addr %s172, 8
      %s174 = scalar_lea.vmem %s0, %s173
      %p175 = pneg %p51
      %p176 = pneg %p48
      %p177 = pneg %p72
      %p178 = pneg %p69
      %p179 = pneg %p93
      %p180 = pneg %p90
      %p181 = pneg %p121
      %p182 = pneg %p118
      %s183 = smul.u32 2, %s21
      %p184 = scmp.lt.s32.totalorder %s20, 1
      %s185 = scalar_select %p184, %s20, 1
      %p186 = scmp.lt.s32.totalorder %s183, 1
      %s187 = scalar_select %p186, %s183, 1
      %s188 = smul.addr %s185, 2
      %s189 = sadd.s32 %s187, %s188
      %s190 = scalar_lea.vmem %s3, %s189
      %s191 = smul.u32 2, %s21
      %p192 = scmp.lt.s32.totalorder %s20, 1
      %s193 = scalar_select %p192, %s20, 1
      %p194 = scmp.lt.s32.totalorder %s191, 1
      %s195 = scalar_select %p194, %s191, 1
      %s196 = smul.addr %s193, 4
      %s197 = sadd.s32 %s195, %s196
      %s198 = smul.addr %s197, 8
      %s199 = scalar_lea.vmem %s0, %s198
      %s200 = smul.u32 2, %s21
      %s201 = smul.u32 2, %s21
      %p202 = scmp.lt.s32.totalorder %s20, 1
      %s203 = scalar_select %p202, %s20, 1
      %p204 = scmp.lt.s32.totalorder %s201, 1
      %s205 = scalar_select %p204, %s201, 1
      %s206 = smul.addr %s203, 2
      %s207 = sadd.s32 %s205, %s206
      %s208 = scalar_lea.vmem %s3, %s207
      %s209 = smul.u32 2, %s21
      %v210 = vld [vmem:[%s199] sm:$0xff]
      %v211 = vld [vmem:[%s199 + $0x8] sm:$0xff]
      %v212 = vld [vmem:[%s199 + $0x10] sm:$0xff]
      %v213 = vld [vmem:[%s199 + $0x18] sm:$0xff]
      %v214 = vld [vmem:[%s1] sm:$0x1]
      %v215 = vld [vmem:[#allocation2] sm:$0x1]
      %217 = vset.pattern.permute.xlu0 0
      %218 = vperm.xlu0 %217, %v215
      %v219 = vpop.permute.xlu0 %218
      %v221 = vlaneseq
      %v222 = vshrl.u32 %v221, 7
      %v223 = vsub.s32 0, %v222
      %v224 = vrot.slane %v219, %v223
      %vm225 = vcmask 130048
      %v227 = vsel %vm225, %v214, 0
      %229 = vmatprep.subr.mxu0 %v211
      %230 = vmatpush1.msra.mxu0 %v210
      %231 = vmatprep.subr.mxu0 %v213
      %232 = vmatpush1.msra.mxu0 %v212
      %233 = vmatprep.subr.mxu0 0.0
      %234 = vmatpush1.msra.mxu0 0.0
      %235 = vmatprep.subr.mxu0 0.0
      %236 = vmatpush1.msra.mxu0 0.0
      %237 = vmatprep.subr.mxu0 0.0
      %238 = vmatpush1.msra.mxu0 0.0
      %239 = vmatprep.subr.mxu0 0.0
      %240 = vmatpush1.msra.mxu0 0.0
      %241 = vmatprep.subr.mxu0 0.0
      %242 = vmatpush1.msra.mxu0 0.0
      %243 = vmatprep.subr.mxu0 0.0
      %244 = vmatpush1.msra.mxu0 0.0
      %245 = vmatprep.subr.mxu0 0.0
      %246 = vmatpush1.msra.mxu0 0.0
      %247 = vmatprep.subr.mxu0 0.0
      %248 = vmatpush1.msra.mxu0 0.0
      %249 = vmatprep.subr.mxu0 0.0
      %250 = vmatpush1.msra.mxu0 0.0
      %251 = vmatprep.subr.mxu0 0.0
      %252 = vmatpush1.msra.mxu0 0.0
      %253 = vmatprep.subr.mxu0 0.0
      %254 = vmatpush1.msra.mxu0 0.0
      %255 = vmatprep.subr.mxu0 0.0
      %256 = vmatpush1.msra.mxu0 0.0
      %257 = vmatprep.subr.mxu0 0.0
      %258 = vmatpush1.msra.mxu0 0.0
      %259 = vmatprep.subr.mxu0 0.0
      %260 = vmatpush1.msra.mxu0 0.0
      %261 = vmatprep.subr.mxu0 0.0
      %262 = vmatpush1.msra.mxu0 0.0
      %263 = vmatprep.subr.mxu0 0.0
      %264 = vmatpush1.msra.mxu0 0.0
      %265 = vmatprep.subr.mxu0 0.0
      %266 = vmatpush1.msra.mxu0 0.0
      %267 = vmatprep.subr.mxu0 0.0
      %268 = vmatpush1.msra.mxu0 0.0
      %269 = vmatprep.subr.mxu0 0.0
      %270 = vmatpush1.msra.mxu0 0.0
      %271 = vmatprep.subr.mxu0 0.0
      %272 = vmatpush1.msra.mxu0 0.0
      %273 = vmatprep.subr.mxu0 0.0
      %274 = vmatpush1.msra.mxu0 0.0
      %275 = vmatprep.subr.mxu0 0.0
      %276 = vmatpush1.msra.mxu0 0.0
      %277 = vmatprep.subr.mxu0 0.0
      %278 = vmatpush1.msra.mxu0 0.0
      %279 = vmatprep.subr.mxu0 0.0
      %280 = vmatpush1.msra.mxu0 0.0
      %281 = vmatprep.subr.mxu0 0.0
      %282 = vmatpush1.msra.mxu0 0.0
      %283 = vmatprep.subr.mxu0 0.0
      %284 = vmatpush1.msra.mxu0 0.0
      %285 = vmatprep.subr.mxu0 0.0
      %286 = vmatpush1.msra.mxu0 0.0
      %287 = vmatprep.subr.mxu0 0.0
      %288 = vmatpush1.msra.mxu0 0.0
      %289 = vmatprep.subr.mxu0 0.0
      %290 = vmatpush1.msra.mxu0 0.0
      %291 = vmatprep.subr.mxu0 0.0
      %292 = vmatpush1.msra.mxu0 0.0
      %293 = vmatprep.mubr.f32.mxu0 0.0
      %294 = vmatmul.mubr.f32.gmra.mrb[0].mxu0 %v227
      %v295 = vpop.f32.mrb[0].mxu0
      %v296 = vadd.f32 %v224, %v295
      %v297 = vpop.f32.mrb[0].mxu0
      %v298 = vadd.f32 %v224, %v297
      %299 = vdwg.mxu0
      %v302 = vcombine.low %v296, %v298
      %v304 = vunpack.c.l.s4 1966171168
      %v305 = vunpack.c.0.s8 %v304
      %v306 = vlaneseq
      %v307 = vshrl.u32 %v306, 7
      %v308 = vsub.s32 %v305, %v307
      %v309 = vrot.slane %v302, %v308
      %v311 = vunpack.c.l.s4 1966171168
      %v312 = vunpack.c.0.s8 %v311
      %v313 = vlaneseq
      %v314 = vshrl.u32 %v313, 7
      %v315 = vsub.s32 %v312, %v314
      %v316 = vrot.slane %v309, %v315
      %v318 = vlaneseq
      %vm319 = vcmp.ge.s32.totalorder %v318, 0
      %vm320 = vcmp.lt.s32.totalorder %v318, 256
      %vm321 = vmand %vm319, %vm320
      %322 = vst.msk [vmem:[%s208] sm:$0x3] %vm321, %v316
      %s323 = smul.u32 2, %s21
      %p324 = scmp.lt.s32.totalorder %s20, 1
      %s325 = scalar_select %p324, %s20, 1
      %p326 = scmp.lt.s32.totalorder %s323, 1
      %s327 = scalar_select %p326, %s323, 1
      %s328 = smul.addr %s325, 2
      %s329 = sadd.s32 %s327, %s328
      %s330 = scalar_lea.vmem %s3, %s329
      // Predicated region
      $region33: #{fno_forward.15} parent=31 // pred_check
        %p331 = pneg %p118
      $region34: #{fno_forward.15} parent=31 // pred_check_branch
        %333 = sbr.rel (%p331) target = $region36
      $region35: #{fno_forward.15} parent=31 // pred_region
        %s334 = smul.u32 2, %s21
      $region36: #{fno_forward.15} parent=31 // pred_fallthru
        _
    $region32: #{fno_forward.15} parent=5 // pred_fallthru
      _
    %p335 = scmp.le.s32.totalorder 2, %s11
    // Predicated region
    $region37: #{fno_forward.15} parent=5 // pred_check
      %p336 = pneg %p335
    $region38: #{fno_forward.15} parent=5 // pred_check_branch
      %338 = sbr.rel (%p336) target = $region40
    $region39: #{fno_forward.15} parent=5 // pred_region
      %s339 = ssub.s32 %s11, 2
      // Predicated region
      $region41: #{fno_forward.15} parent=39 // pred_check
        %p340 = pneg %p124
      $region42: #{fno_forward.15} parent=39 // pred_check_branch
        %342 = sbr.rel (%p340) target = $region44
      $region43: #{fno_forward.15} parent=39 // pred_region
        %s343 = smul.u32 2, %s23
        %p344 = scmp.lt.s32.totalorder %s22, 1
        %s345 = scalar_select %p344, %s22, 1
        %p346 = scmp.lt.s32.totalorder %s343, 1
        %s347 = scalar_select %p346, %s343, 1
        %s348 = smul.addr %s345, 2
        %s349 = sadd.s32 %s347, %s348
        %s350 = scalar_lea.vmem %s3, %s349
      $region44: #{fno_forward.15} parent=39 // pred_fallthru
        _
    $region40: #{fno_forward.15} parent=5 // pred_fallthru
      _
  $region6: #{fno_forward.15} parent=0 // loop_footer
    %s15 = sadd.s32 1, %s11
  $region7: #{fno_forward.15} parent=0 // loop_footer_branch
    %10 = sbr.rel target = $region3
  $region8: #{fno_forward.15} parent=0 // loop_exit
    _

</llo_original>
